<compile_context>
chip_gen: v7x
topology: tpu7x:2x2x1
jax: 0.10.0
libtpu: 0.0.40
codegen_flags: <defaults>
</compile_context>

<pallas_src>
import functools

import jax
import jax.numpy as jnp
from jax.experimental import pallas as pl
from jax.experimental.pallas import tpu as pltpu


# ---------------------------------------------------------------------------
# small helpers
# ---------------------------------------------------------------------------
def _elu(x):
    return jnp.where(x > 0, x, jnp.exp(jnp.minimum(x, 0.0)) - 1.0)


def _mlp2(x, Wa, ba, Wb, bb):
    """Linear -> ReLU -> Linear (reference path only)."""
    h = jnp.dot(x, Wa, preferred_element_type=jnp.float32) + ba
    h = jnp.maximum(h, 0.0)
    return jnp.dot(h, Wb, preferred_element_type=jnp.float32) + bb


def _round_up(x, m):
    return ((x + m - 1) // m) * m


def _pad_rows(x, rows):
    if x.shape[0] == rows:
        return x
    return jnp.pad(x, ((0, rows - x.shape[0]),) + ((0, 0),) * (x.ndim - 1))


# ---------------------------------------------------------------------------
# Pallas kernel
# ---------------------------------------------------------------------------
def smix_kernel(s_ref, obs_ref, qs_ref, alive_ref,
                ws1_ref, bs1_ref, ws2_ref, bs2_ref,
                wo1_ref, bo1_ref, wo2_ref, bo2_ref,
                out_ref, *, n_agents, embed_dim, hyper_dim):
    A, E, H = n_agents, embed_dim, hyper_dim
    M2 = 4 * H + 4 * E                  # ReLU'd slice of the fused first layer
    cdt = ws1_ref.dtype                 # MXU operand dtype (f32 or bf16)

    # ---- fused state hyper-network: 2 MXU matmuls replace 8 narrow heads ----
    s = s_ref[...].astype(cdt)                                          # (tb, S)
    h_all = jnp.dot(s, ws1_ref[...],
                    preferred_element_type=jnp.float32) + bs1_ref[...]  # (tb, 4H+5E)
    b1 = h_all[:, M2:M2 + E]                    # hyper_b_1 output (no ReLU / 2nd layer)
    h_relu = jnp.maximum(h_all[:, :M2], 0.0).astype(cdt)                # (tb, 4H+4E)
    heads = jnp.dot(h_relu, ws2_ref[...],
                    preferred_element_type=jnp.float32) + bs2_ref[...]  # (tb, 5E+3)

    w1 = jnp.abs(heads[:, 0:E])                 # hyper_w_1
    w_q = jnp.abs(heads[:, E:2 * E])            # hyper_w_q
    wk_o = jnp.abs(heads[:, 2 * E:3 * E])       # hyper_w_k (obs half)
    wk_s = jnp.abs(heads[:, 3 * E:4 * E])       # hyper_w_k (state half)
    s_hid = heads[:, 4 * E:5 * E]               # state_hidden
    b_q = heads[:, 5 * E:5 * E + 1]             # hyper_b_q
    b_k = heads[:, 5 * E + 1:5 * E + 2]         # hyper_b_k
    v = heads[:, 5 * E + 2:5 * E + 3]           # V(s)

    # ---- observation MLP for all agents at once (block-diagonal weights) ----
    obs = obs_ref[...].astype(cdt)                                      # (tb, A*O)
    oh = jnp.maximum(
        jnp.dot(obs, wo1_ref[...],
                preferred_element_type=jnp.float32) + bo1_ref[...], 0.0)  # (tb, A*H)
    o_hid = jnp.dot(oh.astype(cdt), wo2_ref[...],
                    preferred_element_type=jnp.float32) + bo2_ref[...]    # (tb, A*E)

    qs = qs_ref[...].astype(jnp.float32)                                # (tb, A)
    alive = alive_ref[...].astype(jnp.float32)                          # (tb, A)

    # state contribution to every agent's key score (computed once)
    k_state = jnp.sum(s_hid * wk_s, axis=-1, keepdims=True) + b_k       # (tb, 1)

    # ---- per-agent work: static unroll, element-wise only (VPU/XLU) ----
    num = jnp.zeros_like(v)                                             # (tb, 1)
    for a in range(A):
        qs_a = qs[:, a:a + 1]
        alive_a = alive[:, a:a + 1]
        hidden_a = _elu(qs_a * w1 + b1)                                 # (tb, E)
        q_a = jnp.sum(hidden_a * w_q, axis=-1, keepdims=True) + b_q     # (tb, 1)
        o_hid_a = o_hid[:, a * E:(a + 1) * E]                           # (tb, E)
        # NOTE: exp has no max-subtraction, matching the reference module.
        k_a = jnp.exp(jnp.sum(o_hid_a * wk_o, axis=-1, keepdims=True)
                      + k_state) * alive_a                              # (tb, 1)
        num = num + q_a * k_a

    denom = jnp.clip(jnp.sum(alive, axis=-1, keepdims=True), 1.0, 8.0)
    out_ref[...] = (num / denom + v).astype(out_ref.dtype)


# ---------------------------------------------------------------------------
# host-side parameter fusion (done once, outside the kernel)
# ---------------------------------------------------------------------------
def pack_smix_params(params, n_agents, mxu_dtype=jnp.float32):
    (w1a, b1a, w1b, b1b, wqa, bqa, wqb, bqb, wka, bka, wkb, bkb,
     woa, boa, wob, bob, wsa, bsa, wsb, bsb, wb1, bb1,
     wbqa, bbqa, wbqb, bbqb, wbka, bbka, wbkb, bbkb,
     wva, bva, wvb, bvb) = params
    A = n_agents
    H = w1a.shape[1]
    E = w1b.shape[1]
    O = woa.shape[0]

    # fused first layer (all fan_in = S), column layout:
    #   [w1a | wqa | wka | wsa | wbqa | wbka | wva | wb1]  -> (S, 4H + 5E)
    ws1 = jnp.concatenate([w1a, wqa, wka, wsa, wbqa, wbka, wva, wb1], axis=1)
    bs1 = jnp.concatenate([b1a, bqa, bka, bsa, bbqa, bbka, bva, bb1], axis=1)

    # block-diagonal second layer over the ReLU'd part: (4H+4E, 5E+3)
    M2, N2 = 4 * H + 4 * E, 5 * E + 3
    ws2 = jnp.zeros((M2, N2), jnp.float32)
    ws2 = ws2.at[0:H, 0:E].set(w1b)
    ws2 = ws2.at[H:2 * H, E:2 * E].set(wqb)
    ws2 = ws2.at[2 * H:3 * H, 2 * E:4 * E].set(wkb)
    ws2 = ws2.at[3 * H:4 * H, 4 * E:5 * E].set(wsb)
    ws2 = ws2.at[4 * H:4 * H + E, 5 * E:5 * E + 1].set(wbqb)
    ws2 = ws2.at[4 * H + E:4 * H + 2 * E, 5 * E + 1:5 * E + 2].set(wbkb)
    ws2 = ws2.at[4 * H + 2 * E:4 * H + 4 * E, 5 * E + 2:5 * E + 3].set(wvb)
    bs2 = jnp.concatenate([b1b, bqb, bkb, bsb, bbqb, bbkb, bvb], axis=1)

    # observation MLP, block-diagonal over agents (obs stays 2-D lane-dense)
    wo1 = jnp.zeros((A * O, A * H), jnp.float32)
    wo2 = jnp.zeros((A * H, A * E), jnp.float32)
    for a in range(A):
        wo1 = wo1.at[a * O:(a + 1) * O, a * H:(a + 1) * H].set(woa)
        wo2 = wo2.at[a * H:(a + 1) * H, a * E:(a + 1) * E].set(wob)
    bo1 = jnp.tile(boa, (1, A))
    bo2 = jnp.tile(bob, (1, A))

    cast = lambda w: w.astype(mxu_dtype)
    return (cast(ws1), bs1.astype(jnp.float32),
            cast(ws2), bs2.astype(jnp.float32),
            cast(wo1), bo1.astype(jnp.float32),
            cast(wo2), bo2.astype(jnp.float32))


# ---------------------------------------------------------------------------
# wrapper
# ---------------------------------------------------------------------------
@functools.partial(jax.jit, static_argnames=("tb",))
def smix_forward(agent_qs, states, observations, is_alive, packed, tb=512):
    ws1, bs1, ws2, bs2, wo1, bo1, wo2, bo2 = packed
    bs, T, A = agent_qs.shape
    B = bs * T
    S = states.shape[-1]
    O = observations.shape[-1]
    E = (bs2.shape[1] - 3) // 5
    H = (ws1.shape[1] - 5 * E) // 4

    # Big row tiles for MXU/pipeline efficiency, but keep >=2 grid steps when
    # possible so both v7x TensorCores get work.  Rows are padded to a multiple.
    tb_eff = max(8, min(tb, _round_up(max(B // 2, 1), 8)))
    B_pad = _round_up(B, tb_eff)
    grid = B_pad // tb_eff

    s2 = _pad_rows(states.reshape(B, S), B_pad)
    obs2 = _pad_rows(observations.reshape(B, A * O), B_pad)
    qs2 = _pad_rows(agent_qs.reshape(B, A), B_pad)
    alive2 = _pad_rows(is_alive.reshape(B, A), B_pad)

    kernel = functools.partial(smix_kernel, n_agents=A, embed_dim=E, hyper_dim=H)
    full = lambda p: pl.BlockSpec(p.shape, lambda i: (0, 0))
    in_specs = [
        pl.BlockSpec((tb_eff, S), lambda i: (i, 0)),
        pl.BlockSpec((tb_eff, A * O), lambda i: (i, 0)),
        pl.BlockSpec((tb_eff, A), lambda i: (i, 0)),
        pl.BlockSpec((tb_eff, A), lambda i: (i, 0)),
    ] + [full(p) for p in (ws1, bs1, ws2, bs2, wo1, bo1, wo2, bo2)]

    # TODO(synk): output stays (tb, 1) (sublane-major store); a lane-dense
    # (1, tb) store needs a sublane->lane relayout that is risky to lower and
    # the output is ~1% of the kernel's HBM traffic here.
    out = pl.pallas_call(
        kernel,
        out_shape=jax.ShapeDtypeStruct((B_pad, 1), jnp.float32),
        grid_spec=pltpu.PrefetchScalarGridSpec(
            num_scalar_prefetch=0,
            grid=(grid,),
            in_specs=in_specs,
            out_specs=pl.BlockSpec((tb_eff, 1), lambda i: (i, 0)),
        ),
        compiler_params=pltpu.CompilerParams(
            dimension_semantics=("parallel",),
            vmem_limit_bytes=32 * 1024 * 1024),
    )(s2, obs2, qs2, alive2, ws1, bs1, ws2, bs2, wo1, bo1, wo2, bo2)

    return out[:B].reshape(bs, T, 1)


# ---------------------------------------------------------------------------
# deterministic parameter init (PyTorch nn.Linear-style uniform)
# ---------------------------------------------------------------------------
def _linear(key, fan_in, fan_out):
    kw, kb = jax.random.split(key)
    bound = 1.0 / (fan_in ** 0.5)
    W = jax.random.uniform(kw, (fan_in, fan_out), jnp.float32, -bound, bound)
    b = jax.random.uniform(kb, (1, fan_out), jnp.float32, -bound, bound)
    return W, b


def init_params(key, S, O, H, E):
    ks = jax.random.split(key, 17)
    w1a, b1a = _linear(ks[0], S, H);  w1b, b1b = _linear(ks[1], H, E)      # hyper_w_1
    wqa, bqa = _linear(ks[2], S, H);  wqb, bqb = _linear(ks[3], H, E)      # hyper_w_q
    wka, bka = _linear(ks[4], S, H);  wkb, bkb = _linear(ks[5], H, 2 * E)  # hyper_w_k
    woa, boa = _linear(ks[6], O, H);  wob, bob = _linear(ks[7], H, E)      # observation_hidden
    wsa, bsa = _linear(ks[8], S, H);  wsb, bsb = _linear(ks[9], H, E)      # state_hidden
    wb1, bb1 = _linear(ks[10], S, E)                                       # hyper_b_1
    wbqa, bbqa = _linear(ks[11], S, E); wbqb, bbqb = _linear(ks[12], E, 1) # hyper_b_q
    wbka, bbka = _linear(ks[13], S, E); wbkb, bbkb = _linear(ks[14], E, 1) # hyper_b_k
    wva, bva = _linear(ks[15], S, 2 * E); wvb, bvb = _linear(ks[16], 2 * E, 1)  # V
    return [w1a, b1a, w1b, b1b, wqa, bqa, wqb, bqb, wka, bka, wkb, bkb,
            woa, boa, wob, bob, wsa, bsa, wsb, bsb, wb1, bb1,
            wbqa, bbqa, wbqb, bbqb, wbka, bbka, wbkb, bbkb,
            wva, bva, wvb, bvb]


# ---------------------------------------------------------------------------
# plain-JAX reference (mirrors the PyTorch forward exactly, raw params)
# ---------------------------------------------------------------------------
def reference_forward(agent_qs, states, observations, is_alive, params):
    (w1a, b1a, w1b, b1b, wqa, bqa, wqb, bqb, wka, bka, wkb, bkb,
     woa, boa, wob, bob, wsa, bsa, wsb, bsb, wb1, bb1,
     wbqa, bbqa, wbqb, bbqb, wbka, bbka, wbkb, bbkb,
     wva, bva, wvb, bvb) = params
    bs, T, A = agent_qs.shape
    B = bs * T
    s = states.reshape(B, -1)
    obs = observations.reshape(B, A, -1)
    qs = agent_qs.reshape(B, A, 1)
    alive = is_alive.reshape(B, A, 1)

    w1 = jnp.abs(_mlp2(s, w1a, b1a, w1b, b1b))[:, None, :]
    b1 = (jnp.dot(s, wb1) + bb1)[:, None, :]
    hidden = _elu(qs * w1 + b1)
    w_q = jnp.abs(_mlp2(s, wqa, bqa, wqb, bqb))[:, None, :]
    b_q = _mlp2(s, wbqa, bbqa, wbqb, bbqb)[:, :, None]
    q = jnp.sum(hidden * w_q, -1, keepdims=True) + b_q
    s_hid = _mlp2(s, wsa, bsa, wsb, bsb)
    o_hid = _mlp2(obs, woa, boa, wob, bob)
    wh = jnp.concatenate(
        [o_hid, jnp.broadcast_to(s_hid[:, None, :], o_hid.shape)], axis=-1)
    w_k = jnp.abs(_mlp2(s, wka, bka, wkb, bkb))[:, :, None]
    b_k = _mlp2(s, wbka, bbka, wbkb, bbkb)[:, :, None]
    k = jnp.exp(jnp.matmul(wh, w_k) + b_k) * alive
    v = _mlp2(s, wva, bva, wvb, bvb)[:, :, None]
    q_tot = (jnp.matmul(jnp.swapaxes(q, 1, 2), k)
             / jnp.clip(alive.sum(1, keepdims=True), 1, 8) + v)
    return q_tot.reshape(bs, -1, 1)


# ---------------------------------------------------------------------------
if __name__ == "__main__":
    bs, T = 4, 64          # B = 256 rows -> 2 grid steps of tb_eff = 128
    A = 4                  # n_agents
    S = 32                 # state_dim
    O = 16                 # observation_dim
    H = 32                 # hypernet_embed
    E = 32                 # mixing_embed_dim

    key = jax.random.PRNGKey(0)
    k0, k1, k2, k3, k4 = jax.random.split(key, 5)
    agent_qs = jax.random.normal(k0, (bs, T, A), jnp.float32)
    states = jax.random.normal(k1, (bs, T, S), jnp.float32)
    observations = jax.random.normal(k2, (bs, T, A, O), jnp.float32)
    is_alive = (jax.random.uniform(k3, (bs, T, A)) > 0.3).astype(jnp.float32)
    params = init_params(k4, S, O, H, E)

    ref = reference_forward(agent_qs, states, observations, is_alive, params)

    # f32 MXU-operand path: exact semantics, strict check vs reference.
    packed_f32 = pack_smix_params(params, n_agents=A, mxu_dtype=jnp.float32)
    out = jax.block_until_ready(
        smix_forward(agent_qs, states, observations, is_alive, packed_f32, tb=512))
    assert out.shape == (bs, T, 1), out.shape
    max_err = float(jnp.max(jnp.abs(out - ref)))
    if not jnp.allclose(out, ref, rtol=2e-2, atol=2e-2):
        raise SystemExit(f"mismatch vs reference (f32 path), max abs err = {max_err}")

    # bf16 MXU-operand path (v6e/v7x peak); f32 accumulation + f32 elementwise.
    # exp() amplifies bf16 rounding, so only sanity-check this path.
    packed_bf16 = pack_smix_params(params, n_agents=A, mxu_dtype=jnp.bfloat16)
    out_bf16 = jax.block_until_ready(
        smix_forward(agent_qs, states, observations, is_alive, packed_bf16, tb=512))
    if out_bf16.shape != (bs, T, 1) or not bool(jnp.all(jnp.isfinite(out_bf16))):
        raise SystemExit("bf16 path failed sanity check")

    print("KERNEL_OK")
</pallas_src>

<mosaic_0001>
module attributes {stable_mosaic.version = 11 : i64} {
  func.func @smix_kernel(%arg0: i32, %arg1: memref<128x32xf32, #tpu.memory_space<vmem>>, %arg2: memref<128x64xf32, #tpu.memory_space<vmem>>, %arg3: memref<128x4xf32, #tpu.memory_space<vmem>>, %arg4: memref<128x4xf32, #tpu.memory_space<vmem>>, %arg5: memref<32x288xf32, #tpu.memory_space<vmem>>, %arg6: memref<1x288xf32, #tpu.memory_space<vmem>>, %arg7: memref<256x163xf32, #tpu.memory_space<vmem>>, %arg8: memref<1x163xf32, #tpu.memory_space<vmem>>, %arg9: memref<64x128xf32, #tpu.memory_space<vmem>>, %arg10: memref<1x128xf32, #tpu.memory_space<vmem>>, %arg11: memref<128x128xf32, #tpu.memory_space<vmem>>, %arg12: memref<1x128xf32, #tpu.memory_space<vmem>>, %arg13: memref<128x1xf32, #tpu.memory_space<vmem>>) attributes {dimension_semantics = [#tpu.dimension_semantics<parallel>], iteration_bounds = array<i64: 2>, scalar_prefetch = 0 : i64, scratch_operands = 0 : i64, tpu.core_type = #tpu.core_type<tc>, window_params = [{transform_indices = @transform_0, window_bounds = array<i64: 128, 32>}, {transform_indices = @transform_1, window_bounds = array<i64: 128, 64>}, {transform_indices = @transform_2, window_bounds = array<i64: 128, 4>}, {transform_indices = @transform_3, window_bounds = array<i64: 128, 4>}, {pipeline_mode = #tpu.pipeline_mode<synchronous>, transform_indices = @transform_4, window_bounds = array<i64: 32, 288>}, {pipeline_mode = #tpu.pipeline_mode<synchronous>, transform_indices = @transform_5, window_bounds = array<i64: 1, 288>}, {pipeline_mode = #tpu.pipeline_mode<synchronous>, transform_indices = @transform_6, window_bounds = array<i64: 256, 163>}, {pipeline_mode = #tpu.pipeline_mode<synchronous>, transform_indices = @transform_7, window_bounds = array<i64: 1, 163>}, {pipeline_mode = #tpu.pipeline_mode<synchronous>, transform_indices = @transform_8, window_bounds = array<i64: 64, 128>}, {pipeline_mode = #tpu.pipeline_mode<synchronous>, transform_indices = @transform_9, window_bounds = array<i64: 1, 128>}, {pipeline_mode = #tpu.pipeline_mode<synchronous>, transform_indices = @transform_10, window_bounds = array<i64: 128, 128>}, {pipeline_mode = #tpu.pipeline_mode<synchronous>, transform_indices = @transform_11, window_bounds = array<i64: 1, 128>}, {transform_indices = @transform_12, window_bounds = array<i64: 128, 1>}]} {
    %c0 = arith.constant 0 : index
    %c0_0 = arith.constant 0 : index
    %0 = vector.load %arg1[%c0, %c0_0] : memref<128x32xf32, #tpu.memory_space<vmem>>, vector<128x32xf32>
    %c0_1 = arith.constant 0 : index
    %c0_2 = arith.constant 0 : index
    %1 = vector.load %arg5[%c0_1, %c0_2] : memref<32x288xf32, #tpu.memory_space<vmem>>, vector<32x288xf32>
    %cst = arith.constant dense<0.000000e+00> : vector<128x288xf32>
    %2 = tpu.matmul %0, %1, %cst {dimension_numbers = #tpu.dot_dimension_numbers<[1], [0], [0], [1], [0, 0, 1, 1], [], []>} : vector<128x32xf32>, vector<32x288xf32>, vector<128x288xf32> -> vector<128x288xf32>
    %c0_3 = arith.constant 0 : index
    %c0_4 = arith.constant 0 : index
    %3 = vector.load %arg6[%c0_3, %c0_4] : memref<1x288xf32, #tpu.memory_space<vmem>>, vector<1x288xf32>
    %4 = vector.broadcast %3 : vector<1x288xf32> to vector<128x288xf32>
    %5 = arith.addf %2, %4 : vector<128x288xf32>
    %6 = vector.extract_strided_slice %5 {offsets = [0, 256], sizes = [128, 32], strides = [1, 1]} : vector<128x288xf32> to vector<128x32xf32>
    %7 = vector.extract_strided_slice %5 {offsets = [0, 0], sizes = [128, 256], strides = [1, 1]} : vector<128x288xf32> to vector<128x256xf32>
    %cst_5 = arith.constant 0.000000e+00 : f32
    %8 = vector.broadcast %cst_5 : f32 to vector<128x256xf32>
    %9 = arith.maximumf %7, %8 : vector<128x256xf32>
    %c0_6 = arith.constant 0 : index
    %c0_7 = arith.constant 0 : index
    %10 = vector.load %arg7[%c0_6, %c0_7] : memref<256x163xf32, #tpu.memory_space<vmem>>, vector<256x163xf32>
    %cst_8 = arith.constant dense<0.000000e+00> : vector<128x163xf32>
    %11 = tpu.matmul %9, %10, %cst_8 {dimension_numbers = #tpu.dot_dimension_numbers<[1], [0], [0], [1], [0, 0, 1, 1], [], []>} : vector<128x256xf32>, vector<256x163xf32>, vector<128x163xf32> -> vector<128x163xf32>
    %c0_9 = arith.constant 0 : index
    %c0_10 = arith.constant 0 : index
    %12 = vector.load %arg8[%c0_9, %c0_10] : memref<1x163xf32, #tpu.memory_space<vmem>>, vector<1x163xf32>
    %13 = vector.broadcast %12 : vector<1x163xf32> to vector<128x163xf32>
    %14 = arith.addf %11, %13 : vector<128x163xf32>
    %15 = vector.extract_strided_slice %14 {offsets = [0, 0], sizes = [128, 32], strides = [1, 1]} : vector<128x163xf32> to vector<128x32xf32>
    %16 = math.absf %15 : vector<128x32xf32>
    %17 = vector.extract_strided_slice %14 {offsets = [0, 32], sizes = [128, 32], strides = [1, 1]} : vector<128x163xf32> to vector<128x32xf32>
    %18 = math.absf %17 : vector<128x32xf32>
    %19 = vector.extract_strided_slice %14 {offsets = [0, 64], sizes = [128, 32], strides = [1, 1]} : vector<128x163xf32> to vector<128x32xf32>
    %20 = math.absf %19 : vector<128x32xf32>
    %21 = vector.extract_strided_slice %14 {offsets = [0, 96], sizes = [128, 32], strides = [1, 1]} : vector<128x163xf32> to vector<128x32xf32>
    %22 = math.absf %21 : vector<128x32xf32>
    %23 = vector.extract_strided_slice %14 {offsets = [0, 128], sizes = [128, 32], strides = [1, 1]} : vector<128x163xf32> to vector<128x32xf32>
    %24 = vector.extract_strided_slice %14 {offsets = [0, 160], sizes = [128, 1], strides = [1, 1]} : vector<128x163xf32> to vector<128x1xf32>
    %25 = vector.extract_strided_slice %14 {offsets = [0, 161], sizes = [128, 1], strides = [1, 1]} : vector<128x163xf32> to vector<128x1xf32>
    %26 = vector.extract_strided_slice %14 {offsets = [0, 162], sizes = [128, 1], strides = [1, 1]} : vector<128x163xf32> to vector<128x1xf32>
    %c0_11 = arith.constant 0 : index
    %c0_12 = arith.constant 0 : index
    %27 = vector.load %arg2[%c0_11, %c0_12] : memref<128x64xf32, #tpu.memory_space<vmem>>, vector<128x64xf32>
    %c0_13 = arith.constant 0 : index
    %c0_14 = arith.constant 0 : index
    %28 = vector.load %arg9[%c0_13, %c0_14] : memref<64x128xf32, #tpu.memory_space<vmem>>, vector<64x128xf32>
    %cst_15 = arith.constant dense<0.000000e+00> : vector<128x128xf32>
    %29 = tpu.matmul %27, %28, %cst_15 {dimension_numbers = #tpu.dot_dimension_numbers<[1], [0], [0], [1], [0, 0, 1, 1], [], []>} : vector<128x64xf32>, vector<64x128xf32>, vector<128x128xf32> -> vector<128x128xf32>
    %c0_16 = arith.constant 0 : index
    %c0_17 = arith.constant 0 : index
    %30 = vector.load %arg10[%c0_16, %c0_17] : memref<1x128xf32, #tpu.memory_space<vmem>>, vector<1x128xf32>
    %31 = vector.broadcast %30 : vector<1x128xf32> to vector<128x128xf32>
    %32 = arith.addf %29, %31 : vector<128x128xf32>
    %cst_18 = arith.constant 0.000000e+00 : f32
    %33 = vector.broadcast %cst_18 : f32 to vector<128x128xf32>
    %34 = arith.maximumf %32, %33 : vector<128x128xf32>
    %c0_19 = arith.constant 0 : index
    %c0_20 = arith.constant 0 : index
    %35 = vector.load %arg11[%c0_19, %c0_20] : memref<128x128xf32, #tpu.memory_space<vmem>>, vector<128x128xf32>
    %cst_21 = arith.constant dense<0.000000e+00> : vector<128x128xf32>
    %36 = tpu.matmul %34, %35, %cst_21 {dimension_numbers = #tpu.dot_dimension_numbers<[1], [0], [0], [1], [0, 0, 1, 1], [], []>} : vector<128x128xf32>, vector<128x128xf32>, vector<128x128xf32> -> vector<128x128xf32>
    %c0_22 = arith.constant 0 : index
    %c0_23 = arith.constant 0 : index
    %37 = vector.load %arg12[%c0_22, %c0_23] : memref<1x128xf32, #tpu.memory_space<vmem>>, vector<1x128xf32>
    %38 = vector.broadcast %37 : vector<1x128xf32> to vector<128x128xf32>
    %39 = arith.addf %36, %38 : vector<128x128xf32>
    %c0_24 = arith.constant 0 : index
    %c0_25 = arith.constant 0 : index
    %40 = vector.load %arg3[%c0_24, %c0_25] : memref<128x4xf32, #tpu.memory_space<vmem>>, vector<128x4xf32>
    %c0_26 = arith.constant 0 : index
    %c0_27 = arith.constant 0 : index
    %41 = vector.load %arg4[%c0_26, %c0_27] : memref<128x4xf32, #tpu.memory_space<vmem>>, vector<128x4xf32>
    %42 = arith.mulf %23, %22 : vector<128x32xf32>
    %cst_28 = arith.constant dense<0.000000e+00> : vector<128xf32>
    %43 = vector.multi_reduction <add>, %42, %cst_28 [1] : vector<128x32xf32> to vector<128xf32>
    %44 = vector.shape_cast %43 : vector<128xf32> to vector<128x1xf32>
    %45 = arith.addf %44, %25 : vector<128x1xf32>
    %cst_29 = arith.constant 0.000000e+00 : f32
    %46 = vector.broadcast %cst_29 : f32 to vector<128x1xf32>
    %47 = vector.extract_strided_slice %40 {offsets = [0, 0], sizes = [128, 1], strides = [1, 1]} : vector<128x4xf32> to vector<128x1xf32>
    %48 = vector.extract_strided_slice %41 {offsets = [0, 0], sizes = [128, 1], strides = [1, 1]} : vector<128x4xf32> to vector<128x1xf32>
    %49 = vector.broadcast %47 : vector<128x1xf32> to vector<128x32xf32>
    %50 = arith.mulf %49, %16 : vector<128x32xf32>
    %51 = arith.addf %50, %6 : vector<128x32xf32>
    %cst_30 = arith.constant 0.000000e+00 : f32
    %52 = vector.broadcast %cst_30 : f32 to vector<128x32xf32>
    %53 = arith.cmpf ogt, %51, %52 : vector<128x32xf32>
    %cst_31 = arith.constant 0.000000e+00 : f32
    %54 = vector.broadcast %cst_31 : f32 to vector<128x32xf32>
    %55 = arith.minimumf %51, %54 : vector<128x32xf32>
    %56 = math.exp %55 : vector<128x32xf32>
    %cst_32 = arith.constant 1.000000e+00 : f32
    %57 = vector.broadcast %cst_32 : f32 to vector<128x32xf32>
    %58 = arith.subf %56, %57 : vector<128x32xf32>
    %59 = arith.select %53, %51, %58 : vector<128x32xi1>, vector<128x32xf32>
    %60 = arith.mulf %59, %18 : vector<128x32xf32>
    %cst_33 = arith.constant dense<0.000000e+00> : vector<128xf32>
    %61 = vector.multi_reduction <add>, %60, %cst_33 [1] : vector<128x32xf32> to vector<128xf32>
    %62 = vector.shape_cast %61 : vector<128xf32> to vector<128x1xf32>
    %63 = arith.addf %62, %24 : vector<128x1xf32>
    %64 = vector.extract_strided_slice %39 {offsets = [0, 0], sizes = [128, 32], strides = [1, 1]} : vector<128x128xf32> to vector<128x32xf32>
    %65 = arith.mulf %64, %20 : vector<128x32xf32>
    %cst_34 = arith.constant dense<0.000000e+00> : vector<128xf32>
    %66 = vector.multi_reduction <add>, %65, %cst_34 [1] : vector<128x32xf32> to vector<128xf32>
    %67 = vector.shape_cast %66 : vector<128xf32> to vector<128x1xf32>
    %68 = arith.addf %67, %45 : vector<128x1xf32>
    %69 = math.exp %68 : vector<128x1xf32>
    %70 = arith.mulf %69, %48 : vector<128x1xf32>
    %71 = arith.mulf %63, %70 : vector<128x1xf32>
    %72 = arith.addf %46, %71 : vector<128x1xf32>
    %73 = vector.extract_strided_slice %40 {offsets = [0, 1], sizes = [128, 1], strides = [1, 1]} : vector<128x4xf32> to vector<128x1xf32>
    %74 = vector.extract_strided_slice %41 {offsets = [0, 1], sizes = [128, 1], strides = [1, 1]} : vector<128x4xf32> to vector<128x1xf32>
    %75 = vector.broadcast %73 : vector<128x1xf32> to vector<128x32xf32>
    %76 = arith.mulf %75, %16 : vector<128x32xf32>
    %77 = arith.addf %76, %6 : vector<128x32xf32>
    %cst_35 = arith.constant 0.000000e+00 : f32
    %78 = vector.broadcast %cst_35 : f32 to vector<128x32xf32>
    %79 = arith.cmpf ogt, %77, %78 : vector<128x32xf32>
    %cst_36 = arith.constant 0.000000e+00 : f32
    %80 = vector.broadcast %cst_36 : f32 to vector<128x32xf32>
    %81 = arith.minimumf %77, %80 : vector<128x32xf32>
    %82 = math.exp %81 : vector<128x32xf32>
    %cst_37 = arith.constant 1.000000e+00 : f32
    %83 = vector.broadcast %cst_37 : f32 to vector<128x32xf32>
    %84 = arith.subf %82, %83 : vector<128x32xf32>
    %85 = arith.select %79, %77, %84 : vector<128x32xi1>, vector<128x32xf32>
    %86 = arith.mulf %85, %18 : vector<128x32xf32>
    %cst_38 = arith.constant dense<0.000000e+00> : vector<128xf32>
    %87 = vector.multi_reduction <add>, %86, %cst_38 [1] : vector<128x32xf32> to vector<128xf32>
    %88 = vector.shape_cast %87 : vector<128xf32> to vector<128x1xf32>
    %89 = arith.addf %88, %24 : vector<128x1xf32>
    %90 = vector.extract_strided_slice %39 {offsets = [0, 32], sizes = [128, 32], strides = [1, 1]} : vector<128x128xf32> to vector<128x32xf32>
    %91 = arith.mulf %90, %20 : vector<128x32xf32>
    %cst_39 = arith.constant dense<0.000000e+00> : vector<128xf32>
    %92 = vector.multi_reduction <add>, %91, %cst_39 [1] : vector<128x32xf32> to vector<128xf32>
    %93 = vector.shape_cast %92 : vector<128xf32> to vector<128x1xf32>
    %94 = arith.addf %93, %45 : vector<128x1xf32>
    %95 = math.exp %94 : vector<128x1xf32>
    %96 = arith.mulf %95, %74 : vector<128x1xf32>
    %97 = arith.mulf %89, %96 : vector<128x1xf32>
    %98 = arith.addf %72, %97 : vector<128x1xf32>
    %99 = vector.extract_strided_slice %40 {offsets = [0, 2], sizes = [128, 1], strides = [1, 1]} : vector<128x4xf32> to vector<128x1xf32>
    %100 = vector.extract_strided_slice %41 {offsets = [0, 2], sizes = [128, 1], strides = [1, 1]} : vector<128x4xf32> to vector<128x1xf32>
    %101 = vector.broadcast %99 : vector<128x1xf32> to vector<128x32xf32>
    %102 = arith.mulf %101, %16 : vector<128x32xf32>
    %103 = arith.addf %102, %6 : vector<128x32xf32>
    %cst_40 = arith.constant 0.000000e+00 : f32
    %104 = vector.broadcast %cst_40 : f32 to vector<128x32xf32>
    %105 = arith.cmpf ogt, %103, %104 : vector<128x32xf32>
    %cst_41 = arith.constant 0.000000e+00 : f32
    %106 = vector.broadcast %cst_41 : f32 to vector<128x32xf32>
    %107 = arith.minimumf %103, %106 : vector<128x32xf32>
    %108 = math.exp %107 : vector<128x32xf32>
    %cst_42 = arith.constant 1.000000e+00 : f32
    %109 = vector.broadcast %cst_42 : f32 to vector<128x32xf32>
    %110 = arith.subf %108, %109 : vector<128x32xf32>
    %111 = arith.select %105, %103, %110 : vector<128x32xi1>, vector<128x32xf32>
    %112 = arith.mulf %111, %18 : vector<128x32xf32>
    %cst_43 = arith.constant dense<0.000000e+00> : vector<128xf32>
    %113 = vector.multi_reduction <add>, %112, %cst_43 [1] : vector<128x32xf32> to vector<128xf32>
    %114 = vector.shape_cast %113 : vector<128xf32> to vector<128x1xf32>
    %115 = arith.addf %114, %24 : vector<128x1xf32>
    %116 = vector.extract_strided_slice %39 {offsets = [0, 64], sizes = [128, 32], strides = [1, 1]} : vector<128x128xf32> to vector<128x32xf32>
    %117 = arith.mulf %116, %20 : vector<128x32xf32>
    %cst_44 = arith.constant dense<0.000000e+00> : vector<128xf32>
    %118 = vector.multi_reduction <add>, %117, %cst_44 [1] : vector<128x32xf32> to vector<128xf32>
    %119 = vector.shape_cast %118 : vector<128xf32> to vector<128x1xf32>
    %120 = arith.addf %119, %45 : vector<128x1xf32>
    %121 = math.exp %120 : vector<128x1xf32>
    %122 = arith.mulf %121, %100 : vector<128x1xf32>
    %123 = arith.mulf %115, %122 : vector<128x1xf32>
    %124 = arith.addf %98, %123 : vector<128x1xf32>
    %125 = vector.extract_strided_slice %40 {offsets = [0, 3], sizes = [128, 1], strides = [1, 1]} : vector<128x4xf32> to vector<128x1xf32>
    %126 = vector.extract_strided_slice %41 {offsets = [0, 3], sizes = [128, 1], strides = [1, 1]} : vector<128x4xf32> to vector<128x1xf32>
    %127 = vector.broadcast %125 : vector<128x1xf32> to vector<128x32xf32>
    %128 = arith.mulf %127, %16 : vector<128x32xf32>
    %129 = arith.addf %128, %6 : vector<128x32xf32>
    %cst_45 = arith.constant 0.000000e+00 : f32
    %130 = vector.broadcast %cst_45 : f32 to vector<128x32xf32>
    %131 = arith.cmpf ogt, %129, %130 : vector<128x32xf32>
    %cst_46 = arith.constant 0.000000e+00 : f32
    %132 = vector.broadcast %cst_46 : f32 to vector<128x32xf32>
    %133 = arith.minimumf %129, %132 : vector<128x32xf32>
    %134 = math.exp %133 : vector<128x32xf32>
    %cst_47 = arith.constant 1.000000e+00 : f32
    %135 = vector.broadcast %cst_47 : f32 to vector<128x32xf32>
    %136 = arith.subf %134, %135 : vector<128x32xf32>
    %137 = arith.select %131, %129, %136 : vector<128x32xi1>, vector<128x32xf32>
    %138 = arith.mulf %137, %18 : vector<128x32xf32>
    %cst_48 = arith.constant dense<0.000000e+00> : vector<128xf32>
    %139 = vector.multi_reduction <add>, %138, %cst_48 [1] : vector<128x32xf32> to vector<128xf32>
    %140 = vector.shape_cast %139 : vector<128xf32> to vector<128x1xf32>
    %141 = arith.addf %140, %24 : vector<128x1xf32>
    %142 = vector.extract_strided_slice %39 {offsets = [0, 96], sizes = [128, 32], strides = [1, 1]} : vector<128x128xf32> to vector<128x32xf32>
    %143 = arith.mulf %142, %20 : vector<128x32xf32>
    %cst_49 = arith.constant dense<0.000000e+00> : vector<128xf32>
    %144 = vector.multi_reduction <add>, %143, %cst_49 [1] : vector<128x32xf32> to vector<128xf32>
    %145 = vector.shape_cast %144 : vector<128xf32> to vector<128x1xf32>
    %146 = arith.addf %145, %45 : vector<128x1xf32>
    %147 = math.exp %146 : vector<128x1xf32>
    %148 = arith.mulf %147, %126 : vector<128x1xf32>
    %149 = arith.mulf %141, %148 : vector<128x1xf32>
    %150 = arith.addf %124, %149 : vector<128x1xf32>
    %cst_50 = arith.constant dense<0.000000e+00> : vector<128xf32>
    %151 = vector.multi_reduction <add>, %41, %cst_50 [1] : vector<128x4xf32> to vector<128xf32>
    %152 = vector.shape_cast %151 : vector<128xf32> to vector<128x1xf32>
    %cst_51 = arith.constant 1.000000e+00 : f32
    %cst_52 = arith.constant 8.000000e+00 : f32
    %153 = vector.broadcast %cst_51 : f32 to vector<128x1xf32>
    %154 = arith.maximumf %153, %152 : vector<128x1xf32>
    %155 = vector.broadcast %cst_52 : f32 to vector<128x1xf32>
    %156 = arith.minimumf %155, %154 : vector<128x1xf32>
    %157 = arith.divf %150, %156 : vector<128x1xf32>
    %158 = arith.addf %157, %26 : vector<128x1xf32>
    %c0_53 = arith.constant 0 : index
    %c0_54 = arith.constant 0 : index
    %159 = vector.load %arg13[%c0_53, %c0_54] : memref<128x1xf32, #tpu.memory_space<vmem>>, vector<128x1xf32>
    tpu.vector_store %arg13[%c0_53, %c0_54], %158 {strides = array<i32>} : memref<128x1xf32, #tpu.memory_space<vmem>>, vector<128x1xf32>,
    return
  }
  func.func @transform_0(%arg0: i32) -> (i32, i32) {
    %c0_i32 = arith.constant 0 : i32
    %c0_i32_0 = arith.constant 0 : i32
    return %arg0, %c0_i32 : i32, i32
  }
  func.func @transform_1(%arg0: i32) -> (i32, i32) {
    %c0_i32 = arith.constant 0 : i32
    %c0_i32_0 = arith.constant 0 : i32
    return %arg0, %c0_i32 : i32, i32
  }
  func.func @transform_2(%arg0: i32) -> (i32, i32) {
    %c0_i32 = arith.constant 0 : i32
    %c0_i32_0 = arith.constant 0 : i32
    return %arg0, %c0_i32 : i32, i32
  }
  func.func @transform_3(%arg0: i32) -> (i32, i32) {
    %c0_i32 = arith.constant 0 : i32
    %c0_i32_0 = arith.constant 0 : i32
    return %arg0, %c0_i32 : i32, i32
  }
  func.func @transform_4(%arg0: i32) -> (i32, i32) {
    %c0_i32 = arith.constant 0 : i32
    %c0_i32_0 = arith.constant 0 : i32
    %c0_i32_1 = arith.constant 0 : i32
    return %c0_i32, %c0_i32_0 : i32, i32
  }
  func.func @transform_5(%arg0: i32) -> (i32, i32) {
    %c0_i32 = arith.constant 0 : i32
    %c0_i32_0 = arith.constant 0 : i32
    %c0_i32_1 = arith.constant 0 : i32
    return %c0_i32, %c0_i32_0 : i32, i32
  }
  func.func @transform_6(%arg0: i32) -> (i32, i32) {
    %c0_i32 = arith.constant 0 : i32
    %c0_i32_0 = arith.constant 0 : i32
    %c0_i32_1 = arith.constant 0 : i32
    return %c0_i32, %c0_i32_0 : i32, i32
  }
  func.func @transform_7(%arg0: i32) -> (i32, i32) {
    %c0_i32 = arith.constant 0 : i32
    %c0_i32_0 = arith.constant 0 : i32
    %c0_i32_1 = arith.constant 0 : i32
    return %c0_i32, %c0_i32_0 : i32, i32
  }
  func.func @transform_8(%arg0: i32) -> (i32, i32) {
    %c0_i32 = arith.constant 0 : i32
    %c0_i32_0 = arith.constant 0 : i32
    %c0_i32_1 = arith.constant 0 : i32
    return %c0_i32, %c0_i32_0 : i32, i32
  }
  func.func @transform_9(%arg0: i32) -> (i32, i32) {
    %c0_i32 = arith.constant 0 : i32
    %c0_i32_0 = arith.constant 0 : i32
    %c0_i32_1 = arith.constant 0 : i32
    return %c0_i32, %c0_i32_0 : i32, i32
  }
  func.func @transform_10(%arg0: i32) -> (i32, i32) {
    %c0_i32 = arith.constant 0 : i32
    %c0_i32_0 = arith.constant 0 : i32
    %c0_i32_1 = arith.constant 0 : i32
    return %c0_i32, %c0_i32_0 : i32, i32
  }
  func.func @transform_11(%arg0: i32) -> (i32, i32) {
    %c0_i32 = arith.constant 0 : i32
    %c0_i32_0 = arith.constant 0 : i32
    %c0_i32_1 = arith.constant 0 : i32
    return %c0_i32, %c0_i32_0 : i32, i32
  }
  func.func @transform_12(%arg0: i32) -> (i32, i32) {
    %c0_i32 = arith.constant 0 : i32
    %c0_i32_0 = arith.constant 0 : i32
    return %arg0, %c0_i32 : i32, i32
  }
}

</mosaic_0001>

<llo_original>
// kernel: smix_forward.1
$region0: #{smix_forward.1}
  #allocation0 [shape = 'u32[]', space=smem, size = 0x4, offset = 0x4, fixed_abs, tag = 'smem constant byte address 0x4 - core index']
  #allocation1 [shape = 'u32[144,128]{1,0:T(1,128)}', space=vmem, size = 0x12000, scoped, tag = 'internal scratch']
  %s0 = inlined_call_operand.vmem [shape: f32[256,32], index: 0, kind: input, shape index: {}]
  %s1 = inlined_call_operand.vmem [shape: f32[256,64], index: 1, kind: input, shape index: {}]
  %s2 = inlined_call_operand.vmem [shape: f32[256,4], index: 2, kind: input, shape index: {}]
  %s3 = inlined_call_operand.vmem [shape: f32[256,4], index: 3, kind: input, shape index: {}]
  %s4 = inlined_call_operand.vmem [shape: f32[32,288], index: 4, kind: input, shape index: {}]
  %s5 = inlined_call_operand.vmem [shape: f32[1,288], index: 5, kind: input, shape index: {}]
  %s6 = inlined_call_operand.vmem [shape: f32[256,163], index: 6, kind: input, shape index: {}]
  %s7 = inlined_call_operand.vmem [shape: f32[1,163], index: 7, kind: input, shape index: {}]
  %s8 = inlined_call_operand.vmem [shape: f32[64,128], index: 8, kind: input, shape index: {}]
  %s9 = inlined_call_operand.vmem [shape: f32[1,128], index: 9, kind: input, shape index: {}]
  %s10 = inlined_call_operand.vmem [shape: f32[128,128], index: 10, kind: input, shape index: {}]
  %s11 = inlined_call_operand.vmem [shape: f32[1,128], index: 11, kind: input, shape index: {}]
  %s12 = inlined_call_operand.vmem [shape: f32[256,1], index: 12, kind: output, shape index: {}]
  %s13 = sld [smem:[#allocation0]]
  $region81: #{smix_forward.1} parent=0
    _
  %s15 = ssub.s32 1, %s13
  %s16 = scalar_select 0, %s15, %s13
  loop: start=0, step=1, limit=4
  $region2: #{smix_forward.1} parent=0 // loop_pre_header
    _
  $region3: #{smix_forward.1} parent=0 // loop_header
    %s18 = sphi 0, %s22
    %p19 = scmp.ge.s32.totalorder %s18, 4
    %s28 = sphi 0, %s30
    %s31 = sphi 0, %s28
    %s32 = sphi 0, %s31
    %s48 = sphi 0, %s32
    %s54 = sphi 0, %s56
    %s57 = sphi 0, %s54
    %s58 = sphi 0, %s57
    %s74 = sphi 0, %s58
    %s80 = sphi 0, %s82
    %s83 = sphi 0, %s80
    %s84 = sphi 0, %s83
    %s100 = sphi 0, %s84
    %s106 = sphi 0, %s108
    %s109 = sphi 0, %s106
    %s110 = sphi 0, %s109
    %s126 = sphi 0, %s110
    %s130 = sphi 0, %s130
    %s132 = sphi 0, %s130
    %s133 = sphi 0, %s132
    %s147 = sphi 0, %s133
    %s151 = sphi 0, %s151
    %s153 = sphi 0, %s151
    %s154 = sphi 0, %s153
    %s168 = sphi 0, %s154
    %s172 = sphi 0, %s172
    %s174 = sphi 0, %s172
    %s175 = sphi 0, %s174
    %s189 = sphi 0, %s175
    %s193 = sphi 0, %s193
    %s195 = sphi 0, %s193
    %s196 = sphi 0, %s195
    %s210 = sphi 0, %s196
    %s214 = sphi 0, %s214
    %s216 = sphi 0, %s214
    %s217 = sphi 0, %s216
    %s231 = sphi 0, %s217
    %s235 = sphi 0, %s235
    %s237 = sphi 0, %s235
    %s238 = sphi 0, %s237
    %s252 = sphi 0, %s238
    %s256 = sphi 0, %s256
    %s258 = sphi 0, %s256
    %s259 = sphi 0, %s258
    %s273 = sphi 0, %s259
    %s277 = sphi 0, %s277
    %s279 = sphi 0, %s277
    %s280 = sphi 0, %s279
    %s294 = sphi 0, %s280
    %s300 = sphi 0, %s302
    %s303 = sphi 0, %s300
    %s304 = sphi 0, %s303
    %s320 = sphi 0, %s304
  $region4: #{smix_forward.1} parent=0 // loop_header_branch
    %21 = sbr.rel (%p19) target = $region8
  $region5: #{smix_forward.1} parent=0 // loop_body
    %s23 = ssub.s32 %s18, 1
    %s24 = ssub.s32 %s18, 2
    %s25 = sadd.s32 %s18, 1
    %s26 = ssub.s32 %s18, %s25
    %p27 = scmp.eq.s32.totalorder %s26, 0
    %s29 = sadd.s32 %s28, 1
    %s30 = scalar_select %p27, %s28, %s29
    %p33 = pneg %p27
    %p34 = scmp.eq.s32.totalorder %s18, 1
    %p35 = por %p33, %p34
    %p36 = scmp.ne.s32.totalorder %s28, %s31
    %p37 = scmp.eq.s32.totalorder %s18, 0
    %p38 = por %p36, %p37
    %p39 = scmp.ne.s32.totalorder %s28, %s31
    %p40 = scmp.eq.s32.totalorder %s23, 1
    %p41 = por %p39, %p40
    %p42 = scmp.ne.s32.totalorder %s31, %s32
    %p43 = scmp.eq.s32.totalorder %s23, 0
    %p44 = por %p42, %p43
    %p45 = scmp.ne.s32.totalorder %s31, %s32
    %p46 = scmp.eq.s32.totalorder %s24, 1
    %p47 = por %p45, %p46
    %p49 = scmp.ne.s32.totalorder %s32, %s48
    %p50 = scmp.eq.s32.totalorder %s24, 0
    %p51 = por %p49, %p50
    %s52 = ssub.s32 %s18, %s25
    %p53 = scmp.eq.s32.totalorder %s52, 0
    %s55 = sadd.s32 %s54, 1
    %s56 = scalar_select %p53, %s54, %s55
    %p59 = pneg %p53
    %p60 = scmp.eq.s32.totalorder %s18, 1
    %p61 = por %p59, %p60
    %p62 = scmp.ne.s32.totalorder %s54, %s57
    %p63 = scmp.eq.s32.totalorder %s18, 0
    %p64 = por %p62, %p63
    %p65 = scmp.ne.s32.totalorder %s54, %s57
    %p66 = scmp.eq.s32.totalorder %s23, 1
    %p67 = por %p65, %p66
    %p68 = scmp.ne.s32.totalorder %s57, %s58
    %p69 = scmp.eq.s32.totalorder %s23, 0
    %p70 = por %p68, %p69
    %p71 = scmp.ne.s32.totalorder %s57, %s58
    %p72 = scmp.eq.s32.totalorder %s24, 1
    %p73 = por %p71, %p72
    %p75 = scmp.ne.s32.totalorder %s58, %s74
    %p76 = scmp.eq.s32.totalorder %s24, 0
    %p77 = por %p75, %p76
    %s78 = ssub.s32 %s18, %s25
    %p79 = scmp.eq.s32.totalorder %s78, 0
    %s81 = sadd.s32 %s80, 1
    %s82 = scalar_select %p79, %s80, %s81
    %p85 = pneg %p79
    %p86 = scmp.eq.s32.totalorder %s18, 1
    %p87 = por %p85, %p86
    %p88 = scmp.ne.s32.totalorder %s80, %s83
    %p89 = scmp.eq.s32.totalorder %s18, 0
    %p90 = por %p88, %p89
    %p91 = scmp.ne.s32.totalorder %s80, %s83
    %p92 = scmp.eq.s32.totalorder %s23, 1
    %p93 = por %p91, %p92
    %p94 = scmp.ne.s32.totalorder %s83, %s84
    %p95 = scmp.eq.s32.totalorder %s23, 0
    %p96 = por %p94, %p95
    %p97 = scmp.ne.s32.totalorder %s83, %s84
    %p98 = scmp.eq.s32.totalorder %s24, 1
    %p99 = por %p97, %p98
    %p101 = scmp.ne.s32.totalorder %s84, %s100
    %p102 = scmp.eq.s32.totalorder %s24, 0
    %p103 = por %p101, %p102
    %s104 = ssub.s32 %s18, %s25
    %p105 = scmp.eq.s32.totalorder %s104, 0
    %s107 = sadd.s32 %s106, 1
    %s108 = scalar_select %p105, %s106, %s107
    %p111 = pneg %p105
    %p112 = scmp.eq.s32.totalorder %s18, 1
    %p113 = por %p111, %p112
    %p114 = scmp.ne.s32.totalorder %s106, %s109
    %p115 = scmp.eq.s32.totalorder %s18, 0
    %p116 = por %p114, %p115
    %p117 = scmp.ne.s32.totalorder %s106, %s109
    %p118 = scmp.eq.s32.totalorder %s23, 1
    %p119 = por %p117, %p118
    %p120 = scmp.ne.s32.totalorder %s109, %s110
    %p121 = scmp.eq.s32.totalorder %s23, 0
    %p122 = por %p120, %p121
    %p123 = scmp.ne.s32.totalorder %s109, %s110
    %p124 = scmp.eq.s32.totalorder %s24, 1
    %p125 = por %p123, %p124
    %p127 = scmp.ne.s32.totalorder %s110, %s126
    %p128 = scmp.eq.s32.totalorder %s24, 0
    %p129 = por %p127, %p128
    %s131 = sadd.s32 %s130, 1
    %p134 = scmp.eq.s32.totalorder %s18, 1
    %p135 = scmp.ne.s32.totalorder %s130, %s132
    %p136 = scmp.eq.s32.totalorder %s18, 0
    %p137 = por %p135, %p136
    %p138 = scmp.ne.s32.totalorder %s130, %s132
    %p139 = scmp.eq.s32.totalorder %s23, 1
    %p140 = por %p138, %p139
    %p141 = scmp.ne.s32.totalorder %s132, %s133
    %p142 = scmp.eq.s32.totalorder %s23, 0
    %p143 = por %p141, %p142
    %p144 = scmp.ne.s32.totalorder %s132, %s133
    %p145 = scmp.eq.s32.totalorder %s24, 1
    %p146 = por %p144, %p145
    %p148 = scmp.ne.s32.totalorder %s133, %s147
    %p149 = scmp.eq.s32.totalorder %s24, 0
    %p150 = por %p148, %p149
    %s152 = sadd.s32 %s151, 1
    %p155 = scmp.eq.s32.totalorder %s18, 1
    %p156 = scmp.ne.s32.totalorder %s151, %s153
    %p157 = scmp.eq.s32.totalorder %s18, 0
    %p158 = por %p156, %p157
    %p159 = scmp.ne.s32.totalorder %s151, %s153
    %p160 = scmp.eq.s32.totalorder %s23, 1
    %p161 = por %p159, %p160
    %p162 = scmp.ne.s32.totalorder %s153, %s154
    %p163 = scmp.eq.s32.totalorder %s23, 0
    %p164 = por %p162, %p163
    %p165 = scmp.ne.s32.totalorder %s153, %s154
    %p166 = scmp.eq.s32.totalorder %s24, 1
    %p167 = por %p165, %p166
    %p169 = scmp.ne.s32.totalorder %s154, %s168
    %p170 = scmp.eq.s32.totalorder %s24, 0
    %p171 = por %p169, %p170
    %s173 = sadd.s32 %s172, 1
    %p176 = scmp.eq.s32.totalorder %s18, 1
    %p177 = scmp.ne.s32.totalorder %s172, %s174
    %p178 = scmp.eq.s32.totalorder %s18, 0
    %p179 = por %p177, %p178
    %p180 = scmp.ne.s32.totalorder %s172, %s174
    %p181 = scmp.eq.s32.totalorder %s23, 1
    %p182 = por %p180, %p181
    %p183 = scmp.ne.s32.totalorder %s174, %s175
    %p184 = scmp.eq.s32.totalorder %s23, 0
    %p185 = por %p183, %p184
    %p186 = scmp.ne.s32.totalorder %s174, %s175
    %p187 = scmp.eq.s32.totalorder %s24, 1
    %p188 = por %p186, %p187
    %p190 = scmp.ne.s32.totalorder %s175, %s189
    %p191 = scmp.eq.s32.totalorder %s24, 0
    %p192 = por %p190, %p191
    %s194 = sadd.s32 %s193, 1
    %p197 = scmp.eq.s32.totalorder %s18, 1
    %p198 = scmp.ne.s32.totalorder %s193, %s195
    %p199 = scmp.eq.s32.totalorder %s18, 0
    %p200 = por %p198, %p199
    %p201 = scmp.ne.s32.totalorder %s193, %s195
    %p202 = scmp.eq.s32.totalorder %s23, 1
    %p203 = por %p201, %p202
    %p204 = scmp.ne.s32.totalorder %s195, %s196
    %p205 = scmp.eq.s32.totalorder %s23, 0
    %p206 = por %p204, %p205
    %p207 = scmp.ne.s32.totalorder %s195, %s196
    %p208 = scmp.eq.s32.totalorder %s24, 1
    %p209 = por %p207, %p208
    %p211 = scmp.ne.s32.totalorder %s196, %s210
    %p212 = scmp.eq.s32.totalorder %s24, 0
    %p213 = por %p211, %p212
    %s215 = sadd.s32 %s214, 1
    %p218 = scmp.eq.s32.totalorder %s18, 1
    %p219 = scmp.ne.s32.totalorder %s214, %s216
    %p220 = scmp.eq.s32.totalorder %s18, 0
    %p221 = por %p219, %p220
    %p222 = scmp.ne.s32.totalorder %s214, %s216
    %p223 = scmp.eq.s32.totalorder %s23, 1
    %p224 = por %p222, %p223
    %p225 = scmp.ne.s32.totalorder %s216, %s217
    %p226 = scmp.eq.s32.totalorder %s23, 0
    %p227 = por %p225, %p226
    %p228 = scmp.ne.s32.totalorder %s216, %s217
    %p229 = scmp.eq.s32.totalorder %s24, 1
    %p230 = por %p228, %p229
    %p232 = scmp.ne.s32.totalorder %s217, %s231
    %p233 = scmp.eq.s32.totalorder %s24, 0
    %p234 = por %p232, %p233
    %s236 = sadd.s32 %s235, 1
    %p239 = scmp.eq.s32.totalorder %s18, 1
    %p240 = scmp.ne.s32.totalorder %s235, %s237
    %p241 = scmp.eq.s32.totalorder %s18, 0
    %p242 = por %p240, %p241
    %p243 = scmp.ne.s32.totalorder %s235, %s237
    %p244 = scmp.eq.s32.totalorder %s23, 1
    %p245 = por %p243, %p244
    %p246 = scmp.ne.s32.totalorder %s237, %s238
    %p247 = scmp.eq.s32.totalorder %s23, 0
    %p248 = por %p246, %p247
    %p249 = scmp.ne.s32.totalorder %s237, %s238
    %p250 = scmp.eq.s32.totalorder %s24, 1
    %p251 = por %p249, %p250
    %p253 = scmp.ne.s32.totalorder %s238, %s252
    %p254 = scmp.eq.s32.totalorder %s24, 0
    %p255 = por %p253, %p254
    %s257 = sadd.s32 %s256, 1
    %p260 = scmp.eq.s32.totalorder %s18, 1
    %p261 = scmp.ne.s32.totalorder %s256, %s258
    %p262 = scmp.eq.s32.totalorder %s18, 0
    %p263 = por %p261, %p262
    %p264 = scmp.ne.s32.totalorder %s256, %s258
    %p265 = scmp.eq.s32.totalorder %s23, 1
    %p266 = por %p264, %p265
    %p267 = scmp.ne.s32.totalorder %s258, %s259
    %p268 = scmp.eq.s32.totalorder %s23, 0
    %p269 = por %p267, %p268
    %p270 = scmp.ne.s32.totalorder %s258, %s259
    %p271 = scmp.eq.s32.totalorder %s24, 1
    %p272 = por %p270, %p271
    %p274 = scmp.ne.s32.totalorder %s259, %s273
    %p275 = scmp.eq.s32.totalorder %s24, 0
    %p276 = por %p274, %p275
    %s278 = sadd.s32 %s277, 1
    %p281 = scmp.eq.s32.totalorder %s18, 1
    %p282 = scmp.ne.s32.totalorder %s277, %s279
    %p283 = scmp.eq.s32.totalorder %s18, 0
    %p284 = por %p282, %p283
    %p285 = scmp.ne.s32.totalorder %s277, %s279
    %p286 = scmp.eq.s32.totalorder %s23, 1
    %p287 = por %p285, %p286
    %p288 = scmp.ne.s32.totalorder %s279, %s280
    %p289 = scmp.eq.s32.totalorder %s23, 0
    %p290 = por %p288, %p289
    %p291 = scmp.ne.s32.totalorder %s279, %s280
    %p292 = scmp.eq.s32.totalorder %s24, 1
    %p293 = por %p291, %p292
    %p295 = scmp.ne.s32.totalorder %s280, %s294
    %p296 = scmp.eq.s32.totalorder %s24, 0
    %p297 = por %p295, %p296
    %s298 = ssub.s32 %s18, %s25
    %p299 = scmp.eq.s32.totalorder %s298, 0
    %s301 = sadd.s32 %s300, 1
    %s302 = scalar_select %p299, %s300, %s301
    %p305 = pneg %p299
    %p306 = scmp.eq.s32.totalorder %s18, 1
    %p307 = por %p305, %p306
    %p308 = scmp.ne.s32.totalorder %s300, %s303
    %p309 = scmp.eq.s32.totalorder %s18, 0
    %p310 = por %p308, %p309
    %p311 = scmp.ne.s32.totalorder %s300, %s303
    %p312 = scmp.eq.s32.totalorder %s23, 1
    %p313 = por %p311, %p312
    %p314 = scmp.ne.s32.totalorder %s303, %s304
    %p315 = scmp.eq.s32.totalorder %s23, 0
    %p316 = por %p314, %p315
    %p317 = scmp.ne.s32.totalorder %s303, %s304
    %p318 = scmp.eq.s32.totalorder %s24, 1
    %p319 = por %p317, %p318
    %p321 = scmp.ne.s32.totalorder %s304, %s320
    %p322 = scmp.eq.s32.totalorder %s24, 0
    %p323 = por %p321, %p322
    %p324 = scmp.le.s32.totalorder 1, %s18
    %p325 = scmp.lt.s32.totalorder %s18, 3
    %p326 = pnand %p324, %p325
    %p327 = pneg %p326
    // Predicated region
    $region9: #{smix_forward.1} parent=5 // pred_check
      _
    $region10: #{smix_forward.1} parent=5 // pred_check_branch
      %329 = sbr.rel (%p326) target = $region12
    $region11: #{smix_forward.1} parent=5 // pred_region
      %s330 = ssub.s32 %s18, 1
      // Predicated region
      $region13: #{smix_forward.1} parent=11 // pred_check
        %p331 = pneg %p143
      $region14: #{smix_forward.1} parent=11 // pred_check_branch
        %333 = sbr.rel (%p331) target = $region16
      $region15: #{smix_forward.1} parent=11 // pred_region
        _
      $region16: #{smix_forward.1} parent=11 // pred_fallthru
        _
      // Predicated region
      $region17: #{smix_forward.1} parent=11 // pred_check
        %p334 = pneg %p164
      $region18: #{smix_forward.1} parent=11 // pred_check_branch
        %336 = sbr.rel (%p334) target = $region20
      $region19: #{smix_forward.1} parent=11 // pred_region
        _
      $region20: #{smix_forward.1} parent=11 // pred_fallthru
        _
      // Predicated region
      $region21: #{smix_forward.1} parent=11 // pred_check
        %p337 = pneg %p185
      $region22: #{smix_forward.1} parent=11 // pred_check_branch
        %339 = sbr.rel (%p337) target = $region24
      $region23: #{smix_forward.1} parent=11 // pred_region
        _
      $region24: #{smix_forward.1} parent=11 // pred_fallthru
        _
      // Predicated region
      $region25: #{smix_forward.1} parent=11 // pred_check
        %p340 = pneg %p206
      $region26: #{smix_forward.1} parent=11 // pred_check_branch
        %342 = sbr.rel (%p340) target = $region28
      $region27: #{smix_forward.1} parent=11 // pred_region
        _
      $region28: #{smix_forward.1} parent=11 // pred_fallthru
        _
      // Predicated region
      $region29: #{smix_forward.1} parent=11 // pred_check
        %p343 = pneg %p227
      $region30: #{smix_forward.1} parent=11 // pred_check_branch
        %345 = sbr.rel (%p343) target = $region32
      $region31: #{smix_forward.1} parent=11 // pred_region
        _
      $region32: #{smix_forward.1} parent=11 // pred_fallthru
        _
      // Predicated region
      $region33: #{smix_forward.1} parent=11 // pred_check
        %p346 = pneg %p248
      $region34: #{smix_forward.1} parent=11 // pred_check_branch
        %348 = sbr.rel (%p346) target = $region36
      $region35: #{smix_forward.1} parent=11 // pred_region
        _
      $region36: #{smix_forward.1} parent=11 // pred_fallthru
        _
      // Predicated region
      $region37: #{smix_forward.1} parent=11 // pred_check
        %p349 = pneg %p269
      $region38: #{smix_forward.1} parent=11 // pred_check_branch
        %351 = sbr.rel (%p349) target = $region40
      $region39: #{smix_forward.1} parent=11 // pred_region
        _
      $region40: #{smix_forward.1} parent=11 // pred_fallthru
        _
      // Predicated region
      $region41: #{smix_forward.1} parent=11 // pred_check
        %p352 = pneg %p290
      $region42: #{smix_forward.1} parent=11 // pred_check_branch
        %354 = sbr.rel (%p352) target = $region44
      $region43: #{smix_forward.1} parent=11 // pred_region
        _
      $region44: #{smix_forward.1} parent=11 // pred_fallthru
        _
    $region12: #{smix_forward.1} parent=5 // pred_fallthru
      _
    %p355 = scmp.lt.s32.totalorder %s18, 2
    // Predicated region
    $region45: #{smix_forward.1} parent=5 // pred_check
      %p356 = pneg %p355
    $region46: #{smix_forward.1} parent=5 // pred_check_branch
      %358 = sbr.rel (%p356) target = $region48
    $region47: #{smix_forward.1} parent=5 // pred_region
      // Predicated region
      $region49: #{smix_forward.1} parent=47 // pred_check
        %p359 = pneg %p38
      $region50: #{smix_forward.1} parent=47 // pred_check_branch
        %361 = sbr.rel (%p359) target = $region52
      $region51: #{smix_forward.1} parent=47 // pred_region
        %s362 = smul.u32 16, %s18
        %p363 = scmp.lt.s32.totalorder %s362, 31
        %s364 = scalar_select %p363, %s362, 31
        %s365 = smul.addr %s364, 8
        %s366 = scalar_lea.vmem %s0, %s365
        %s367 = smul.u32 16, %s18
      $region52: #{smix_forward.1} parent=47 // pred_fallthru
        _
      // Predicated region
      $region53: #{smix_forward.1} parent=47 // pred_check
        %p368 = pneg %p64
      $region54: #{smix_forward.1} parent=47 // pred_check_branch
        %370 = sbr.rel (%p368) target = $region56
      $region55: #{smix_forward.1} parent=47 // pred_region
        %s371 = smul.u32 16, %s18
        %p372 = scmp.lt.s32.totalorder %s371, 31
        %s373 = scalar_select %p372, %s371, 31
        %s374 = smul.addr %s373, 8
        %s375 = scalar_lea.vmem %s1, %s374
        %s376 = smul.u32 16, %s18
      $region56: #{smix_forward.1} parent=47 // pred_fallthru
        _
      // Predicated region
      $region57: #{smix_forward.1} parent=47 // pred_check
        %p377 = pneg %p90
      $region58: #{smix_forward.1} parent=47 // pred_check_branch
        %379 = sbr.rel (%p377) target = $region60
      $region59: #{smix_forward.1} parent=47 // pred_region
        %s380 = smul.u32 16, %s18
        %p381 = scmp.lt.s32.totalorder %s380, 31
        %s382 = scalar_select %p381, %s380, 31
        %s383 = smul.addr %s382, 8
        %s384 = scalar_lea.vmem %s2, %s383
        %s385 = smul.u32 16, %s18
      $region60: #{smix_forward.1} parent=47 // pred_fallthru
        _
      // Predicated region
      $region61: #{smix_forward.1} parent=47 // pred_check
        %p386 = pneg %p116
      $region62: #{smix_forward.1} parent=47 // pred_check_branch
        %388 = sbr.rel (%p386) target = $region64
      $region63: #{smix_forward.1} parent=47 // pred_region
        %s389 = smul.u32 16, %s18
        %p390 = scmp.lt.s32.totalorder %s389, 31
        %s391 = scalar_select %p390, %s389, 31
        %s392 = smul.addr %s391, 8
        %s393 = scalar_lea.vmem %s3, %s392
        %s394 = smul.u32 16, %s18
      $region64: #{smix_forward.1} parent=47 // pred_fallthru
        _
    $region48: #{smix_forward.1} parent=5 // pred_fallthru
      _
    %p395 = scmp.le.s32.totalorder 1, %s18
    %p396 = scmp.lt.s32.totalorder %s18, 3
    %p397 = pnand %p395, %p396
    %p398 = pneg %p397
    // Predicated region
    $region65: #{smix_forward.1} parent=5 // pred_check
      _
    $region66: #{smix_forward.1} parent=5 // pred_check_branch
      %400 = sbr.rel (%p397) target = $region68
    $region67: #{smix_forward.1} parent=5 // pred_region
      %s401 = ssub.s32 %s18, 1
      %s402 = smul.u32 16, %s23
      %p403 = scmp.lt.s32.totalorder %s402, 31
      %s404 = scalar_select %p403, %s402, 31
      %s405 = smul.addr %s404, 8
      %s406 = scalar_lea.vmem %s0, %s405
      %p407 = pneg %p44
      %p408 = pneg %p41
      %s409 = smul.u32 16, %s23
      %p410 = scmp.lt.s32.totalorder %s409, 31
      %s411 = scalar_select %p410, %s409, 31
      %s412 = smul.addr %s411, 8
      %s413 = scalar_lea.vmem %s1, %s412
      %p414 = pneg %p70
      %p415 = pneg %p67
      %s416 = smul.u32 16, %s23
      %p417 = scmp.lt.s32.totalorder %s416, 31
      %s418 = scalar_select %p417, %s416, 31
      %s419 = smul.addr %s418, 8
      %s420 = scalar_lea.vmem %s2, %s419
      %p421 = pneg %p96
      %p422 = pneg %p93
      %s423 = smul.u32 16, %s23
      %p424 = scmp.lt.s32.totalorder %s423, 31
      %s425 = scalar_select %p424, %s423, 31
      %s426 = smul.addr %s425, 8
      %s427 = scalar_lea.vmem %s3, %s426
      %p428 = pneg %p122
      %p429 = pneg %p119
      %p430 = pneg %p143
      %p431 = pneg %p140
      %p432 = pneg %p164
      %p433 = pneg %p161
      %p434 = pneg %p185
      %p435 = pneg %p182
      %p436 = pneg %p206
      %p437 = pneg %p203
      %p438 = pneg %p227
      %p439 = pneg %p224
      %p440 = pneg %p248
      %p441 = pneg %p245
      %p442 = pneg %p269
      %p443 = pneg %p266
      %p444 = pneg %p290
      %p445 = pneg %p287
      %p446 = pneg %p316
      %p447 = pneg %p313
      %s448 = smul.u32 16, %s23
      %p449 = scmp.lt.s32.totalorder %s448, 31
      %s450 = scalar_select %p449, %s448, 31
      %s451 = smul.addr %s450, 8
      %s452 = scalar_lea.vmem %s12, %s451
      %s453 = smul.u32 16, %s23
      %p454 = scmp.lt.s32.totalorder %s453, 31
      %s455 = scalar_select %p454, %s453, 31
      %s456 = smul.addr %s455, 8
      %s457 = scalar_lea.vmem %s0, %s456
      %s458 = smul.u32 16, %s23
      %s459 = smul.u32 16, %s23
      %p460 = scmp.lt.s32.totalorder %s459, 31
      %s461 = scalar_select %p460, %s459, 31
      %s462 = smul.addr %s461, 8
      %s463 = scalar_lea.vmem %s1, %s462
      %s464 = smul.u32 16, %s23
      %s465 = smul.u32 16, %s23
      %p466 = scmp.lt.s32.totalorder %s465, 31
      %s467 = scalar_select %p466, %s465, 31
      %s468 = smul.addr %s467, 8
      %s469 = scalar_lea.vmem %s2, %s468
      %s470 = smul.u32 16, %s23
      %s471 = smul.u32 16, %s23
      %p472 = scmp.lt.s32.totalorder %s471, 31
      %s473 = scalar_select %p472, %s471, 31
      %s474 = smul.addr %s473, 8
      %s475 = scalar_lea.vmem %s3, %s474
      %s476 = smul.u32 16, %s23
      %s477 = smul.u32 16, %s23
      %p478 = scmp.lt.s32.totalorder %s477, 31
      %s479 = scalar_select %p478, %s477, 31
      %s480 = smul.addr %s479, 8
      %s481 = scalar_lea.vmem %s12, %s480
      %s482 = smul.u32 16, %s23
      %v483 = vld [vmem:[%s457] sm:$0xff]
      %v484 = vld [vmem:[%s457 + $0x8] sm:$0xff]
      %v485 = vld [vmem:[%s457 + $0x10] sm:$0xff]
      %v486 = vld [vmem:[%s457 + $0x18] sm:$0xff]
      %v487 = vld [vmem:[%s457 + $0x20] sm:$0xff]
      %v488 = vld [vmem:[%s457 + $0x28] sm:$0xff]
      %v489 = vld [vmem:[%s457 + $0x30] sm:$0xff]
      %v490 = vld [vmem:[%s457 + $0x38] sm:$0xff]
      %v491 = vld [vmem:[%s457 + $0x40] sm:$0xff]
      %v492 = vld [vmem:[%s457 + $0x48] sm:$0xff]
      %v493 = vld [vmem:[%s457 + $0x50] sm:$0xff]
      %v494 = vld [vmem:[%s457 + $0x58] sm:$0xff]
      %v495 = vld [vmem:[%s457 + $0x60] sm:$0xff]
      %v496 = vld [vmem:[%s457 + $0x68] sm:$0xff]
      %v497 = vld [vmem:[%s457 + $0x70] sm:$0xff]
      %v498 = vld [vmem:[%s457 + $0x78] sm:$0xff]
      %v499 = vld [vmem:[%s4] sm:$0xff]
      %v500 = vld [vmem:[%s4 + $0x8] sm:$0xff]
      %v501 = vld [vmem:[%s4 + $0x10] sm:$0xff]
      %v502 = vld [vmem:[%s4 + $0x18] sm:$0xff]
      %v503 = vld [vmem:[%s4 + $0x20] sm:$0xff]
      %v504 = vld [vmem:[%s4 + $0x28] sm:$0xff]
      %v505 = vld [vmem:[%s4 + $0x30] sm:$0xff]
      %v506 = vld [vmem:[%s4 + $0x38] sm:$0xff]
      %v507 = vld [vmem:[%s4 + $0x40] sm:$0xff]
      %v508 = vld [vmem:[%s4 + $0x48] sm:$0xff]
      %v509 = vld [vmem:[%s4 + $0x50] sm:$0xff]
      %v510 = vld [vmem:[%s4 + $0x58] sm:$0xff]
      %v511 = vld [vmem:[%s5] sm:$0x7]
      %v513 = vlaneseq
      %v514 = vshrl.u32 %v513, 7
      %v515 = vsub.s32 0, %v514
      %v516 = vrot.slane %v511, %v515
      %v517 = vlaneseq
      %v518 = vshrl.u32 %v517, 7
      %v519 = vsub.s32 1, %v518
      %v520 = vrot.slane %v511, %v519
      %v521 = vlaneseq
      %v522 = vshrl.u32 %v521, 7
      %v523 = vsub.s32 2, %v522
      %v524 = vrot.slane %v511, %v523
      %vm528 = vcmask 261120
      %v530 = vsel %vm528, %v483, 0
      %v533 = vsel %vm528, %v484, 0
      %v536 = vsel %vm528, %v485, 0
      %v539 = vsel %vm528, %v486, 0
      %v542 = vsel %vm528, %v487, 0
      %v545 = vsel %vm528, %v488, 0
      %v548 = vsel %vm528, %v489, 0
      %v551 = vsel %vm528, %v490, 0
      %v554 = vsel %vm528, %v491, 0
      %v557 = vsel %vm528, %v492, 0
      %v560 = vsel %vm528, %v493, 0
      %v563 = vsel %vm528, %v494, 0
      %v566 = vsel %vm528, %v495, 0
      %v569 = vsel %vm528, %v496, 0
      %v572 = vsel %vm528, %v497, 0
      %v575 = vsel %vm528, %v498, 0
      %577 = vmatprep.subr.mxu0 %v500
      %578 = vmatpush1.msra.mxu0 %v499
      %579 = vmatprep.subr.mxu0 %v503
      %580 = vmatpush1.msra.mxu0 %v502
      %581 = vmatprep.subr.mxu0 %v506
      %582 = vmatpush1.msra.mxu0 %v505
      %583 = vmatprep.subr.mxu0 %v509
      %584 = vmatpush1.msra.mxu0 %v508
      %585 = vmatprep.subr.mxu0 0.0
      %586 = vmatpush1.msra.mxu0 0.0
      %587 = vmatprep.subr.mxu0 0.0
      %588 = vmatpush1.msra.mxu0 0.0
      %589 = vmatprep.subr.mxu0 0.0
      %590 = vmatpush1.msra.mxu0 0.0
      %591 = vmatprep.subr.mxu0 0.0
      %592 = vmatpush1.msra.mxu0 0.0
      %593 = vmatprep.subr.mxu0 0.0
      %594 = vmatpush1.msra.mxu0 0.0
      %595 = vmatprep.subr.mxu0 0.0
      %596 = vmatpush1.msra.mxu0 0.0
      %597 = vmatprep.subr.mxu0 0.0
      %598 = vmatpush1.msra.mxu0 0.0
      %599 = vmatprep.subr.mxu0 0.0
      %600 = vmatpush1.msra.mxu0 0.0
      %601 = vmatprep.subr.mxu0 0.0
      %602 = vmatpush1.msra.mxu0 0.0
      %603 = vmatprep.subr.mxu0 0.0
      %604 = vmatpush1.msra.mxu0 0.0
      %605 = vmatprep.subr.mxu0 0.0
      %606 = vmatpush1.msra.mxu0 0.0
      %607 = vmatprep.subr.mxu0 0.0
      %608 = vmatpush1.msra.mxu0 0.0
      %609 = vmatprep.subr.mxu0 0.0
      %610 = vmatpush1.msra.mxu0 0.0
      %611 = vmatprep.subr.mxu0 0.0
      %612 = vmatpush1.msra.mxu0 0.0
      %613 = vmatprep.subr.mxu0 0.0
      %614 = vmatpush1.msra.mxu0 0.0
      %615 = vmatprep.subr.mxu0 0.0
      %616 = vmatpush1.msra.mxu0 0.0
      %617 = vmatprep.subr.mxu0 0.0
      %618 = vmatpush1.msra.mxu0 0.0
      %619 = vmatprep.subr.mxu0 0.0
      %620 = vmatpush1.msra.mxu0 0.0
      %621 = vmatprep.subr.mxu0 0.0
      %622 = vmatpush1.msra.mxu0 0.0
      %623 = vmatprep.subr.mxu0 0.0
      %624 = vmatpush1.msra.mxu0 0.0
      %625 = vmatprep.subr.mxu0 0.0
      %626 = vmatpush1.msra.mxu0 0.0
      %627 = vmatprep.subr.mxu0 0.0
      %628 = vmatpush1.msra.mxu0 0.0
      %629 = vmatprep.subr.mxu0 0.0
      %630 = vmatpush1.msra.mxu0 0.0
      %631 = vmatprep.subr.mxu0 0.0
      %632 = vmatpush1.msra.mxu0 0.0
      %633 = vmatprep.subr.mxu0 0.0
      %634 = vmatpush1.msra.mxu0 0.0
      %635 = vmatprep.subr.mxu0 0.0
      %636 = vmatpush1.msra.mxu0 0.0
      %637 = vmatprep.subr.mxu0 0.0
      %638 = vmatpush1.msra.mxu0 0.0
      %639 = vmatprep.subr.mxu0 0.0
      %640 = vmatpush1.msra.mxu0 0.0
      %641 = vmatprep.mubr.f32.mxu0 0.0
      %642 = vmatmul.mubr.f32.gmra.mrb[0].mxu0 %v530
      %v643 = vpop.f32.mrb[0].mxu0
      %v644 = vadd.f32 %v516, %v643
      %v645 = vpop.f32.mrb[0].mxu0
      %v646 = vadd.f32 %v520, %v645
      %647 = vmatprep.mubr.f32.mxu0 0.0
      %648 = vmatmul.mubr.f32.gmra.mrb[0].mxu0 %v533
      %v649 = vpop.f32.mrb[0].mxu0
      %v650 = vadd.f32 %v516, %v649
      %v651 = vpop.f32.mrb[0].mxu0
      %v652 = vadd.f32 %v520, %v651
      %653 = vmatprep.mubr.f32.mxu0 0.0
      %654 = vmatmul.mubr.f32.gmra.mrb[0].mxu0 %v536
      %v655 = vpop.f32.mrb[0].mxu0
      %v656 = vadd.f32 %v516, %v655
      %v657 = vpop.f32.mrb[0].mxu0
      %v658 = vadd.f32 %v520, %v657
      %659 = vmatprep.mubr.f32.mxu0 0.0
      %660 = vmatmul.mubr.f32.gmra.mrb[0].mxu0 %v539
      %v661 = vpop.f32.mrb[0].mxu0
      %v662 = vadd.f32 %v516, %v661
      %v663 = vpop.f32.mrb[0].mxu0
      %v664 = vadd.f32 %v520, %v663
      %665 = vmatprep.mubr.f32.mxu0 0.0
      %666 = vmatmul.mubr.f32.gmra.mrb[0].mxu0 %v542
      %v667 = vpop.f32.mrb[0].mxu0
      %v668 = vadd.f32 %v516, %v667
      %v669 = vpop.f32.mrb[0].mxu0
      %v670 = vadd.f32 %v520, %v669
      %671 = vmatprep.mubr.f32.mxu0 0.0
      %672 = vmatmul.mubr.f32.gmra.mrb[0].mxu0 %v545
      %v673 = vpop.f32.mrb[0].mxu0
      %v674 = vadd.f32 %v516, %v673
      %v675 = vpop.f32.mrb[0].mxu0
      %v676 = vadd.f32 %v520, %v675
      %677 = vmatprep.mubr.f32.mxu0 0.0
      %678 = vmatmul.mubr.f32.gmra.mrb[0].mxu0 %v548
      %v679 = vpop.f32.mrb[0].mxu0
      %v680 = vadd.f32 %v516, %v679
      %v681 = vpop.f32.mrb[0].mxu0
      %v682 = vadd.f32 %v520, %v681
      %683 = vmatprep.mubr.f32.mxu0 0.0
      %684 = vmatmul.mubr.f32.gmra.mrb[0].mxu0 %v551
      %v685 = vpop.f32.mrb[0].mxu0
      %v686 = vadd.f32 %v516, %v685
      %v687 = vpop.f32.mrb[0].mxu0
      %v688 = vadd.f32 %v520, %v687
      %689 = vmatprep.mubr.f32.mxu0 0.0
      %690 = vmatmul.mubr.f32.gmra.mrb[0].mxu0 %v554
      %v691 = vpop.f32.mrb[0].mxu0
      %v692 = vadd.f32 %v516, %v691
      %v693 = vpop.f32.mrb[0].mxu0
      %v694 = vadd.f32 %v520, %v693
      %695 = vmatprep.mubr.f32.mxu0 0.0
      %696 = vmatmul.mubr.f32.gmra.mrb[0].mxu0 %v557
      %v697 = vpop.f32.mrb[0].mxu0
      %v698 = vadd.f32 %v516, %v697
      %v699 = vpop.f32.mrb[0].mxu0
      %v700 = vadd.f32 %v520, %v699
      %701 = vmatprep.mubr.f32.mxu0 0.0
      %702 = vmatmul.mubr.f32.gmra.mrb[0].mxu0 %v560
      %v703 = vpop.f32.mrb[0].mxu0
      %v704 = vadd.f32 %v516, %v703
      %v705 = vpop.f32.mrb[0].mxu0
      %v706 = vadd.f32 %v520, %v705
      %707 = vmatprep.mubr.f32.mxu0 0.0
      %708 = vmatmul.mubr.f32.gmra.mrb[0].mxu0 %v563
      %v709 = vpop.f32.mrb[0].mxu0
      %v710 = vadd.f32 %v516, %v709
      %v711 = vpop.f32.mrb[0].mxu0
      %v712 = vadd.f32 %v520, %v711
      %713 = vmatprep.mubr.f32.mxu0 0.0
      %714 = vmatmul.mubr.f32.gmra.mrb[0].mxu0 %v566
      %v715 = vpop.f32.mrb[0].mxu0
      %v716 = vadd.f32 %v516, %v715
      %v717 = vpop.f32.mrb[0].mxu0
      %v718 = vadd.f32 %v520, %v717
      %719 = vmatprep.mubr.f32.mxu0 0.0
      %720 = vmatmul.mubr.f32.gmra.mrb[0].mxu0 %v569
      %v721 = vpop.f32.mrb[0].mxu0
      %v722 = vadd.f32 %v516, %v721
      %v723 = vpop.f32.mrb[0].mxu0
      %v724 = vadd.f32 %v520, %v723
      %725 = vmatprep.mubr.f32.mxu0 0.0
      %726 = vmatmul.mubr.f32.gmra.mrb[0].mxu0 %v572
      %v727 = vpop.f32.mrb[0].mxu0
      %v728 = vadd.f32 %v516, %v727
      %v729 = vpop.f32.mrb[0].mxu0
      %v730 = vadd.f32 %v520, %v729
      %731 = vmatprep.mubr.f32.mxu0 0.0
      %732 = vmatmul.mubr.f32.gmra.mrb[0].mxu0 %v575
      %v733 = vpop.f32.mrb[0].mxu0
      %v734 = vadd.f32 %v516, %v733
      %v735 = vpop.f32.mrb[0].mxu0
      %v736 = vadd.f32 %v520, %v735
      %737 = vdwg.mxu0
      %738 = vmatprep.subr.mxu0 0.0
      %739 = vmatpush1.msra.mxu0 %v501
      %740 = vmatprep.subr.mxu0 0.0
      %741 = vmatpush1.msra.mxu0 %v504
      %742 = vmatprep.subr.mxu0 0.0
      %743 = vmatpush1.msra.mxu0 %v507
      %744 = vmatprep.subr.mxu0 0.0
      %745 = vmatpush1.msra.mxu0 %v510
      %746 = vmatprep.subr.mxu0 0.0
      %747 = vmatpush1.msra.mxu0 0.0
      %748 = vmatprep.subr.mxu0 0.0
      %749 = vmatpush1.msra.mxu0 0.0
      %750 = vmatprep.subr.mxu0 0.0
      %751 = vmatpush1.msra.mxu0 0.0
      %752 = vmatprep.subr.mxu0 0.0
      %753 = vmatpush1.msra.mxu0 0.0
      %754 = vmatprep.subr.mxu0 0.0
      %755 = vmatpush1.msra.mxu0 0.0
      %756 = vmatprep.subr.mxu0 0.0
      %757 = vmatpush1.msra.mxu0 0.0
      %758 = vmatprep.subr.mxu0 0.0
      %759 = vmatpush1.msra.mxu0 0.0
      %760 = vmatprep.subr.mxu0 0.0
      %761 = vmatpush1.msra.mxu0 0.0
      %762 = vmatprep.subr.mxu0 0.0
      %763 = vmatpush1.msra.mxu0 0.0
      %764 = vmatprep.subr.mxu0 0.0
      %765 = vmatpush1.msra.mxu0 0.0
      %766 = vmatprep.subr.mxu0 0.0
      %767 = vmatpush1.msra.mxu0 0.0
      %768 = vmatprep.subr.mxu0 0.0
      %769 = vmatpush1.msra.mxu0 0.0
      %770 = vmatprep.subr.mxu0 0.0
      %771 = vmatpush1.msra.mxu0 0.0
      %772 = vmatprep.subr.mxu0 0.0
      %773 = vmatpush1.msra.mxu0 0.0
      %774 = vmatprep.subr.mxu0 0.0
      %775 = vmatpush1.msra.mxu0 0.0
      %776 = vmatprep.subr.mxu0 0.0
      %777 = vmatpush1.msra.mxu0 0.0
      %778 = vmatprep.subr.mxu0 0.0
      %779 = vmatpush1.msra.mxu0 0.0
      %780 = vmatprep.subr.mxu0 0.0
      %781 = vmatpush1.msra.mxu0 0.0
      %782 = vmatprep.subr.mxu0 0.0
      %783 = vmatpush1.msra.mxu0 0.0
      %784 = vmatprep.subr.mxu0 0.0
      %785 = vmatpush1.msra.mxu0 0.0
      %786 = vmatprep.subr.mxu0 0.0
      %787 = vmatpush1.msra.mxu0 0.0
      %788 = vmatprep.subr.mxu0 0.0
      %789 = vmatpush1.msra.mxu0 0.0
      %790 = vmatprep.subr.mxu0 0.0
      %791 = vmatpush1.msra.mxu0 0.0
      %792 = vmatprep.subr.mxu0 0.0
      %793 = vmatpush1.msra.mxu0 0.0
      %794 = vmatprep.subr.mxu0 0.0
      %795 = vmatpush1.msra.mxu0 0.0
      %796 = vmatprep.subr.mxu0 0.0
      %797 = vmatpush1.msra.mxu0 0.0
      %798 = vmatprep.subr.mxu0 0.0
      %799 = vmatpush1.msra.mxu0 0.0
      %800 = vmatprep.subr.mxu0 0.0
      %801 = vmatpush1.msra.mxu0 0.0
      %802 = vmatprep.mubr.f32.mxu0 0.0
      %803 = vmatmul.mubr.f32.gmra.mrb[0].mxu0 %v530
      %v804 = vpop.f32.mrb[0].mxu0
      %v805 = vadd.f32 %v524, %v804
      %v806 = vpop.f32.mrb[0].mxu0
      %807 = vmatprep.mubr.f32.mxu0 0.0
      %808 = vmatmul.mubr.f32.gmra.mrb[0].mxu0 %v533
      %v809 = vpop.f32.mrb[0].mxu0
      %v810 = vadd.f32 %v524, %v809
      %v811 = vpop.f32.mrb[0].mxu0
      %812 = vmatprep.mubr.f32.mxu0 0.0
      %813 = vmatmul.mubr.f32.gmra.mrb[0].mxu0 %v536
      %v814 = vpop.f32.mrb[0].mxu0
      %v815 = vadd.f32 %v524, %v814
      %v816 = vpop.f32.mrb[0].mxu0
      %817 = vmatprep.mubr.f32.mxu0 0.0
      %818 = vmatmul.mubr.f32.gmra.mrb[0].mxu0 %v539
      %v819 = vpop.f32.mrb[0].mxu0
      %v820 = vadd.f32 %v524, %v819
      %v821 = vpop.f32.mrb[0].mxu0
      %822 = vmatprep.mubr.f32.mxu0 0.0
      %823 = vmatmul.mubr.f32.gmra.mrb[0].mxu0 %v542
      %v824 = vpop.f32.mrb[0].mxu0
      %v825 = vadd.f32 %v524, %v824
      %v826 = vpop.f32.mrb[0].mxu0
      %827 = vmatprep.mubr.f32.mxu0 0.0
      %828 = vmatmul.mubr.f32.gmra.mrb[0].mxu0 %v545
      %v829 = vpop.f32.mrb[0].mxu0
      %v830 = vadd.f32 %v524, %v829
      %v831 = vpop.f32.mrb[0].mxu0
      %832 = vmatprep.mubr.f32.mxu0 0.0
      %833 = vmatmul.mubr.f32.gmra.mrb[0].mxu0 %v548
      %v834 = vpop.f32.mrb[0].mxu0
      %v835 = vadd.f32 %v524, %v834
      %v836 = vpop.f32.mrb[0].mxu0
      %837 = vmatprep.mubr.f32.mxu0 0.0
      %838 = vmatmul.mubr.f32.gmra.mrb[0].mxu0 %v551
      %v839 = vpop.f32.mrb[0].mxu0
      %v840 = vadd.f32 %v524, %v839
      %v841 = vpop.f32.mrb[0].mxu0
      %842 = vmatprep.mubr.f32.mxu0 0.0
      %843 = vmatmul.mubr.f32.gmra.mrb[0].mxu0 %v554
      %v844 = vpop.f32.mrb[0].mxu0
      %v845 = vadd.f32 %v524, %v844
      %v846 = vpop.f32.mrb[0].mxu0
      %847 = vmatprep.mubr.f32.mxu0 0.0
      %848 = vmatmul.mubr.f32.gmra.mrb[0].mxu0 %v557
      %v849 = vpop.f32.mrb[0].mxu0
      %v850 = vadd.f32 %v524, %v849
      %v851 = vpop.f32.mrb[0].mxu0
      %852 = vmatprep.mubr.f32.mxu0 0.0
      %853 = vmatmul.mubr.f32.gmra.mrb[0].mxu0 %v560
      %v854 = vpop.f32.mrb[0].mxu0
      %v855 = vadd.f32 %v524, %v854
      %v856 = vpop.f32.mrb[0].mxu0
      %857 = vmatprep.mubr.f32.mxu0 0.0
      %858 = vmatmul.mubr.f32.gmra.mrb[0].mxu0 %v563
      %v859 = vpop.f32.mrb[0].mxu0
      %v860 = vadd.f32 %v524, %v859
      %v861 = vpop.f32.mrb[0].mxu0
      %862 = vmatprep.mubr.f32.mxu0 0.0
      %863 = vmatmul.mubr.f32.gmra.mrb[0].mxu0 %v566
      %v864 = vpop.f32.mrb[0].mxu0
      %v865 = vadd.f32 %v524, %v864
      %v866 = vpop.f32.mrb[0].mxu0
      %867 = vmatprep.mubr.f32.mxu0 0.0
      %868 = vmatmul.mubr.f32.gmra.mrb[0].mxu0 %v569
      %v869 = vpop.f32.mrb[0].mxu0
      %v870 = vadd.f32 %v524, %v869
      %v871 = vpop.f32.mrb[0].mxu0
      %872 = vmatprep.mubr.f32.mxu0 0.0
      %873 = vmatmul.mubr.f32.gmra.mrb[0].mxu0 %v572
      %v874 = vpop.f32.mrb[0].mxu0
      %v875 = vadd.f32 %v524, %v874
      %v876 = vpop.f32.mrb[0].mxu0
      %877 = vmatprep.mubr.f32.mxu0 0.0
      %878 = vmatmul.mubr.f32.gmra.mrb[0].mxu0 %v575
      %v879 = vpop.f32.mrb[0].mxu0
      %v880 = vadd.f32 %v524, %v879
      %v881 = vpop.f32.mrb[0].mxu0
      %882 = vdwg.mxu0
      %v883 = vmax.f32 %v644, 0.0
      %v884 = vmax.f32 %v646, 0.0
      %v885 = vmax.f32 %v650, 0.0
      %v886 = vmax.f32 %v652, 0.0
      %v887 = vmax.f32 %v656, 0.0
      %v888 = vmax.f32 %v658, 0.0
      %v889 = vmax.f32 %v662, 0.0
      %v890 = vmax.f32 %v664, 0.0
      %v891 = vmax.f32 %v668, 0.0
      %v892 = vmax.f32 %v670, 0.0
      %v893 = vmax.f32 %v674, 0.0
      %v894 = vmax.f32 %v676, 0.0
      %v895 = vmax.f32 %v680, 0.0
      %v896 = vmax.f32 %v682, 0.0
      %v897 = vmax.f32 %v686, 0.0
      %v898 = vmax.f32 %v688, 0.0
      %v899 = vmax.f32 %v692, 0.0
      %v900 = vmax.f32 %v694, 0.0
      %v901 = vmax.f32 %v698, 0.0
      %v902 = vmax.f32 %v700, 0.0
      %v903 = vmax.f32 %v704, 0.0
      %v904 = vmax.f32 %v706, 0.0
      %v905 = vmax.f32 %v710, 0.0
      %v906 = vmax.f32 %v712, 0.0
      %v907 = vmax.f32 %v716, 0.0
      %v908 = vmax.f32 %v718, 0.0
      %v909 = vmax.f32 %v722, 0.0
      %v910 = vmax.f32 %v724, 0.0
      %v911 = vmax.f32 %v728, 0.0
      %v912 = vmax.f32 %v730, 0.0
      %v913 = vmax.f32 %v734, 0.0
      %v914 = vmax.f32 %v736, 0.0
      %v915 = vld [vmem:[%s6] sm:$0xff]
      %v916 = vld [vmem:[%s6 + $0x8] sm:$0xff]
      %v917 = vld [vmem:[%s6 + $0x10] sm:$0xff]
      %v918 = vld [vmem:[%s6 + $0x18] sm:$0xff]
      %v919 = vld [vmem:[%s6 + $0x20] sm:$0xff]
      %v920 = vld [vmem:[%s6 + $0x28] sm:$0xff]
      %v921 = vld [vmem:[%s6 + $0x30] sm:$0xff]
      %v922 = vld [vmem:[%s6 + $0x38] sm:$0xff]
      %v923 = vld [vmem:[%s6 + $0x40] sm:$0xff]
      %v924 = vld [vmem:[%s6 + $0x48] sm:$0xff]
      %v925 = vld [vmem:[%s6 + $0x50] sm:$0xff]
      %v926 = vld [vmem:[%s6 + $0x58] sm:$0xff]
      %v927 = vld [vmem:[%s6 + $0x60] sm:$0xff]
      %v928 = vld [vmem:[%s6 + $0x68] sm:$0xff]
      %v929 = vld [vmem:[%s6 + $0x70] sm:$0xff]
      %v930 = vld [vmem:[%s6 + $0x78] sm:$0xff]
      %v931 = vld [vmem:[%s6 + $0x80] sm:$0xff]
      %v932 = vld [vmem:[%s6 + $0x88] sm:$0xff]
      %v933 = vld [vmem:[%s6 + $0x90] sm:$0xff]
      %v934 = vld [vmem:[%s6 + $0x98] sm:$0xff]
      %v935 = vld [vmem:[%s6 + $0xa0] sm:$0xff]
      %v936 = vld [vmem:[%s6 + $0xa8] sm:$0xff]
      %v937 = vld [vmem:[%s6 + $0xb0] sm:$0xff]
      %v938 = vld [vmem:[%s6 + $0xb8] sm:$0xff]
      %v939 = vld [vmem:[%s6 + $0xc0] sm:$0xff]
      %v940 = vld [vmem:[%s6 + $0xc8] sm:$0xff]
      %v941 = vld [vmem:[%s6 + $0xd0] sm:$0xff]
      %v942 = vld [vmem:[%s6 + $0xd8] sm:$0xff]
      %v943 = vld [vmem:[%s6 + $0xe0] sm:$0xff]
      %v944 = vld [vmem:[%s6 + $0xe8] sm:$0xff]
      %v945 = vld [vmem:[%s6 + $0xf0] sm:$0xff]
      %v946 = vld [vmem:[%s6 + $0xf8] sm:$0xff]
      %v947 = vld [vmem:[%s6 + $0x100] sm:$0xff]
      %v948 = vld [vmem:[%s6 + $0x108] sm:$0xff]
      %v949 = vld [vmem:[%s6 + $0x110] sm:$0xff]
      %v950 = vld [vmem:[%s6 + $0x118] sm:$0xff]
      %v951 = vld [vmem:[%s6 + $0x120] sm:$0xff]
      %v952 = vld [vmem:[%s6 + $0x128] sm:$0xff]
      %v953 = vld [vmem:[%s6 + $0x130] sm:$0xff]
      %v954 = vld [vmem:[%s6 + $0x138] sm:$0xff]
      %v955 = vld [vmem:[%s6 + $0x140] sm:$0xff]
      %v956 = vld [vmem:[%s6 + $0x148] sm:$0xff]
      %v957 = vld [vmem:[%s6 + $0x150] sm:$0xff]
      %v958 = vld [vmem:[%s6 + $0x158] sm:$0xff]
      %v959 = vld [vmem:[%s6 + $0x160] sm:$0xff]
      %v960 = vld [vmem:[%s6 + $0x168] sm:$0xff]
      %v961 = vld [vmem:[%s6 + $0x170] sm:$0xff]
      %v962 = vld [vmem:[%s6 + $0x178] sm:$0xff]
      %v963 = vld [vmem:[%s6 + $0x180] sm:$0xff]
      %v964 = vld [vmem:[%s6 + $0x188] sm:$0xff]
      %v965 = vld [vmem:[%s6 + $0x190] sm:$0xff]
      %v966 = vld [vmem:[%s6 + $0x198] sm:$0xff]
      %v967 = vld [vmem:[%s6 + $0x1a0] sm:$0xff]
      %v968 = vld [vmem:[%s6 + $0x1a8] sm:$0xff]
      %v969 = vld [vmem:[%s6 + $0x1b0] sm:$0xff]
      %v970 = vld [vmem:[%s6 + $0x1b8] sm:$0xff]
      %v971 = vld [vmem:[%s6 + $0x1c0] sm:$0xff]
      %v972 = vld [vmem:[%s6 + $0x1c8] sm:$0xff]
      %v973 = vld [vmem:[%s6 + $0x1d0] sm:$0xff]
      %v974 = vld [vmem:[%s6 + $0x1d8] sm:$0xff]
      %v975 = vld [vmem:[%s6 + $0x1e0] sm:$0xff]
      %v976 = vld [vmem:[%s6 + $0x1e8] sm:$0xff]
      %v977 = vld [vmem:[%s6 + $0x1f0] sm:$0xff]
      %v978 = vld [vmem:[%s6 + $0x1f8] sm:$0xff]
      %v979 = vld [vmem:[%s7] sm:$0x3]
      %v981 = vlaneseq
      %v982 = vshrl.u32 %v981, 7
      %v983 = vsub.s32 0, %v982
      %v984 = vrot.slane %v979, %v983
      %v985 = vlaneseq
      %v986 = vshrl.u32 %v985, 7
      %v987 = vsub.s32 1, %v986
      %v988 = vrot.slane %v979, %v987
      %991 = vmatprep.subr.mxu0 %v916
      %992 = vmatpush1.msra.mxu0 %v915
      %993 = vmatprep.subr.mxu0 %v918
      %994 = vmatpush1.msra.mxu0 %v917
      %995 = vmatprep.subr.mxu0 %v920
      %996 = vmatpush1.msra.mxu0 %v919
      %997 = vmatprep.subr.mxu0 %v922
      %998 = vmatpush1.msra.mxu0 %v921
      %999 = vmatprep.subr.mxu0 %v924
      %1000 = vmatpush1.msra.mxu0 %v923
      %1001 = vmatprep.subr.mxu0 %v926
      %1002 = vmatpush1.msra.mxu0 %v925
      %1003 = vmatprep.subr.mxu0 %v928
      %1004 = vmatpush1.msra.mxu0 %v927
      %1005 = vmatprep.subr.mxu0 %v930
      %1006 = vmatpush1.msra.mxu0 %v929
      %1007 = vmatprep.subr.mxu0 %v932
      %1008 = vmatpush1.msra.mxu0 %v931
      %1009 = vmatprep.subr.mxu0 %v934
      %1010 = vmatpush1.msra.mxu0 %v933
      %1011 = vmatprep.subr.mxu0 %v936
      %1012 = vmatpush1.msra.mxu0 %v935
      %1013 = vmatprep.subr.mxu0 %v938
      %1014 = vmatpush1.msra.mxu0 %v937
      %1015 = vmatprep.subr.mxu0 %v940
      %1016 = vmatpush1.msra.mxu0 %v939
      %1017 = vmatprep.subr.mxu0 %v942
      %1018 = vmatpush1.msra.mxu0 %v941
      %1019 = vmatprep.subr.mxu0 %v944
      %1020 = vmatpush1.msra.mxu0 %v943
      %1021 = vmatprep.subr.mxu0 %v946
      %1022 = vmatpush1.msra.mxu0 %v945
      %1023 = vmatprep.subr.mxu0 %v948
      %1024 = vmatpush1.msra.mxu0 %v947
      %1025 = vmatprep.subr.mxu0 %v950
      %1026 = vmatpush1.msra.mxu0 %v949
      %1027 = vmatprep.subr.mxu0 %v952
      %1028 = vmatpush1.msra.mxu0 %v951
      %1029 = vmatprep.subr.mxu0 %v954
      %1030 = vmatpush1.msra.mxu0 %v953
      %1031 = vmatprep.subr.mxu0 %v956
      %1032 = vmatpush1.msra.mxu0 %v955
      %1033 = vmatprep.subr.mxu0 %v958
      %1034 = vmatpush1.msra.mxu0 %v957
      %1035 = vmatprep.subr.mxu0 %v960
      %1036 = vmatpush1.msra.mxu0 %v959
      %1037 = vmatprep.subr.mxu0 %v962
      %1038 = vmatpush1.msra.mxu0 %v961
      %1039 = vmatprep.subr.mxu0 %v964
      %1040 = vmatpush1.msra.mxu0 %v963
      %1041 = vmatprep.subr.mxu0 %v966
      %1042 = vmatpush1.msra.mxu0 %v965
      %1043 = vmatprep.subr.mxu0 %v968
      %1044 = vmatpush1.msra.mxu0 %v967
      %1045 = vmatprep.subr.mxu0 %v970
      %1046 = vmatpush1.msra.mxu0 %v969
      %1047 = vmatprep.subr.mxu0 %v972
      %1048 = vmatpush1.msra.mxu0 %v971
      %1049 = vmatprep.subr.mxu0 %v974
      %1050 = vmatpush1.msra.mxu0 %v973
      %1051 = vmatprep.subr.mxu0 %v976
      %1052 = vmatpush1.msra.mxu0 %v975
      %1053 = vmatprep.subr.mxu0 %v978
      %1054 = vmatpush1.msra.mxu0 %v977
      %1055 = vmatprep.mubr.f32.mxu0 %v884
      %1056 = vmatmul.mubr.f32.gmra.mrb[0].mxu0 %v883
      %v1057 = vpop.f32.mrb[0].mxu0
      %v1058 = vadd.f32 %v984, %v1057
      %v1059 = vpop.f32.mrb[0].mxu0
      %v1060 = vadd.f32 %v988, %v1059
      %1061 = vmatprep.mubr.f32.mxu0 %v886
      %1062 = vmatmul.mubr.f32.gmra.mrb[0].mxu0 %v885
      %v1063 = vpop.f32.mrb[0].mxu0
      %v1064 = vadd.f32 %v984, %v1063
      %v1065 = vpop.f32.mrb[0].mxu0
      %v1066 = vadd.f32 %v988, %v1065
      %1067 = vmatprep.mubr.f32.mxu0 %v888
      %1068 = vmatmul.mubr.f32.gmra.mrb[0].mxu0 %v887
      %v1069 = vpop.f32.mrb[0].mxu0
      %v1070 = vadd.f32 %v984, %v1069
      %v1071 = vpop.f32.mrb[0].mxu0
      %v1072 = vadd.f32 %v988, %v1071
      %1073 = vmatprep.mubr.f32.mxu0 %v890
      %1074 = vmatmul.mubr.f32.gmra.mrb[0].mxu0 %v889
      %v1075 = vpop.f32.mrb[0].mxu0
      %v1076 = vadd.f32 %v984, %v1075
      %v1077 = vpop.f32.mrb[0].mxu0
      %v1078 = vadd.f32 %v988, %v1077
      %1079 = vmatprep.mubr.f32.mxu0 %v892
      %1080 = vmatmul.mubr.f32.gmra.mrb[0].mxu0 %v891
      %v1081 = vpop.f32.mrb[0].mxu0
      %v1082 = vadd.f32 %v984, %v1081
      %v1083 = vpop.f32.mrb[0].mxu0
      %v1084 = vadd.f32 %v988, %v1083
      %1085 = vmatprep.mubr.f32.mxu0 %v894
      %1086 = vmatmul.mubr.f32.gmra.mrb[0].mxu0 %v893
      %v1087 = vpop.f32.mrb[0].mxu0
      %v1088 = vadd.f32 %v984, %v1087
      %v1089 = vpop.f32.mrb[0].mxu0
      %v1090 = vadd.f32 %v988, %v1089
      %1091 = vmatprep.mubr.f32.mxu0 %v896
      %1092 = vmatmul.mubr.f32.gmra.mrb[0].mxu0 %v895
      %v1093 = vpop.f32.mrb[0].mxu0
      %v1094 = vadd.f32 %v984, %v1093
      %v1095 = vpop.f32.mrb[0].mxu0
      %v1096 = vadd.f32 %v988, %v1095
      %1097 = vmatprep.mubr.f32.mxu0 %v898
      %1098 = vmatmul.mubr.f32.gmra.mrb[0].mxu0 %v897
      %v1099 = vpop.f32.mrb[0].mxu0
      %v1100 = vadd.f32 %v984, %v1099
      %v1101 = vpop.f32.mrb[0].mxu0
      %v1102 = vadd.f32 %v988, %v1101
      %1103 = vmatprep.mubr.f32.mxu0 %v900
      %1104 = vmatmul.mubr.f32.gmra.mrb[0].mxu0 %v899
      %v1105 = vpop.f32.mrb[0].mxu0
      %v1106 = vadd.f32 %v984, %v1105
      %v1107 = vpop.f32.mrb[0].mxu0
      %v1108 = vadd.f32 %v988, %v1107
      %1109 = vmatprep.mubr.f32.mxu0 %v902
      %1110 = vmatmul.mubr.f32.gmra.mrb[0].mxu0 %v901
      %v1111 = vpop.f32.mrb[0].mxu0
      %v1112 = vadd.f32 %v984, %v1111
      %v1113 = vpop.f32.mrb[0].mxu0
      %v1114 = vadd.f32 %v988, %v1113
      %1115 = vmatprep.mubr.f32.mxu0 %v904
      %1116 = vmatmul.mubr.f32.gmra.mrb[0].mxu0 %v903
      %v1117 = vpop.f32.mrb[0].mxu0
      %v1118 = vadd.f32 %v984, %v1117
      %v1119 = vpop.f32.mrb[0].mxu0
      %v1120 = vadd.f32 %v988, %v1119
      %1121 = vmatprep.mubr.f32.mxu0 %v906
      %1122 = vmatmul.mubr.f32.gmra.mrb[0].mxu0 %v905
      %v1123 = vpop.f32.mrb[0].mxu0
      %v1124 = vadd.f32 %v984, %v1123
      %v1125 = vpop.f32.mrb[0].mxu0
      %v1126 = vadd.f32 %v988, %v1125
      %1127 = vmatprep.mubr.f32.mxu0 %v908
      %1128 = vmatmul.mubr.f32.gmra.mrb[0].mxu0 %v907
      %v1129 = vpop.f32.mrb[0].mxu0
      %v1130 = vadd.f32 %v984, %v1129
      %v1131 = vpop.f32.mrb[0].mxu0
      %v1132 = vadd.f32 %v988, %v1131
      %1133 = vmatprep.mubr.f32.mxu0 %v910
      %1134 = vmatmul.mubr.f32.gmra.mrb[0].mxu0 %v909
      %v1135 = vpop.f32.mrb[0].mxu0
      %v1136 = vadd.f32 %v984, %v1135
      %v1137 = vpop.f32.mrb[0].mxu0
      %v1138 = vadd.f32 %v988, %v1137
      %1139 = vmatprep.mubr.f32.mxu0 %v912
      %1140 = vmatmul.mubr.f32.gmra.mrb[0].mxu0 %v911
      %v1141 = vpop.f32.mrb[0].mxu0
      %v1142 = vadd.f32 %v984, %v1141
      %v1143 = vpop.f32.mrb[0].mxu0
      %v1144 = vadd.f32 %v988, %v1143
      %1145 = vmatprep.mubr.f32.mxu0 %v914
      %1146 = vmatmul.mubr.f32.gmra.mrb[0].mxu0 %v913
      %v1147 = vpop.f32.mrb[0].mxu0
      %v1148 = vadd.f32 %v984, %v1147
      %v1149 = vpop.f32.mrb[0].mxu0
      %v1150 = vadd.f32 %v988, %v1149
      %1151 = vdwg.mxu0
      %v1152 = vand.u32 2147483647, %v1058
      %v1153 = vand.u32 2147483647, %v1064
      %v1154 = vand.u32 2147483647, %v1070
      %v1155 = vand.u32 2147483647, %v1076
      %v1156 = vand.u32 2147483647, %v1082
      %v1157 = vand.u32 2147483647, %v1088
      %v1158 = vand.u32 2147483647, %v1094
      %v1159 = vand.u32 2147483647, %v1100
      %v1160 = vand.u32 2147483647, %v1106
      %v1161 = vand.u32 2147483647, %v1112
      %v1162 = vand.u32 2147483647, %v1118
      %v1163 = vand.u32 2147483647, %v1124
      %v1164 = vand.u32 2147483647, %v1130
      %v1165 = vand.u32 2147483647, %v1136
      %v1166 = vand.u32 2147483647, %v1142
      %v1167 = vand.u32 2147483647, %v1148
      %v1168 = vld [vmem:[%s463] sm:$0xff]
      %v1169 = vld [vmem:[%s463 + $0x8] sm:$0xff]
      %v1170 = vld [vmem:[%s463 + $0x10] sm:$0xff]
      %v1171 = vld [vmem:[%s463 + $0x18] sm:$0xff]
      %v1172 = vld [vmem:[%s463 + $0x20] sm:$0xff]
      %v1173 = vld [vmem:[%s463 + $0x28] sm:$0xff]
      %v1174 = vld [vmem:[%s463 + $0x30] sm:$0xff]
      %v1175 = vld [vmem:[%s463 + $0x38] sm:$0xff]
      %v1176 = vld [vmem:[%s463 + $0x40] sm:$0xff]
      %v1177 = vld [vmem:[%s463 + $0x48] sm:$0xff]
      %v1178 = vld [vmem:[%s463 + $0x50] sm:$0xff]
      %v1179 = vld [vmem:[%s463 + $0x58] sm:$0xff]
      %v1180 = vld [vmem:[%s463 + $0x60] sm:$0xff]
      %v1181 = vld [vmem:[%s463 + $0x68] sm:$0xff]
      %v1182 = vld [vmem:[%s463 + $0x70] sm:$0xff]
      %v1183 = vld [vmem:[%s463 + $0x78] sm:$0xff]
      %v1184 = vld [vmem:[%s8] sm:$0xff]
      %v1185 = vld [vmem:[%s8 + $0x8] sm:$0xff]
      %v1186 = vld [vmem:[%s8 + $0x10] sm:$0xff]
      %v1187 = vld [vmem:[%s8 + $0x18] sm:$0xff]
      %v1188 = vld [vmem:[%s8 + $0x20] sm:$0xff]
      %v1189 = vld [vmem:[%s8 + $0x28] sm:$0xff]
      %v1190 = vld [vmem:[%s8 + $0x30] sm:$0xff]
      %v1191 = vld [vmem:[%s8 + $0x38] sm:$0xff]
      %v1192 = vld [vmem:[%s9] sm:$0x1]
      %v1194 = vlaneseq
      %v1195 = vshrl.u32 %v1194, 7
      %v1196 = vsub.s32 0, %v1195
      %v1197 = vrot.slane %v1192, %v1196
      %vm1199 = vcmask 523264
      %v1201 = vsel %vm1199, %v1168, 0
      %v1204 = vsel %vm1199, %v1169, 0
      %v1207 = vsel %vm1199, %v1170, 0
      %v1210 = vsel %vm1199, %v1171, 0
      %v1213 = vsel %vm1199, %v1172, 0
      %v1216 = vsel %vm1199, %v1173, 0
      %v1219 = vsel %vm1199, %v1174, 0
      %v1222 = vsel %vm1199, %v1175, 0
      %v1225 = vsel %vm1199, %v1176, 0
      %v1228 = vsel %vm1199, %v1177, 0
      %v1231 = vsel %vm1199, %v1178, 0
      %v1234 = vsel %vm1199, %v1179, 0
      %v1237 = vsel %vm1199, %v1180, 0
      %v1240 = vsel %vm1199, %v1181, 0
      %v1243 = vsel %vm1199, %v1182, 0
      %v1246 = vsel %vm1199, %v1183, 0
      %1248 = vmatprep.subr.mxu0 0.0
      %1249 = vmatpush1.msra.mxu0 %v1184
      %1250 = vmatprep.subr.mxu0 0.0
      %1251 = vmatpush1.msra.mxu0 %v1185
      %1252 = vmatprep.subr.mxu0 0.0
      %1253 = vmatpush1.msra.mxu0 %v1186
      %1254 = vmatprep.subr.mxu0 0.0
      %1255 = vmatpush1.msra.mxu0 %v1187
      %1256 = vmatprep.subr.mxu0 0.0
      %1257 = vmatpush1.msra.mxu0 %v1188
      %1258 = vmatprep.subr.mxu0 0.0
      %1259 = vmatpush1.msra.mxu0 %v1189
      %1260 = vmatprep.subr.mxu0 0.0
      %1261 = vmatpush1.msra.mxu0 %v1190
      %1262 = vmatprep.subr.mxu0 0.0
      %1263 = vmatpush1.msra.mxu0 %v1191
      %1264 = vmatprep.subr.mxu0 0.0
      %1265 = vmatpush1.msra.mxu0 0.0
      %1266 = vmatprep.subr.mxu0 0.0
      %1267 = vmatpush1.msra.mxu0 0.0
      %1268 = vmatprep.subr.mxu0 0.0
      %1269 = vmatpush1.msra.mxu0 0.0
      %1270 = vmatprep.subr.mxu0 0.0
      %1271 = vmatpush1.msra.mxu0 0.0
      %1272 = vmatprep.subr.mxu0 0.0
      %1273 = vmatpush1.msra.mxu0 0.0
      %1274 = vmatprep.subr.mxu0 0.0
      %1275 = vmatpush1.msra.mxu0 0.0
      %1276 = vmatprep.subr.mxu0 0.0
      %1277 = vmatpush1.msra.mxu0 0.0
      %1278 = vmatprep.subr.mxu0 0.0
      %1279 = vmatpush1.msra.mxu0 0.0
      %1280 = vmatprep.subr.mxu0 0.0
      %1281 = vmatpush1.msra.mxu0 0.0
      %1282 = vmatprep.subr.mxu0 0.0
      %1283 = vmatpush1.msra.mxu0 0.0
      %1284 = vmatprep.subr.mxu0 0.0
      %1285 = vmatpush1.msra.mxu0 0.0
      %1286 = vmatprep.subr.mxu0 0.0
      %1287 = vmatpush1.msra.mxu0 0.0
      %1288 = vmatprep.subr.mxu0 0.0
      %1289 = vmatpush1.msra.mxu0 0.0
      %1290 = vmatprep.subr.mxu0 0.0
      %1291 = vmatpush1.msra.mxu0 0.0
      %1292 = vmatprep.subr.mxu0 0.0
      %1293 = vmatpush1.msra.mxu0 0.0
      %1294 = vmatprep.subr.mxu0 0.0
      %1295 = vmatpush1.msra.mxu0 0.0
      %1296 = vmatprep.subr.mxu0 0.0
      %1297 = vmatpush1.msra.mxu0 0.0
      %1298 = vmatprep.subr.mxu0 0.0
      %1299 = vmatpush1.msra.mxu0 0.0
      %1300 = vmatprep.subr.mxu0 0.0
      %1301 = vmatpush1.msra.mxu0 0.0
      %1302 = vmatprep.subr.mxu0 0.0
      %1303 = vmatpush1.msra.mxu0 0.0
      %1304 = vmatprep.subr.mxu0 0.0
      %1305 = vmatpush1.msra.mxu0 0.0
      %1306 = vmatprep.subr.mxu0 0.0
      %1307 = vmatpush1.msra.mxu0 0.0
      %1308 = vmatprep.subr.mxu0 0.0
      %1309 = vmatpush1.msra.mxu0 0.0
      %1310 = vmatprep.subr.mxu0 0.0
      %1311 = vmatpush1.msra.mxu0 0.0
      %1312 = vmatprep.mubr.f32.mxu0 0.0
      %1313 = vmatmul.mubr.f32.gmra.mrb[0].mxu0 %v1201
      %v1314 = vpop.f32.mrb[0].mxu0
      %v1315 = vadd.f32 %v1197, %v1314
      %v1316 = vpop.f32.mrb[0].mxu0
      %1317 = vmatprep.mubr.f32.mxu0 0.0
      %1318 = vmatmul.mubr.f32.gmra.mrb[0].mxu0 %v1204
      %v1319 = vpop.f32.mrb[0].mxu0
      %v1320 = vadd.f32 %v1197, %v1319
      %v1321 = vpop.f32.mrb[0].mxu0
      %1322 = vmatprep.mubr.f32.mxu0 0.0
      %1323 = vmatmul.mubr.f32.gmra.mrb[0].mxu0 %v1207
      %v1324 = vpop.f32.mrb[0].mxu0
      %v1325 = vadd.f32 %v1197, %v1324
      %v1326 = vpop.f32.mrb[0].mxu0
      %1327 = vmatprep.mubr.f32.mxu0 0.0
      %1328 = vmatmul.mubr.f32.gmra.mrb[0].mxu0 %v1210
      %v1329 = vpop.f32.mrb[0].mxu0
      %v1330 = vadd.f32 %v1197, %v1329
      %v1331 = vpop.f32.mrb[0].mxu0
      %1332 = vmatprep.mubr.f32.mxu0 0.0
      %1333 = vmatmul.mubr.f32.gmra.mrb[0].mxu0 %v1213
      %v1334 = vpop.f32.mrb[0].mxu0
      %v1335 = vadd.f32 %v1197, %v1334
      %v1336 = vpop.f32.mrb[0].mxu0
      %1337 = vmatprep.mubr.f32.mxu0 0.0
      %1338 = vmatmul.mubr.f32.gmra.mrb[0].mxu0 %v1216
      %v1339 = vpop.f32.mrb[0].mxu0
      %v1340 = vadd.f32 %v1197, %v1339
      %v1341 = vpop.f32.mrb[0].mxu0
      %1342 = vmatprep.mubr.f32.mxu0 0.0
      %1343 = vmatmul.mubr.f32.gmra.mrb[0].mxu0 %v1219
      %v1344 = vpop.f32.mrb[0].mxu0
      %v1345 = vadd.f32 %v1197, %v1344
      %v1346 = vpop.f32.mrb[0].mxu0
      %1347 = vmatprep.mubr.f32.mxu0 0.0
      %1348 = vmatmul.mubr.f32.gmra.mrb[0].mxu0 %v1222
      %v1349 = vpop.f32.mrb[0].mxu0
      %v1350 = vadd.f32 %v1197, %v1349
      %v1351 = vpop.f32.mrb[0].mxu0
      %1352 = vmatprep.mubr.f32.mxu0 0.0
      %1353 = vmatmul.mubr.f32.gmra.mrb[0].mxu0 %v1225
      %v1354 = vpop.f32.mrb[0].mxu0
      %v1355 = vadd.f32 %v1197, %v1354
      %v1356 = vpop.f32.mrb[0].mxu0
      %1357 = vmatprep.mubr.f32.mxu0 0.0
      %1358 = vmatmul.mubr.f32.gmra.mrb[0].mxu0 %v1228
      %v1359 = vpop.f32.mrb[0].mxu0
      %v1360 = vadd.f32 %v1197, %v1359
      %v1361 = vpop.f32.mrb[0].mxu0
      %1362 = vmatprep.mubr.f32.mxu0 0.0
      %1363 = vmatmul.mubr.f32.gmra.mrb[0].mxu0 %v1231
      %v1364 = vpop.f32.mrb[0].mxu0
      %v1365 = vadd.f32 %v1197, %v1364
      %v1366 = vpop.f32.mrb[0].mxu0
      %1367 = vmatprep.mubr.f32.mxu0 0.0
      %1368 = vmatmul.mubr.f32.gmra.mrb[0].mxu0 %v1234
      %v1369 = vpop.f32.mrb[0].mxu0
      %v1370 = vadd.f32 %v1197, %v1369
      %v1371 = vpop.f32.mrb[0].mxu0
      %1372 = vmatprep.mubr.f32.mxu0 0.0
      %1373 = vmatmul.mubr.f32.gmra.mrb[0].mxu0 %v1237
      %v1374 = vpop.f32.mrb[0].mxu0
      %v1375 = vadd.f32 %v1197, %v1374
      %v1376 = vpop.f32.mrb[0].mxu0
      %1377 = vmatprep.mubr.f32.mxu0 0.0
      %1378 = vmatmul.mubr.f32.gmra.mrb[0].mxu0 %v1240
      %v1379 = vpop.f32.mrb[0].mxu0
      %v1380 = vadd.f32 %v1197, %v1379
      %v1381 = vpop.f32.mrb[0].mxu0
      %1382 = vmatprep.mubr.f32.mxu0 0.0
      %1383 = vmatmul.mubr.f32.gmra.mrb[0].mxu0 %v1243
      %v1384 = vpop.f32.mrb[0].mxu0
      %v1385 = vadd.f32 %v1197, %v1384
      %v1386 = vpop.f32.mrb[0].mxu0
      %1387 = vmatprep.mubr.f32.mxu0 0.0
      %1388 = vmatmul.mubr.f32.gmra.mrb[0].mxu0 %v1246
      %v1389 = vpop.f32.mrb[0].mxu0
      %v1390 = vadd.f32 %v1197, %v1389
      %v1391 = vpop.f32.mrb[0].mxu0
      %1392 = vdwg.mxu0
      %v1393 = vmax.f32 %v1315, 0.0
      %v1394 = vmax.f32 %v1320, 0.0
      %v1395 = vmax.f32 %v1325, 0.0
      %v1396 = vmax.f32 %v1330, 0.0
      %v1397 = vmax.f32 %v1335, 0.0
      %v1398 = vmax.f32 %v1340, 0.0
      %v1399 = vmax.f32 %v1345, 0.0
      %v1400 = vmax.f32 %v1350, 0.0
      %v1401 = vmax.f32 %v1355, 0.0
      %v1402 = vmax.f32 %v1360, 0.0
      %v1403 = vmax.f32 %v1365, 0.0
      %v1404 = vmax.f32 %v1370, 0.0
      %v1405 = vmax.f32 %v1375, 0.0
      %v1406 = vmax.f32 %v1380, 0.0
      %v1407 = vmax.f32 %v1385, 0.0
      %v1408 = vmax.f32 %v1390, 0.0
      %v1409 = vld [vmem:[%s10] sm:$0xff]
      %v1410 = vld [vmem:[%s10 + $0x8] sm:$0xff]
      %v1411 = vld [vmem:[%s10 + $0x10] sm:$0xff]
      %v1412 = vld [vmem:[%s10 + $0x18] sm:$0xff]
      %v1413 = vld [vmem:[%s10 + $0x20] sm:$0xff]
      %v1414 = vld [vmem:[%s10 + $0x28] sm:$0xff]
      %v1415 = vld [vmem:[%s10 + $0x30] sm:$0xff]
      %v1416 = vld [vmem:[%s10 + $0x38] sm:$0xff]
      %v1417 = vld [vmem:[%s10 + $0x40] sm:$0xff]
      %v1418 = vld [vmem:[%s10 + $0x48] sm:$0xff]
      %v1419 = vld [vmem:[%s10 + $0x50] sm:$0xff]
      %v1420 = vld [vmem:[%s10 + $0x58] sm:$0xff]
      %v1421 = vld [vmem:[%s10 + $0x60] sm:$0xff]
      %v1422 = vld [vmem:[%s10 + $0x68] sm:$0xff]
      %v1423 = vld [vmem:[%s10 + $0x70] sm:$0xff]
      %v1424 = vld [vmem:[%s10 + $0x78] sm:$0xff]
      %v1425 = vld [vmem:[%s11] sm:$0x1]
      %v1427 = vlaneseq
      %v1428 = vshrl.u32 %v1427, 7
      %v1429 = vsub.s32 0, %v1428
      %v1430 = vrot.slane %v1425, %v1429
      %1432 = vmatprep.subr.mxu0 0.0
      %1433 = vmatpush1.msra.mxu0 %v1409
      %1434 = vmatprep.subr.mxu0 0.0
      %1435 = vmatpush1.msra.mxu0 %v1410
      %1436 = vmatprep.subr.mxu0 0.0
      %1437 = vmatpush1.msra.mxu0 %v1411
      %1438 = vmatprep.subr.mxu0 0.0
      %1439 = vmatpush1.msra.mxu0 %v1412
      %1440 = vmatprep.subr.mxu0 0.0
      %1441 = vmatpush1.msra.mxu0 %v1413
      %1442 = vmatprep.subr.mxu0 0.0
      %1443 = vmatpush1.msra.mxu0 %v1414
      %1444 = vmatprep.subr.mxu0 0.0
      %1445 = vmatpush1.msra.mxu0 %v1415
      %1446 = vmatprep.subr.mxu0 0.0
      %1447 = vmatpush1.msra.mxu0 %v1416
      %1448 = vmatprep.subr.mxu0 0.0
      %1449 = vmatpush1.msra.mxu0 %v1417
      %1450 = vmatprep.subr.mxu0 0.0
      %1451 = vmatpush1.msra.mxu0 %v1418
      %1452 = vmatprep.subr.mxu0 0.0
      %1453 = vmatpush1.msra.mxu0 %v1419
      %1454 = vmatprep.subr.mxu0 0.0
      %1455 = vmatpush1.msra.mxu0 %v1420
      %1456 = vmatprep.subr.mxu0 0.0
      %1457 = vmatpush1.msra.mxu0 %v1421
      %1458 = vmatprep.subr.mxu0 0.0
      %1459 = vmatpush1.msra.mxu0 %v1422
      %1460 = vmatprep.subr.mxu0 0.0
      %1461 = vmatpush1.msra.mxu0 %v1423
      %1462 = vmatprep.subr.mxu0 0.0
      %1463 = vmatpush1.msra.mxu0 %v1424
      %1464 = vmatprep.subr.mxu0 0.0
      %1465 = vmatpush1.msra.mxu0 0.0
      %1466 = vmatprep.subr.mxu0 0.0
      %1467 = vmatpush1.msra.mxu0 0.0
      %1468 = vmatprep.subr.mxu0 0.0
      %1469 = vmatpush1.msra.mxu0 0.0
      %1470 = vmatprep.subr.mxu0 0.0
      %1471 = vmatpush1.msra.mxu0 0.0
      %1472 = vmatprep.subr.mxu0 0.0
      %1473 = vmatpush1.msra.mxu0 0.0
      %1474 = vmatprep.subr.mxu0 0.0
      %1475 = vmatpush1.msra.mxu0 0.0
      %1476 = vmatprep.subr.mxu0 0.0
      %1477 = vmatpush1.msra.mxu0 0.0
      %1478 = vmatprep.subr.mxu0 0.0
      %1479 = vmatpush1.msra.mxu0 0.0
      %1480 = vmatprep.subr.mxu0 0.0
      %1481 = vmatpush1.msra.mxu0 0.0
      %1482 = vmatprep.subr.mxu0 0.0
      %1483 = vmatpush1.msra.mxu0 0.0
      %1484 = vmatprep.subr.mxu0 0.0
      %1485 = vmatpush1.msra.mxu0 0.0
      %1486 = vmatprep.subr.mxu0 0.0
      %1487 = vmatpush1.msra.mxu0 0.0
      %1488 = vmatprep.subr.mxu0 0.0
      %1489 = vmatpush1.msra.mxu0 0.0
      %1490 = vmatprep.subr.mxu0 0.0
      %1491 = vmatpush1.msra.mxu0 0.0
      %1492 = vmatprep.subr.mxu0 0.0
      %1493 = vmatpush1.msra.mxu0 0.0
      %1494 = vmatprep.subr.mxu0 0.0
      %1495 = vmatpush1.msra.mxu0 0.0
      %1496 = vmatprep.mubr.f32.mxu0 0.0
      %1497 = vmatmul.mubr.f32.gmra.mrb[0].mxu0 %v1393
      %v1498 = vpop.f32.mrb[0].mxu0
      %v1499 = vadd.f32 %v1430, %v1498
      %v1500 = vpop.f32.mrb[0].mxu0
      %1501 = vmatprep.mubr.f32.mxu0 0.0
      %1502 = vmatmul.mubr.f32.gmra.mrb[0].mxu0 %v1394
      %v1503 = vpop.f32.mrb[0].mxu0
      %v1504 = vadd.f32 %v1430, %v1503
      %v1505 = vpop.f32.mrb[0].mxu0
      %1506 = vmatprep.mubr.f32.mxu0 0.0
      %1507 = vmatmul.mubr.f32.gmra.mrb[0].mxu0 %v1395
      %v1508 = vpop.f32.mrb[0].mxu0
      %v1509 = vadd.f32 %v1430, %v1508
      %v1510 = vpop.f32.mrb[0].mxu0
      %1511 = vmatprep.mubr.f32.mxu0 0.0
      %1512 = vmatmul.mubr.f32.gmra.mrb[0].mxu0 %v1396
      %v1513 = vpop.f32.mrb[0].mxu0
      %v1514 = vadd.f32 %v1430, %v1513
      %v1515 = vpop.f32.mrb[0].mxu0
      %1516 = vmatprep.mubr.f32.mxu0 0.0
      %1517 = vmatmul.mubr.f32.gmra.mrb[0].mxu0 %v1397
      %v1518 = vpop.f32.mrb[0].mxu0
      %v1519 = vadd.f32 %v1430, %v1518
      %v1520 = vpop.f32.mrb[0].mxu0
      %1521 = vmatprep.mubr.f32.mxu0 0.0
      %1522 = vmatmul.mubr.f32.gmra.mrb[0].mxu0 %v1398
      %v1523 = vpop.f32.mrb[0].mxu0
      %v1524 = vadd.f32 %v1430, %v1523
      %v1525 = vpop.f32.mrb[0].mxu0
      %1526 = vmatprep.mubr.f32.mxu0 0.0
      %1527 = vmatmul.mubr.f32.gmra.mrb[0].mxu0 %v1399
      %v1528 = vpop.f32.mrb[0].mxu0
      %v1529 = vadd.f32 %v1430, %v1528
      %v1530 = vpop.f32.mrb[0].mxu0
      %1531 = vmatprep.mubr.f32.mxu0 0.0
      %1532 = vmatmul.mubr.f32.gmra.mrb[0].mxu0 %v1400
      %v1533 = vpop.f32.mrb[0].mxu0
      %v1534 = vadd.f32 %v1430, %v1533
      %v1535 = vpop.f32.mrb[0].mxu0
      %1536 = vmatprep.mubr.f32.mxu0 0.0
      %1537 = vmatmul.mubr.f32.gmra.mrb[0].mxu0 %v1401
      %v1538 = vpop.f32.mrb[0].mxu0
      %v1539 = vadd.f32 %v1430, %v1538
      %v1540 = vpop.f32.mrb[0].mxu0
      %1541 = vmatprep.mubr.f32.mxu0 0.0
      %1542 = vmatmul.mubr.f32.gmra.mrb[0].mxu0 %v1402
      %v1543 = vpop.f32.mrb[0].mxu0
      %v1544 = vadd.f32 %v1430, %v1543
      %v1545 = vpop.f32.mrb[0].mxu0
      %1546 = vmatprep.mubr.f32.mxu0 0.0
      %1547 = vmatmul.mubr.f32.gmra.mrb[0].mxu0 %v1403
      %v1548 = vpop.f32.mrb[0].mxu0
      %v1549 = vadd.f32 %v1430, %v1548
      %v1550 = vpop.f32.mrb[0].mxu0
      %1551 = vmatprep.mubr.f32.mxu0 0.0
      %1552 = vmatmul.mubr.f32.gmra.mrb[0].mxu0 %v1404
      %v1553 = vpop.f32.mrb[0].mxu0
      %v1554 = vadd.f32 %v1430, %v1553
      %v1555 = vpop.f32.mrb[0].mxu0
      %1556 = vmatprep.mubr.f32.mxu0 0.0
      %1557 = vmatmul.mubr.f32.gmra.mrb[0].mxu0 %v1405
      %v1558 = vpop.f32.mrb[0].mxu0
      %v1559 = vadd.f32 %v1430, %v1558
      %v1560 = vpop.f32.mrb[0].mxu0
      %1561 = vmatprep.mubr.f32.mxu0 0.0
      %1562 = vmatmul.mubr.f32.gmra.mrb[0].mxu0 %v1406
      %v1563 = vpop.f32.mrb[0].mxu0
      %v1564 = vadd.f32 %v1430, %v1563
      %v1565 = vpop.f32.mrb[0].mxu0
      %1566 = vmatprep.mubr.f32.mxu0 0.0
      %1567 = vmatmul.mubr.f32.gmra.mrb[0].mxu0 %v1407
      %v1568 = vpop.f32.mrb[0].mxu0
      %v1569 = vadd.f32 %v1430, %v1568
      %v1570 = vpop.f32.mrb[0].mxu0
      %1571 = vmatprep.mubr.f32.mxu0 0.0
      %1572 = vmatmul.mubr.f32.gmra.mrb[0].mxu0 %v1408
      %v1573 = vpop.f32.mrb[0].mxu0
      %v1574 = vadd.f32 %v1430, %v1573
      %v1575 = vpop.f32.mrb[0].mxu0
      %1576 = vdwg.mxu0
      %v1577 = vld [vmem:[%s469] sm:$0xff]
      %v1578 = vld [vmem:[%s469 + $0x8] sm:$0xff]
      %v1579 = vld [vmem:[%s469 + $0x10] sm:$0xff]
      %v1580 = vld [vmem:[%s469 + $0x18] sm:$0xff]
      %v1581 = vld [vmem:[%s469 + $0x20] sm:$0xff]
      %v1582 = vld [vmem:[%s469 + $0x28] sm:$0xff]
      %v1583 = vld [vmem:[%s469 + $0x30] sm:$0xff]
      %v1584 = vld [vmem:[%s469 + $0x38] sm:$0xff]
      %v1585 = vld [vmem:[%s469 + $0x40] sm:$0xff]
      %v1586 = vld [vmem:[%s469 + $0x48] sm:$0xff]
      %v1587 = vld [vmem:[%s469 + $0x50] sm:$0xff]
      %v1588 = vld [vmem:[%s469 + $0x58] sm:$0xff]
      %v1589 = vld [vmem:[%s469 + $0x60] sm:$0xff]
      %v1590 = vld [vmem:[%s469 + $0x68] sm:$0xff]
      %v1591 = vld [vmem:[%s469 + $0x70] sm:$0xff]
      %v1592 = vld [vmem:[%s469 + $0x78] sm:$0xff]
      %v1593 = vld [vmem:[%s475] sm:$0xff]
      %v1594 = vld [vmem:[%s475 + $0x8] sm:$0xff]
      %v1595 = vld [vmem:[%s475 + $0x10] sm:$0xff]
      %v1596 = vld [vmem:[%s475 + $0x18] sm:$0xff]
      %v1597 = vld [vmem:[%s475 + $0x20] sm:$0xff]
      %v1598 = vld [vmem:[%s475 + $0x28] sm:$0xff]
      %v1599 = vld [vmem:[%s475 + $0x30] sm:$0xff]
      %v1600 = vld [vmem:[%s475 + $0x38] sm:$0xff]
      %v1601 = vld [vmem:[%s475 + $0x40] sm:$0xff]
      %v1602 = vld [vmem:[%s475 + $0x48] sm:$0xff]
      %v1603 = vld [vmem:[%s475 + $0x50] sm:$0xff]
      %v1604 = vld [vmem:[%s475 + $0x58] sm:$0xff]
      %v1605 = vld [vmem:[%s475 + $0x60] sm:$0xff]
      %v1606 = vld [vmem:[%s475 + $0x68] sm:$0xff]
      %v1607 = vld [vmem:[%s475 + $0x70] sm:$0xff]
      %v1608 = vld [vmem:[%s475 + $0x78] sm:$0xff]
      %1625 = vrot.lane.b32.xlu0 %v1152, 32
      %v1626 = vpop.permute.xlu0 %1625
      %1627 = vrot.lane.b32.xlu0 %v1153, 32
      %v1628 = vpop.permute.xlu0 %1627
      %1629 = vrot.lane.b32.xlu0 %v1154, 32
      %v1630 = vpop.permute.xlu0 %1629
      %1631 = vrot.lane.b32.xlu0 %v1155, 32
      %v1632 = vpop.permute.xlu0 %1631
      %1633 = vrot.lane.b32.xlu0 %v1156, 32
      %v1634 = vpop.permute.xlu0 %1633
      %1635 = vrot.lane.b32.xlu0 %v1157, 32
      %v1636 = vpop.permute.xlu0 %1635
      %1637 = vrot.lane.b32.xlu0 %v1158, 32
      %v1638 = vpop.permute.xlu0 %1637
      %1639 = vrot.lane.b32.xlu0 %v1159, 32
      %v1640 = vpop.permute.xlu0 %1639
      %1641 = vrot.lane.b32.xlu0 %v1160, 32
      %v1642 = vpop.permute.xlu0 %1641
      %1643 = vrot.lane.b32.xlu0 %v1161, 32
      %v1644 = vpop.permute.xlu0 %1643
      %1645 = vrot.lane.b32.xlu0 %v1162, 32
      %v1646 = vpop.permute.xlu0 %1645
      %1647 = vrot.lane.b32.xlu0 %v1163, 32
      %v1648 = vpop.permute.xlu0 %1647
      %1649 = vrot.lane.b32.xlu0 %v1164, 32
      %v1650 = vpop.permute.xlu0 %1649
      %1651 = vrot.lane.b32.xlu0 %v1165, 32
      %v1652 = vpop.permute.xlu0 %1651
      %1653 = vrot.lane.b32.xlu0 %v1166, 32
      %v1654 = vpop.permute.xlu0 %1653
      %1655 = vrot.lane.b32.xlu0 %v1167, 32
      %v1656 = vpop.permute.xlu0 %1655
      %v1673 = vmul.f32 %v1060, %v1626
      %v1674 = vmul.f32 %v1066, %v1628
      %v1675 = vmul.f32 %v1072, %v1630
      %v1676 = vmul.f32 %v1078, %v1632
      %v1677 = vmul.f32 %v1084, %v1634
      %v1678 = vmul.f32 %v1090, %v1636
      %v1679 = vmul.f32 %v1096, %v1638
      %v1680 = vmul.f32 %v1102, %v1640
      %v1681 = vmul.f32 %v1108, %v1642
      %v1682 = vmul.f32 %v1114, %v1644
      %v1683 = vmul.f32 %v1120, %v1646
      %v1684 = vmul.f32 %v1126, %v1648
      %v1685 = vmul.f32 %v1132, %v1650
      %v1686 = vmul.f32 %v1138, %v1652
      %v1687 = vmul.f32 %v1144, %v1654
      %v1688 = vmul.f32 %v1150, %v1656
      %v1689 = vsel %vm528, %v1673, 0.0
      %1690 = vadd.xlane.f32.xlu0 %v1689
      %v1691 = vpop.xlane.xlu0 %1690
      %v1692 = vsel %vm528, %v1674, 0.0
      %1693 = vadd.xlane.f32.xlu0 %v1692
      %v1694 = vpop.xlane.xlu0 %1693
      %v1695 = vsel %vm528, %v1675, 0.0
      %1696 = vadd.xlane.f32.xlu0 %v1695
      %v1697 = vpop.xlane.xlu0 %1696
      %v1698 = vsel %vm528, %v1676, 0.0
      %1699 = vadd.xlane.f32.xlu0 %v1698
      %v1700 = vpop.xlane.xlu0 %1699
      %v1701 = vsel %vm528, %v1677, 0.0
      %1702 = vadd.xlane.f32.xlu0 %v1701
      %v1703 = vpop.xlane.xlu0 %1702
      %v1704 = vsel %vm528, %v1678, 0.0
      %1705 = vadd.xlane.f32.xlu0 %v1704
      %v1706 = vpop.xlane.xlu0 %1705
      %v1707 = vsel %vm528, %v1679, 0.0
      %1708 = vadd.xlane.f32.xlu0 %v1707
      %v1709 = vpop.xlane.xlu0 %1708
      %v1710 = vsel %vm528, %v1680, 0.0
      %1711 = vadd.xlane.f32.xlu0 %v1710
      %v1712 = vpop.xlane.xlu0 %1711
      %v1713 = vsel %vm528, %v1681, 0.0
      %1714 = vadd.xlane.f32.xlu0 %v1713
      %v1715 = vpop.xlane.xlu0 %1714
      %v1716 = vsel %vm528, %v1682, 0.0
      %1717 = vadd.xlane.f32.xlu0 %v1716
      %v1718 = vpop.xlane.xlu0 %1717
      %v1719 = vsel %vm528, %v1683, 0.0
      %1720 = vadd.xlane.f32.xlu0 %v1719
      %v1721 = vpop.xlane.xlu0 %1720
      %v1722 = vsel %vm528, %v1684, 0.0
      %1723 = vadd.xlane.f32.xlu0 %v1722
      %v1724 = vpop.xlane.xlu0 %1723
      %v1725 = vsel %vm528, %v1685, 0.0
      %1726 = vadd.xlane.f32.xlu0 %v1725
      %v1727 = vpop.xlane.xlu0 %1726
      %v1728 = vsel %vm528, %v1686, 0.0
      %1729 = vadd.xlane.f32.xlu0 %v1728
      %v1730 = vpop.xlane.xlu0 %1729
      %v1731 = vsel %vm528, %v1687, 0.0
      %1732 = vadd.xlane.f32.xlu0 %v1731
      %v1733 = vpop.xlane.xlu0 %1732
      %v1734 = vsel %vm528, %v1688, 0.0
      %1735 = vadd.xlane.f32.xlu0 %v1734
      %v1736 = vpop.xlane.xlu0 %1735
      %v1737 = vadd.f32 %v1691, %v1060
      %v1738 = vadd.f32 %v1694, %v1066
      %v1739 = vadd.f32 %v1697, %v1072
      %v1740 = vadd.f32 %v1700, %v1078
      %v1741 = vadd.f32 %v1703, %v1084
      %v1742 = vadd.f32 %v1706, %v1090
      %v1743 = vadd.f32 %v1709, %v1096
      %v1744 = vadd.f32 %v1712, %v1102
      %v1745 = vadd.f32 %v1715, %v1108
      %v1746 = vadd.f32 %v1718, %v1114
      %v1747 = vadd.f32 %v1721, %v1120
      %v1748 = vadd.f32 %v1724, %v1126
      %v1749 = vadd.f32 %v1727, %v1132
      %v1750 = vadd.f32 %v1730, %v1138
      %v1751 = vadd.f32 %v1733, %v1144
      %v1752 = vadd.f32 %v1736, %v1150
      %1754 = vset.pattern.permute.xlu0 0
      %1755 = vperm.xlu0 %1754, %v1577
      %v1756 = vpop.permute.xlu0 %1755
      %1759 = vset.pattern.permute.xlu0 0
      %1760 = vperm.xlu0 %1759, %v1578
      %v1761 = vpop.permute.xlu0 %1760
      %1764 = vset.pattern.permute.xlu0 0
      %1765 = vperm.xlu0 %1764, %v1579
      %v1766 = vpop.permute.xlu0 %1765
      %1769 = vset.pattern.permute.xlu0 0
      %1770 = vperm.xlu0 %1769, %v1580
      %v1771 = vpop.permute.xlu0 %1770
      %1774 = vset.pattern.permute.xlu0 0
      %1775 = vperm.xlu0 %1774, %v1581
      %v1776 = vpop.permute.xlu0 %1775
      %1779 = vset.pattern.permute.xlu0 0
      %1780 = vperm.xlu0 %1779, %v1582
      %v1781 = vpop.permute.xlu0 %1780
      %1784 = vset.pattern.permute.xlu0 0
      %1785 = vperm.xlu0 %1784, %v1583
      %v1786 = vpop.permute.xlu0 %1785
      %1789 = vset.pattern.permute.xlu0 0
      %1790 = vperm.xlu0 %1789, %v1584
      %v1791 = vpop.permute.xlu0 %1790
      %1794 = vset.pattern.permute.xlu0 0
      %1795 = vperm.xlu0 %1794, %v1585
      %v1796 = vpop.permute.xlu0 %1795
      %1799 = vset.pattern.permute.xlu0 0
      %1800 = vperm.xlu0 %1799, %v1586
      %v1801 = vpop.permute.xlu0 %1800
      %1804 = vset.pattern.permute.xlu0 0
      %1805 = vperm.xlu0 %1804, %v1587
      %v1806 = vpop.permute.xlu0 %1805
      %1809 = vset.pattern.permute.xlu0 0
      %1810 = vperm.xlu0 %1809, %v1588
      %v1811 = vpop.permute.xlu0 %1810
      %1814 = vset.pattern.permute.xlu0 0
      %1815 = vperm.xlu0 %1814, %v1589
      %v1816 = vpop.permute.xlu0 %1815
      %1819 = vset.pattern.permute.xlu0 0
      %1820 = vperm.xlu0 %1819, %v1590
      %v1821 = vpop.permute.xlu0 %1820
      %1824 = vset.pattern.permute.xlu0 0
      %1825 = vperm.xlu0 %1824, %v1591
      %v1826 = vpop.permute.xlu0 %1825
      %1829 = vset.pattern.permute.xlu0 0
      %1830 = vperm.xlu0 %1829, %v1592
      %v1831 = vpop.permute.xlu0 %1830
      %v1833 = vmul.f32 %v1756, %v1152
      %v1834 = vmul.f32 %v1761, %v1153
      %v1835 = vmul.f32 %v1766, %v1154
      %v1836 = vmul.f32 %v1771, %v1155
      %v1837 = vmul.f32 %v1776, %v1156
      %v1838 = vmul.f32 %v1781, %v1157
      %v1839 = vmul.f32 %v1786, %v1158
      %v1840 = vmul.f32 %v1791, %v1159
      %v1841 = vmul.f32 %v1796, %v1160
      %v1842 = vmul.f32 %v1801, %v1161
      %v1843 = vmul.f32 %v1806, %v1162
      %v1844 = vmul.f32 %v1811, %v1163
      %v1845 = vmul.f32 %v1816, %v1164
      %v1846 = vmul.f32 %v1821, %v1165
      %v1847 = vmul.f32 %v1826, %v1166
      %v1848 = vmul.f32 %v1831, %v1167
      %v1849 = vadd.f32 %v1833, %v805
      %v1850 = vadd.f32 %v1834, %v810
      %v1851 = vadd.f32 %v1835, %v815
      %v1852 = vadd.f32 %v1836, %v820
      %v1853 = vadd.f32 %v1837, %v825
      %v1854 = vadd.f32 %v1838, %v830
      %v1855 = vadd.f32 %v1839, %v835
      %v1856 = vadd.f32 %v1840, %v840
      %v1857 = vadd.f32 %v1841, %v845
      %v1858 = vadd.f32 %v1842, %v850
      %v1859 = vadd.f32 %v1843, %v855
      %v1860 = vadd.f32 %v1844, %v860
      %v1861 = vadd.f32 %v1845, %v865
      %v1862 = vadd.f32 %v1846, %v870
      %v1863 = vadd.f32 %v1847, %v875
      %v1864 = vadd.f32 %v1848, %v880
      %vm1865 = vcmp.gt.f32.partialorder %v1849, 0.0
      %vm1866 = vcmp.gt.f32.partialorder %v1850, 0.0
      %vm1867 = vcmp.gt.f32.partialorder %v1851, 0.0
      %vm1868 = vcmp.gt.f32.partialorder %v1852, 0.0
      %vm1869 = vcmp.gt.f32.partialorder %v1853, 0.0
      %vm1870 = vcmp.gt.f32.partialorder %v1854, 0.0
      %vm1871 = vcmp.gt.f32.partialorder %v1855, 0.0
      %vm1872 = vcmp.gt.f32.partialorder %v1856, 0.0
      %vm1873 = vcmp.gt.f32.partialorder %v1857, 0.0
      %vm1874 = vcmp.gt.f32.partialorder %v1858, 0.0
      %vm1875 = vcmp.gt.f32.partialorder %v1859, 0.0
      %vm1876 = vcmp.gt.f32.partialorder %v1860, 0.0
      %vm1877 = vcmp.gt.f32.partialorder %v1861, 0.0
      %vm1878 = vcmp.gt.f32.partialorder %v1862, 0.0
      %vm1879 = vcmp.gt.f32.partialorder %v1863, 0.0
      %vm1880 = vcmp.gt.f32.partialorder %v1864, 0.0
      %v1881 = vmin.f32 %v1849, 0.0
      %v1882 = vmin.f32 %v1850, 0.0
      %v1883 = vmin.f32 %v1851, 0.0
      %v1884 = vmin.f32 %v1852, 0.0
      %v1885 = vmin.f32 %v1853, 0.0
      %v1886 = vmin.f32 %v1854, 0.0
      %v1887 = vmin.f32 %v1855, 0.0
      %v1888 = vmin.f32 %v1856, 0.0
      %v1889 = vmin.f32 %v1857, 0.0
      %v1890 = vmin.f32 %v1858, 0.0
      %v1891 = vmin.f32 %v1859, 0.0
      %v1892 = vmin.f32 %v1860, 0.0
      %v1893 = vmin.f32 %v1861, 0.0
      %v1894 = vmin.f32 %v1862, 0.0
      %v1895 = vmin.f32 %v1863, 0.0
      %v1896 = vmin.f32 %v1864, 0.0
      %v1897 = vmul.f32 %v1881, 1.442695
      %v1898 = vpow.pop %v1897
      %v1899 = vmul.f32 %v1882, 1.442695
      %v1900 = vpow.pop %v1899
      %v1901 = vmul.f32 %v1883, 1.442695
      %v1902 = vpow.pop %v1901
      %v1903 = vmul.f32 %v1884, 1.442695
      %v1904 = vpow.pop %v1903
      %v1905 = vmul.f32 %v1885, 1.442695
      %v1906 = vpow.pop %v1905
      %v1907 = vmul.f32 %v1886, 1.442695
      %v1908 = vpow.pop %v1907
      %v1909 = vmul.f32 %v1887, 1.442695
      %v1910 = vpow.pop %v1909
      %v1911 = vmul.f32 %v1888, 1.442695
      %v1912 = vpow.pop %v1911
      %v1913 = vmul.f32 %v1889, 1.442695
      %v1914 = vpow.pop %v1913
      %v1915 = vmul.f32 %v1890, 1.442695
      %v1916 = vpow.pop %v1915
      %v1917 = vmul.f32 %v1891, 1.442695
      %v1918 = vpow.pop %v1917
      %v1919 = vmul.f32 %v1892, 1.442695
      %v1920 = vpow.pop %v1919
      %v1921 = vmul.f32 %v1893, 1.442695
      %v1922 = vpow.pop %v1921
      %v1923 = vmul.f32 %v1894, 1.442695
      %v1924 = vpow.pop %v1923
      %v1925 = vmul.f32 %v1895, 1.442695
      %v1926 = vpow.pop %v1925
      %v1927 = vmul.f32 %v1896, 1.442695
      %v1928 = vpow.pop %v1927
      %v1929 = vsub.f32 %v1898, 1.0
      %v1930 = vsub.f32 %v1900, 1.0
      %v1931 = vsub.f32 %v1902, 1.0
      %v1932 = vsub.f32 %v1904, 1.0
      %v1933 = vsub.f32 %v1906, 1.0
      %v1934 = vsub.f32 %v1908, 1.0
      %v1935 = vsub.f32 %v1910, 1.0
      %v1936 = vsub.f32 %v1912, 1.0
      %v1937 = vsub.f32 %v1914, 1.0
      %v1938 = vsub.f32 %v1916, 1.0
      %v1939 = vsub.f32 %v1918, 1.0
      %v1940 = vsub.f32 %v1920, 1.0
      %v1941 = vsub.f32 %v1922, 1.0
      %v1942 = vsub.f32 %v1924, 1.0
      %v1943 = vsub.f32 %v1926, 1.0
      %v1944 = vsub.f32 %v1928, 1.0
      %v1945 = vsel %vm1865, %v1849, %v1929
      %v1946 = vsel %vm1866, %v1850, %v1930
      %v1947 = vsel %vm1867, %v1851, %v1931
      %v1948 = vsel %vm1868, %v1852, %v1932
      %v1949 = vsel %vm1869, %v1853, %v1933
      %v1950 = vsel %vm1870, %v1854, %v1934
      %v1951 = vsel %vm1871, %v1855, %v1935
      %v1952 = vsel %vm1872, %v1856, %v1936
      %v1953 = vsel %vm1873, %v1857, %v1937
      %v1954 = vsel %vm1874, %v1858, %v1938
      %v1955 = vsel %vm1875, %v1859, %v1939
      %v1956 = vsel %vm1876, %v1860, %v1940
      %v1957 = vsel %vm1877, %v1861, %v1941
      %v1958 = vsel %vm1878, %v1862, %v1942
      %v1959 = vsel %vm1879, %v1863, %v1943
      %v1960 = vsel %vm1880, %v1864, %v1944
      %1961 = vrot.lane.b32.xlu0 %v1152, 96
      %v1962 = vpop.permute.xlu0 %1961
      %1963 = vrot.lane.b32.xlu0 %v1153, 96
      %v1964 = vpop.permute.xlu0 %1963
      %1965 = vrot.lane.b32.xlu0 %v1154, 96
      %v1966 = vpop.permute.xlu0 %1965
      %1967 = vrot.lane.b32.xlu0 %v1155, 96
      %v1968 = vpop.permute.xlu0 %1967
      %1969 = vrot.lane.b32.xlu0 %v1156, 96
      %v1970 = vpop.permute.xlu0 %1969
      %1971 = vrot.lane.b32.xlu0 %v1157, 96
      %v1972 = vpop.permute.xlu0 %1971
      %1973 = vrot.lane.b32.xlu0 %v1158, 96
      %v1974 = vpop.permute.xlu0 %1973
      %1975 = vrot.lane.b32.xlu0 %v1159, 96
      %v1976 = vpop.permute.xlu0 %1975
      %1977 = vrot.lane.b32.xlu0 %v1160, 96
      %v1978 = vpop.permute.xlu0 %1977
      %1979 = vrot.lane.b32.xlu0 %v1161, 96
      %v1980 = vpop.permute.xlu0 %1979
      %1981 = vrot.lane.b32.xlu0 %v1162, 96
      %v1982 = vpop.permute.xlu0 %1981
      %1983 = vrot.lane.b32.xlu0 %v1163, 96
      %v1984 = vpop.permute.xlu0 %1983
      %1985 = vrot.lane.b32.xlu0 %v1164, 96
      %v1986 = vpop.permute.xlu0 %1985
      %1987 = vrot.lane.b32.xlu0 %v1165, 96
      %v1988 = vpop.permute.xlu0 %1987
      %1989 = vrot.lane.b32.xlu0 %v1166, 96
      %v1990 = vpop.permute.xlu0 %1989
      %1991 = vrot.lane.b32.xlu0 %v1167, 96
      %v1992 = vpop.permute.xlu0 %1991
      %v2009 = vmul.f32 %v1945, %v1962
      %v2010 = vmul.f32 %v1946, %v1964
      %v2011 = vmul.f32 %v1947, %v1966
      %v2012 = vmul.f32 %v1948, %v1968
      %v2013 = vmul.f32 %v1949, %v1970
      %v2014 = vmul.f32 %v1950, %v1972
      %v2015 = vmul.f32 %v1951, %v1974
      %v2016 = vmul.f32 %v1952, %v1976
      %v2017 = vmul.f32 %v1953, %v1978
      %v2018 = vmul.f32 %v1954, %v1980
      %v2019 = vmul.f32 %v1955, %v1982
      %v2020 = vmul.f32 %v1956, %v1984
      %v2021 = vmul.f32 %v1957, %v1986
      %v2022 = vmul.f32 %v1958, %v1988
      %v2023 = vmul.f32 %v1959, %v1990
      %v2024 = vmul.f32 %v1960, %v1992
      %v2025 = vsel %vm528, %v2009, 0.0
      %2026 = vadd.xlane.f32.xlu0 %v2025
      %v2027 = vpop.xlane.xlu0 %2026
      %v2028 = vsel %vm528, %v2010, 0.0
      %2029 = vadd.xlane.f32.xlu0 %v2028
      %v2030 = vpop.xlane.xlu0 %2029
      %v2031 = vsel %vm528, %v2011, 0.0
      %2032 = vadd.xlane.f32.xlu0 %v2031
      %v2033 = vpop.xlane.xlu0 %2032
      %v2034 = vsel %vm528, %v2012, 0.0
      %2035 = vadd.xlane.f32.xlu0 %v2034
      %v2036 = vpop.xlane.xlu0 %2035
      %v2037 = vsel %vm528, %v2013, 0.0
      %2038 = vadd.xlane.f32.xlu0 %v2037
      %v2039 = vpop.xlane.xlu0 %2038
      %v2040 = vsel %vm528, %v2014, 0.0
      %2041 = vadd.xlane.f32.xlu0 %v2040
      %v2042 = vpop.xlane.xlu0 %2041
      %v2043 = vsel %vm528, %v2015, 0.0
      %2044 = vadd.xlane.f32.xlu0 %v2043
      %v2045 = vpop.xlane.xlu0 %2044
      %v2046 = vsel %vm528, %v2016, 0.0
      %2047 = vadd.xlane.f32.xlu0 %v2046
      %v2048 = vpop.xlane.xlu0 %2047
      %v2049 = vsel %vm528, %v2017, 0.0
      %2050 = vadd.xlane.f32.xlu0 %v2049
      %v2051 = vpop.xlane.xlu0 %2050
      %v2052 = vsel %vm528, %v2018, 0.0
      %2053 = vadd.xlane.f32.xlu0 %v2052
      %v2054 = vpop.xlane.xlu0 %2053
      %v2055 = vsel %vm528, %v2019, 0.0
      %2056 = vadd.xlane.f32.xlu0 %v2055
      %v2057 = vpop.xlane.xlu0 %2056
      %v2058 = vsel %vm528, %v2020, 0.0
      %2059 = vadd.xlane.f32.xlu0 %v2058
      %v2060 = vpop.xlane.xlu0 %2059
      %v2061 = vsel %vm528, %v2021, 0.0
      %2062 = vadd.xlane.f32.xlu0 %v2061
      %v2063 = vpop.xlane.xlu0 %2062
      %v2064 = vsel %vm528, %v2022, 0.0
      %2065 = vadd.xlane.f32.xlu0 %v2064
      %v2066 = vpop.xlane.xlu0 %2065
      %v2067 = vsel %vm528, %v2023, 0.0
      %2068 = vadd.xlane.f32.xlu0 %v2067
      %v2069 = vpop.xlane.xlu0 %2068
      %v2070 = vsel %vm528, %v2024, 0.0
      %2071 = vadd.xlane.f32.xlu0 %v2070
      %v2072 = vpop.xlane.xlu0 %2071
      %v2073 = vadd.f32 %v2027, %v1060
      %v2074 = vadd.f32 %v2030, %v1066
      %v2075 = vadd.f32 %v2033, %v1072
      %v2076 = vadd.f32 %v2036, %v1078
      %v2077 = vadd.f32 %v2039, %v1084
      %v2078 = vadd.f32 %v2042, %v1090
      %v2079 = vadd.f32 %v2045, %v1096
      %v2080 = vadd.f32 %v2048, %v1102
      %v2081 = vadd.f32 %v2051, %v1108
      %v2082 = vadd.f32 %v2054, %v1114
      %v2083 = vadd.f32 %v2057, %v1120
      %v2084 = vadd.f32 %v2060, %v1126
      %v2085 = vadd.f32 %v2063, %v1132
      %v2086 = vadd.f32 %v2066, %v1138
      %v2087 = vadd.f32 %v2069, %v1144
      %v2088 = vadd.f32 %v2072, %v1150
      %2089 = vrot.lane.b32.xlu0 %v1152, 64
      %v2090 = vpop.permute.xlu0 %2089
      %2091 = vrot.lane.b32.xlu0 %v1153, 64
      %v2092 = vpop.permute.xlu0 %2091
      %2093 = vrot.lane.b32.xlu0 %v1154, 64
      %v2094 = vpop.permute.xlu0 %2093
      %2095 = vrot.lane.b32.xlu0 %v1155, 64
      %v2096 = vpop.permute.xlu0 %2095
      %2097 = vrot.lane.b32.xlu0 %v1156, 64
      %v2098 = vpop.permute.xlu0 %2097
      %2099 = vrot.lane.b32.xlu0 %v1157, 64
      %v2100 = vpop.permute.xlu0 %2099
      %2101 = vrot.lane.b32.xlu0 %v1158, 64
      %v2102 = vpop.permute.xlu0 %2101
      %2103 = vrot.lane.b32.xlu0 %v1159, 64
      %v2104 = vpop.permute.xlu0 %2103
      %2105 = vrot.lane.b32.xlu0 %v1160, 64
      %v2106 = vpop.permute.xlu0 %2105
      %2107 = vrot.lane.b32.xlu0 %v1161, 64
      %v2108 = vpop.permute.xlu0 %2107
      %2109 = vrot.lane.b32.xlu0 %v1162, 64
      %v2110 = vpop.permute.xlu0 %2109
      %2111 = vrot.lane.b32.xlu0 %v1163, 64
      %v2112 = vpop.permute.xlu0 %2111
      %2113 = vrot.lane.b32.xlu0 %v1164, 64
      %v2114 = vpop.permute.xlu0 %2113
      %2115 = vrot.lane.b32.xlu0 %v1165, 64
      %v2116 = vpop.permute.xlu0 %2115
      %2117 = vrot.lane.b32.xlu0 %v1166, 64
      %v2118 = vpop.permute.xlu0 %2117
      %2119 = vrot.lane.b32.xlu0 %v1167, 64
      %v2120 = vpop.permute.xlu0 %2119
      %v2137 = vmul.f32 %v1499, %v2090
      %v2138 = vmul.f32 %v1504, %v2092
      %v2139 = vmul.f32 %v1509, %v2094
      %v2140 = vmul.f32 %v1514, %v2096
      %v2141 = vmul.f32 %v1519, %v2098
      %v2142 = vmul.f32 %v1524, %v2100
      %v2143 = vmul.f32 %v1529, %v2102
      %v2144 = vmul.f32 %v1534, %v2104
      %v2145 = vmul.f32 %v1539, %v2106
      %v2146 = vmul.f32 %v1544, %v2108
      %v2147 = vmul.f32 %v1549, %v2110
      %v2148 = vmul.f32 %v1554, %v2112
      %v2149 = vmul.f32 %v1559, %v2114
      %v2150 = vmul.f32 %v1564, %v2116
      %v2151 = vmul.f32 %v1569, %v2118
      %v2152 = vmul.f32 %v1574, %v2120
      %v2153 = vsel %vm528, %v2137, 0.0
      %2154 = vadd.xlane.f32.xlu0 %v2153
      %v2155 = vpop.xlane.xlu0 %2154
      %v2156 = vsel %vm528, %v2138, 0.0
      %2157 = vadd.xlane.f32.xlu0 %v2156
      %v2158 = vpop.xlane.xlu0 %2157
      %v2159 = vsel %vm528, %v2139, 0.0
      %2160 = vadd.xlane.f32.xlu0 %v2159
      %v2161 = vpop.xlane.xlu0 %2160
      %v2162 = vsel %vm528, %v2140, 0.0
      %2163 = vadd.xlane.f32.xlu0 %v2162
      %v2164 = vpop.xlane.xlu0 %2163
      %v2165 = vsel %vm528, %v2141, 0.0
      %2166 = vadd.xlane.f32.xlu0 %v2165
      %v2167 = vpop.xlane.xlu0 %2166
      %v2168 = vsel %vm528, %v2142, 0.0
      %2169 = vadd.xlane.f32.xlu0 %v2168
      %v2170 = vpop.xlane.xlu0 %2169
      %v2171 = vsel %vm528, %v2143, 0.0
      %2172 = vadd.xlane.f32.xlu0 %v2171
      %v2173 = vpop.xlane.xlu0 %2172
      %v2174 = vsel %vm528, %v2144, 0.0
      %2175 = vadd.xlane.f32.xlu0 %v2174
      %v2176 = vpop.xlane.xlu0 %2175
      %v2177 = vsel %vm528, %v2145, 0.0
      %2178 = vadd.xlane.f32.xlu0 %v2177
      %v2179 = vpop.xlane.xlu0 %2178
      %v2180 = vsel %vm528, %v2146, 0.0
      %2181 = vadd.xlane.f32.xlu0 %v2180
      %v2182 = vpop.xlane.xlu0 %2181
      %v2183 = vsel %vm528, %v2147, 0.0
      %2184 = vadd.xlane.f32.xlu0 %v2183
      %v2185 = vpop.xlane.xlu0 %2184
      %v2186 = vsel %vm528, %v2148, 0.0
      %2187 = vadd.xlane.f32.xlu0 %v2186
      %v2188 = vpop.xlane.xlu0 %2187
      %v2189 = vsel %vm528, %v2149, 0.0
      %2190 = vadd.xlane.f32.xlu0 %v2189
      %v2191 = vpop.xlane.xlu0 %2190
      %v2192 = vsel %vm528, %v2150, 0.0
      %2193 = vadd.xlane.f32.xlu0 %v2192
      %v2194 = vpop.xlane.xlu0 %2193
      %v2195 = vsel %vm528, %v2151, 0.0
      %2196 = vadd.xlane.f32.xlu0 %v2195
      %v2197 = vpop.xlane.xlu0 %2196
      %v2198 = vsel %vm528, %v2152, 0.0
      %2199 = vadd.xlane.f32.xlu0 %v2198
      %v2200 = vpop.xlane.xlu0 %2199
      %v2201 = vadd.f32 %v2155, %v1737
      %v2202 = vadd.f32 %v2158, %v1738
      %v2203 = vadd.f32 %v2161, %v1739
      %v2204 = vadd.f32 %v2164, %v1740
      %v2205 = vadd.f32 %v2167, %v1741
      %v2206 = vadd.f32 %v2170, %v1742
      %v2207 = vadd.f32 %v2173, %v1743
      %v2208 = vadd.f32 %v2176, %v1744
      %v2209 = vadd.f32 %v2179, %v1745
      %v2210 = vadd.f32 %v2182, %v1746
      %v2211 = vadd.f32 %v2185, %v1747
      %v2212 = vadd.f32 %v2188, %v1748
      %v2213 = vadd.f32 %v2191, %v1749
      %v2214 = vadd.f32 %v2194, %v1750
      %v2215 = vadd.f32 %v2197, %v1751
      %v2216 = vadd.f32 %v2200, %v1752
      %v2217 = vmul.f32 %v2201, 1.442695
      %v2218 = vpow.pop %v2217
      %v2219 = vmul.f32 %v2202, 1.442695
      %v2220 = vpow.pop %v2219
      %v2221 = vmul.f32 %v2203, 1.442695
      %v2222 = vpow.pop %v2221
      %v2223 = vmul.f32 %v2204, 1.442695
      %v2224 = vpow.pop %v2223
      %v2225 = vmul.f32 %v2205, 1.442695
      %v2226 = vpow.pop %v2225
      %v2227 = vmul.f32 %v2206, 1.442695
      %v2228 = vpow.pop %v2227
      %v2229 = vmul.f32 %v2207, 1.442695
      %v2230 = vpow.pop %v2229
      %v2231 = vmul.f32 %v2208, 1.442695
      %v2232 = vpow.pop %v2231
      %v2233 = vmul.f32 %v2209, 1.442695
      %v2234 = vpow.pop %v2233
      %v2235 = vmul.f32 %v2210, 1.442695
      %v2236 = vpow.pop %v2235
      %v2237 = vmul.f32 %v2211, 1.442695
      %v2238 = vpow.pop %v2237
      %v2239 = vmul.f32 %v2212, 1.442695
      %v2240 = vpow.pop %v2239
      %v2241 = vmul.f32 %v2213, 1.442695
      %v2242 = vpow.pop %v2241
      %v2243 = vmul.f32 %v2214, 1.442695
      %v2244 = vpow.pop %v2243
      %v2245 = vmul.f32 %v2215, 1.442695
      %v2246 = vpow.pop %v2245
      %v2247 = vmul.f32 %v2216, 1.442695
      %v2248 = vpow.pop %v2247
      %2265 = vrot.lane.b32.xlu0 %v1593, 33
      %v2266 = vpop.permute.xlu0 %2265
      %2267 = vrot.lane.b32.xlu0 %v1594, 33
      %v2268 = vpop.permute.xlu0 %2267
      %2269 = vrot.lane.b32.xlu0 %v1595, 33
      %v2270 = vpop.permute.xlu0 %2269
      %2271 = vrot.lane.b32.xlu0 %v1596, 33
      %v2272 = vpop.permute.xlu0 %2271
      %2273 = vrot.lane.b32.xlu0 %v1597, 33
      %v2274 = vpop.permute.xlu0 %2273
      %2275 = vrot.lane.b32.xlu0 %v1598, 33
      %v2276 = vpop.permute.xlu0 %2275
      %2277 = vrot.lane.b32.xlu0 %v1599, 33
      %v2278 = vpop.permute.xlu0 %2277
      %2279 = vrot.lane.b32.xlu0 %v1600, 33
      %v2280 = vpop.permute.xlu0 %2279
      %2281 = vrot.lane.b32.xlu0 %v1601, 33
      %v2282 = vpop.permute.xlu0 %2281
      %2283 = vrot.lane.b32.xlu0 %v1602, 33
      %v2284 = vpop.permute.xlu0 %2283
      %2285 = vrot.lane.b32.xlu0 %v1603, 33
      %v2286 = vpop.permute.xlu0 %2285
      %2287 = vrot.lane.b32.xlu0 %v1604, 33
      %v2288 = vpop.permute.xlu0 %2287
      %2289 = vrot.lane.b32.xlu0 %v1605, 33
      %v2290 = vpop.permute.xlu0 %2289
      %2291 = vrot.lane.b32.xlu0 %v1606, 33
      %v2292 = vpop.permute.xlu0 %2291
      %2293 = vrot.lane.b32.xlu0 %v1607, 33
      %v2294 = vpop.permute.xlu0 %2293
      %2295 = vrot.lane.b32.xlu0 %v1608, 33
      %v2296 = vpop.permute.xlu0 %2295
      %v2313 = vmul.f32 %v2218, %v2266
      %v2314 = vmul.f32 %v2220, %v2268
      %v2315 = vmul.f32 %v2222, %v2270
      %v2316 = vmul.f32 %v2224, %v2272
      %v2317 = vmul.f32 %v2226, %v2274
      %v2318 = vmul.f32 %v2228, %v2276
      %v2319 = vmul.f32 %v2230, %v2278
      %v2320 = vmul.f32 %v2232, %v2280
      %v2321 = vmul.f32 %v2234, %v2282
      %v2322 = vmul.f32 %v2236, %v2284
      %v2323 = vmul.f32 %v2238, %v2286
      %v2324 = vmul.f32 %v2240, %v2288
      %v2325 = vmul.f32 %v2242, %v2290
      %v2326 = vmul.f32 %v2244, %v2292
      %v2327 = vmul.f32 %v2246, %v2294
      %v2328 = vmul.f32 %v2248, %v2296
      %2345 = vrot.lane.b32.xlu0 %v2313, 127
      %v2346 = vpop.permute.xlu0 %2345
      %2347 = vrot.lane.b32.xlu0 %v2314, 127
      %v2348 = vpop.permute.xlu0 %2347
      %2349 = vrot.lane.b32.xlu0 %v2315, 127
      %v2350 = vpop.permute.xlu0 %2349
      %2351 = vrot.lane.b32.xlu0 %v2316, 127
      %v2352 = vpop.permute.xlu0 %2351
      %2353 = vrot.lane.b32.xlu0 %v2317, 127
      %v2354 = vpop.permute.xlu0 %2353
      %2355 = vrot.lane.b32.xlu0 %v2318, 127
      %v2356 = vpop.permute.xlu0 %2355
      %2357 = vrot.lane.b32.xlu0 %v2319, 127
      %v2358 = vpop.permute.xlu0 %2357
      %2359 = vrot.lane.b32.xlu0 %v2320, 127
      %v2360 = vpop.permute.xlu0 %2359
      %2361 = vrot.lane.b32.xlu0 %v2321, 127
      %v2362 = vpop.permute.xlu0 %2361
      %2363 = vrot.lane.b32.xlu0 %v2322, 127
      %v2364 = vpop.permute.xlu0 %2363
      %2365 = vrot.lane.b32.xlu0 %v2323, 127
      %v2366 = vpop.permute.xlu0 %2365
      %2367 = vrot.lane.b32.xlu0 %v2324, 127
      %v2368 = vpop.permute.xlu0 %2367
      %2369 = vrot.lane.b32.xlu0 %v2325, 127
      %v2370 = vpop.permute.xlu0 %2369
      %2371 = vrot.lane.b32.xlu0 %v2326, 127
      %v2372 = vpop.permute.xlu0 %2371
      %2373 = vrot.lane.b32.xlu0 %v2327, 127
      %v2374 = vpop.permute.xlu0 %2373
      %2375 = vrot.lane.b32.xlu0 %v2328, 127
      %v2376 = vpop.permute.xlu0 %2375
      %v2393 = vmul.f32 %v2073, %v2346
      %v2394 = vmul.f32 %v2074, %v2348
      %v2395 = vmul.f32 %v2075, %v2350
      %v2396 = vmul.f32 %v2076, %v2352
      %v2397 = vmul.f32 %v2077, %v2354
      %v2398 = vmul.f32 %v2078, %v2356
      %v2399 = vmul.f32 %v2079, %v2358
      %v2400 = vmul.f32 %v2080, %v2360
      %v2401 = vmul.f32 %v2081, %v2362
      %v2402 = vmul.f32 %v2082, %v2364
      %v2403 = vmul.f32 %v2083, %v2366
      %v2404 = vmul.f32 %v2084, %v2368
      %v2405 = vmul.f32 %v2085, %v2370
      %v2406 = vmul.f32 %v2086, %v2372
      %v2407 = vmul.f32 %v2087, %v2374
      %v2408 = vmul.f32 %v2088, %v2376
      %v2409 = vadd.f32 %v2393, 0.0
      %v2410 = vadd.f32 %v2394, 0.0
      %v2411 = vadd.f32 %v2395, 0.0
      %v2412 = vadd.f32 %v2396, 0.0
      %v2413 = vadd.f32 %v2397, 0.0
      %v2414 = vadd.f32 %v2398, 0.0
      %v2415 = vadd.f32 %v2399, 0.0
      %v2416 = vadd.f32 %v2400, 0.0
      %v2417 = vadd.f32 %v2401, 0.0
      %v2418 = vadd.f32 %v2402, 0.0
      %v2419 = vadd.f32 %v2403, 0.0
      %v2420 = vadd.f32 %v2404, 0.0
      %v2421 = vadd.f32 %v2405, 0.0
      %v2422 = vadd.f32 %v2406, 0.0
      %v2423 = vadd.f32 %v2407, 0.0
      %v2424 = vadd.f32 %v2408, 0.0
      %2425 = vset.pattern.permute.xlu0 1
      %2426 = vperm.xlu0 %2425, %v1577
      %v2427 = vpop.permute.xlu0 %2426
      %2429 = vset.pattern.permute.xlu0 1
      %2430 = vperm.xlu0 %2429, %v1578
      %v2431 = vpop.permute.xlu0 %2430
      %2433 = vset.pattern.permute.xlu0 1
      %2434 = vperm.xlu0 %2433, %v1579
      %v2435 = vpop.permute.xlu0 %2434
      %2437 = vset.pattern.permute.xlu0 1
      %2438 = vperm.xlu0 %2437, %v1580
      %v2439 = vpop.permute.xlu0 %2438
      %2441 = vset.pattern.permute.xlu0 1
      %2442 = vperm.xlu0 %2441, %v1581
      %v2443 = vpop.permute.xlu0 %2442
      %2445 = vset.pattern.permute.xlu0 1
      %2446 = vperm.xlu0 %2445, %v1582
      %v2447 = vpop.permute.xlu0 %2446
      %2449 = vset.pattern.permute.xlu0 1
      %2450 = vperm.xlu0 %2449, %v1583
      %v2451 = vpop.permute.xlu0 %2450
      %2453 = vset.pattern.permute.xlu0 1
      %2454 = vperm.xlu0 %2453, %v1584
      %v2455 = vpop.permute.xlu0 %2454
      %2457 = vset.pattern.permute.xlu0 1
      %2458 = vperm.xlu0 %2457, %v1585
      %v2459 = vpop.permute.xlu0 %2458
      %2461 = vset.pattern.permute.xlu0 1
      %2462 = vperm.xlu0 %2461, %v1586
      %v2463 = vpop.permute.xlu0 %2462
      %2465 = vset.pattern.permute.xlu0 1
      %2466 = vperm.xlu0 %2465, %v1587
      %v2467 = vpop.permute.xlu0 %2466
      %2469 = vset.pattern.permute.xlu0 1
      %2470 = vperm.xlu0 %2469, %v1588
      %v2471 = vpop.permute.xlu0 %2470
      %2473 = vset.pattern.permute.xlu0 1
      %2474 = vperm.xlu0 %2473, %v1589
      %v2475 = vpop.permute.xlu0 %2474
      %2477 = vset.pattern.permute.xlu0 1
      %2478 = vperm.xlu0 %2477, %v1590
      %v2479 = vpop.permute.xlu0 %2478
      %2481 = vset.pattern.permute.xlu0 1
      %2482 = vperm.xlu0 %2481, %v1591
      %v2483 = vpop.permute.xlu0 %2482
      %2485 = vset.pattern.permute.xlu0 1
      %2486 = vperm.xlu0 %2485, %v1592
      %v2487 = vpop.permute.xlu0 %2486
      %v2489 = vmul.f32 %v2427, %v1152
      %v2490 = vmul.f32 %v2431, %v1153
      %v2491 = vmul.f32 %v2435, %v1154
      %v2492 = vmul.f32 %v2439, %v1155
      %v2493 = vmul.f32 %v2443, %v1156
      %v2494 = vmul.f32 %v2447, %v1157
      %v2495 = vmul.f32 %v2451, %v1158
      %v2496 = vmul.f32 %v2455, %v1159
      %v2497 = vmul.f32 %v2459, %v1160
      %v2498 = vmul.f32 %v2463, %v1161
      %v2499 = vmul.f32 %v2467, %v1162
      %v2500 = vmul.f32 %v2471, %v1163
      %v2501 = vmul.f32 %v2475, %v1164
      %v2502 = vmul.f32 %v2479, %v1165
      %v2503 = vmul.f32 %v2483, %v1166
      %v2504 = vmul.f32 %v2487, %v1167
      %v2505 = vadd.f32 %v2489, %v805
      %v2506 = vadd.f32 %v2490, %v810
      %v2507 = vadd.f32 %v2491, %v815
      %v2508 = vadd.f32 %v2492, %v820
      %v2509 = vadd.f32 %v2493, %v825
      %v2510 = vadd.f32 %v2494, %v830
      %v2511 = vadd.f32 %v2495, %v835
      %v2512 = vadd.f32 %v2496, %v840
      %v2513 = vadd.f32 %v2497, %v845
      %v2514 = vadd.f32 %v2498, %v850
      %v2515 = vadd.f32 %v2499, %v855
      %v2516 = vadd.f32 %v2500, %v860
      %v2517 = vadd.f32 %v2501, %v865
      %v2518 = vadd.f32 %v2502, %v870
      %v2519 = vadd.f32 %v2503, %v875
      %v2520 = vadd.f32 %v2504, %v880
      %vm2521 = vcmp.gt.f32.partialorder %v2505, 0.0
      %vm2522 = vcmp.gt.f32.partialorder %v2506, 0.0
      %vm2523 = vcmp.gt.f32.partialorder %v2507, 0.0
      %vm2524 = vcmp.gt.f32.partialorder %v2508, 0.0
      %vm2525 = vcmp.gt.f32.partialorder %v2509, 0.0
      %vm2526 = vcmp.gt.f32.partialorder %v2510, 0.0
      %vm2527 = vcmp.gt.f32.partialorder %v2511, 0.0
      %vm2528 = vcmp.gt.f32.partialorder %v2512, 0.0
      %vm2529 = vcmp.gt.f32.partialorder %v2513, 0.0
      %vm2530 = vcmp.gt.f32.partialorder %v2514, 0.0
      %vm2531 = vcmp.gt.f32.partialorder %v2515, 0.0
      %vm2532 = vcmp.gt.f32.partialorder %v2516, 0.0
      %vm2533 = vcmp.gt.f32.partialorder %v2517, 0.0
      %vm2534 = vcmp.gt.f32.partialorder %v2518, 0.0
      %vm2535 = vcmp.gt.f32.partialorder %v2519, 0.0
      %vm2536 = vcmp.gt.f32.partialorder %v2520, 0.0
      %v2537 = vmin.f32 %v2505, 0.0
      %v2538 = vmin.f32 %v2506, 0.0
      %v2539 = vmin.f32 %v2507, 0.0
      %v2540 = vmin.f32 %v2508, 0.0
      %v2541 = vmin.f32 %v2509, 0.0
      %v2542 = vmin.f32 %v2510, 0.0
      %v2543 = vmin.f32 %v2511, 0.0
      %v2544 = vmin.f32 %v2512, 0.0
      %v2545 = vmin.f32 %v2513, 0.0
      %v2546 = vmin.f32 %v2514, 0.0
      %v2547 = vmin.f32 %v2515, 0.0
      %v2548 = vmin.f32 %v2516, 0.0
      %v2549 = vmin.f32 %v2517, 0.0
      %v2550 = vmin.f32 %v2518, 0.0
      %v2551 = vmin.f32 %v2519, 0.0
      %v2552 = vmin.f32 %v2520, 0.0
      %v2553 = vmul.f32 %v2537, 1.442695
      %v2554 = vpow.pop %v2553
      %v2555 = vmul.f32 %v2538, 1.442695
      %v2556 = vpow.pop %v2555
      %v2557 = vmul.f32 %v2539, 1.442695
      %v2558 = vpow.pop %v2557
      %v2559 = vmul.f32 %v2540, 1.442695
      %v2560 = vpow.pop %v2559
      %v2561 = vmul.f32 %v2541, 1.442695
      %v2562 = vpow.pop %v2561
      %v2563 = vmul.f32 %v2542, 1.442695
      %v2564 = vpow.pop %v2563
      %v2565 = vmul.f32 %v2543, 1.442695
      %v2566 = vpow.pop %v2565
      %v2567 = vmul.f32 %v2544, 1.442695
      %v2568 = vpow.pop %v2567
      %v2569 = vmul.f32 %v2545, 1.442695
      %v2570 = vpow.pop %v2569
      %v2571 = vmul.f32 %v2546, 1.442695
      %v2572 = vpow.pop %v2571
      %v2573 = vmul.f32 %v2547, 1.442695
      %v2574 = vpow.pop %v2573
      %v2575 = vmul.f32 %v2548, 1.442695
      %v2576 = vpow.pop %v2575
      %v2577 = vmul.f32 %v2549, 1.442695
      %v2578 = vpow.pop %v2577
      %v2579 = vmul.f32 %v2550, 1.442695
      %v2580 = vpow.pop %v2579
      %v2581 = vmul.f32 %v2551, 1.442695
      %v2582 = vpow.pop %v2581
      %v2583 = vmul.f32 %v2552, 1.442695
      %v2584 = vpow.pop %v2583
      %v2585 = vsub.f32 %v2554, 1.0
      %v2586 = vsub.f32 %v2556, 1.0
      %v2587 = vsub.f32 %v2558, 1.0
      %v2588 = vsub.f32 %v2560, 1.0
      %v2589 = vsub.f32 %v2562, 1.0
      %v2590 = vsub.f32 %v2564, 1.0
      %v2591 = vsub.f32 %v2566, 1.0
      %v2592 = vsub.f32 %v2568, 1.0
      %v2593 = vsub.f32 %v2570, 1.0
      %v2594 = vsub.f32 %v2572, 1.0
      %v2595 = vsub.f32 %v2574, 1.0
      %v2596 = vsub.f32 %v2576, 1.0
      %v2597 = vsub.f32 %v2578, 1.0
      %v2598 = vsub.f32 %v2580, 1.0
      %v2599 = vsub.f32 %v2582, 1.0
      %v2600 = vsub.f32 %v2584, 1.0
      %v2601 = vsel %vm2521, %v2505, %v2585
      %v2602 = vsel %vm2522, %v2506, %v2586
      %v2603 = vsel %vm2523, %v2507, %v2587
      %v2604 = vsel %vm2524, %v2508, %v2588
      %v2605 = vsel %vm2525, %v2509, %v2589
      %v2606 = vsel %vm2526, %v2510, %v2590
      %v2607 = vsel %vm2527, %v2511, %v2591
      %v2608 = vsel %vm2528, %v2512, %v2592
      %v2609 = vsel %vm2529, %v2513, %v2593
      %v2610 = vsel %vm2530, %v2514, %v2594
      %v2611 = vsel %vm2531, %v2515, %v2595
      %v2612 = vsel %vm2532, %v2516, %v2596
      %v2613 = vsel %vm2533, %v2517, %v2597
      %v2614 = vsel %vm2534, %v2518, %v2598
      %v2615 = vsel %vm2535, %v2519, %v2599
      %v2616 = vsel %vm2536, %v2520, %v2600
      %v2617 = vmul.f32 %v2601, %v1962
      %v2618 = vmul.f32 %v2602, %v1964
      %v2619 = vmul.f32 %v2603, %v1966
      %v2620 = vmul.f32 %v2604, %v1968
      %v2621 = vmul.f32 %v2605, %v1970
      %v2622 = vmul.f32 %v2606, %v1972
      %v2623 = vmul.f32 %v2607, %v1974
      %v2624 = vmul.f32 %v2608, %v1976
      %v2625 = vmul.f32 %v2609, %v1978
      %v2626 = vmul.f32 %v2610, %v1980
      %v2627 = vmul.f32 %v2611, %v1982
      %v2628 = vmul.f32 %v2612, %v1984
      %v2629 = vmul.f32 %v2613, %v1986
      %v2630 = vmul.f32 %v2614, %v1988
      %v2631 = vmul.f32 %v2615, %v1990
      %v2632 = vmul.f32 %v2616, %v1992
      %v2633 = vsel %vm528, %v2617, 0.0
      %2634 = vadd.xlane.f32.xlu0 %v2633
      %v2635 = vpop.xlane.xlu0 %2634
      %v2636 = vsel %vm528, %v2618, 0.0
      %2637 = vadd.xlane.f32.xlu0 %v2636
      %v2638 = vpop.xlane.xlu0 %2637
      %v2639 = vsel %vm528, %v2619, 0.0
      %2640 = vadd.xlane.f32.xlu0 %v2639
      %v2641 = vpop.xlane.xlu0 %2640
      %v2642 = vsel %vm528, %v2620, 0.0
      %2643 = vadd.xlane.f32.xlu0 %v2642
      %v2644 = vpop.xlane.xlu0 %2643
      %v2645 = vsel %vm528, %v2621, 0.0
      %2646 = vadd.xlane.f32.xlu0 %v2645
      %v2647 = vpop.xlane.xlu0 %2646
      %v2648 = vsel %vm528, %v2622, 0.0
      %2649 = vadd.xlane.f32.xlu0 %v2648
      %v2650 = vpop.xlane.xlu0 %2649
      %v2651 = vsel %vm528, %v2623, 0.0
      %2652 = vadd.xlane.f32.xlu0 %v2651
      %v2653 = vpop.xlane.xlu0 %2652
      %v2654 = vsel %vm528, %v2624, 0.0
      %2655 = vadd.xlane.f32.xlu0 %v2654
      %v2656 = vpop.xlane.xlu0 %2655
      %v2657 = vsel %vm528, %v2625, 0.0
      %2658 = vadd.xlane.f32.xlu0 %v2657
      %v2659 = vpop.xlane.xlu0 %2658
      %v2660 = vsel %vm528, %v2626, 0.0
      %2661 = vadd.xlane.f32.xlu0 %v2660
      %v2662 = vpop.xlane.xlu0 %2661
      %v2663 = vsel %vm528, %v2627, 0.0
      %2664 = vadd.xlane.f32.xlu0 %v2663
      %v2665 = vpop.xlane.xlu0 %2664
      %v2666 = vsel %vm528, %v2628, 0.0
      %2667 = vadd.xlane.f32.xlu0 %v2666
      %v2668 = vpop.xlane.xlu0 %2667
      %v2669 = vsel %vm528, %v2629, 0.0
      %2670 = vadd.xlane.f32.xlu0 %v2669
      %v2671 = vpop.xlane.xlu0 %2670
      %v2672 = vsel %vm528, %v2630, 0.0
      %2673 = vadd.xlane.f32.xlu0 %v2672
      %v2674 = vpop.xlane.xlu0 %2673
      %v2675 = vsel %vm528, %v2631, 0.0
      %2676 = vadd.xlane.f32.xlu0 %v2675
      %v2677 = vpop.xlane.xlu0 %2676
      %v2678 = vsel %vm528, %v2632, 0.0
      %2679 = vadd.xlane.f32.xlu0 %v2678
      %v2680 = vpop.xlane.xlu0 %2679
      %v2681 = vadd.f32 %v2635, %v1060
      %v2682 = vadd.f32 %v2638, %v1066
      %v2683 = vadd.f32 %v2641, %v1072
      %v2684 = vadd.f32 %v2644, %v1078
      %v2685 = vadd.f32 %v2647, %v1084
      %v2686 = vadd.f32 %v2650, %v1090
      %v2687 = vadd.f32 %v2653, %v1096
      %v2688 = vadd.f32 %v2656, %v1102
      %v2689 = vadd.f32 %v2659, %v1108
      %v2690 = vadd.f32 %v2662, %v1114
      %v2691 = vadd.f32 %v2665, %v1120
      %v2692 = vadd.f32 %v2668, %v1126
      %v2693 = vadd.f32 %v2671, %v1132
      %v2694 = vadd.f32 %v2674, %v1138
      %v2695 = vadd.f32 %v2677, %v1144
      %v2696 = vadd.f32 %v2680, %v1150
      %v2697 = vmul.f32 %v1499, %v1962
      %v2698 = vmul.f32 %v1504, %v1964
      %v2699 = vmul.f32 %v1509, %v1966
      %v2700 = vmul.f32 %v1514, %v1968
      %v2701 = vmul.f32 %v1519, %v1970
      %v2702 = vmul.f32 %v1524, %v1972
      %v2703 = vmul.f32 %v1529, %v1974
      %v2704 = vmul.f32 %v1534, %v1976
      %v2705 = vmul.f32 %v1539, %v1978
      %v2706 = vmul.f32 %v1544, %v1980
      %v2707 = vmul.f32 %v1549, %v1982
      %v2708 = vmul.f32 %v1554, %v1984
      %v2709 = vmul.f32 %v1559, %v1986
      %v2710 = vmul.f32 %v1564, %v1988
      %v2711 = vmul.f32 %v1569, %v1990
      %v2712 = vmul.f32 %v1574, %v1992
      %2729 = vrot.lane.b32.xlu0 %v2697, 96
      %v2730 = vpop.permute.xlu0 %2729
      %2731 = vrot.lane.b32.xlu0 %v2698, 96
      %v2732 = vpop.permute.xlu0 %2731
      %2733 = vrot.lane.b32.xlu0 %v2699, 96
      %v2734 = vpop.permute.xlu0 %2733
      %2735 = vrot.lane.b32.xlu0 %v2700, 96
      %v2736 = vpop.permute.xlu0 %2735
      %2737 = vrot.lane.b32.xlu0 %v2701, 96
      %v2738 = vpop.permute.xlu0 %2737
      %2739 = vrot.lane.b32.xlu0 %v2702, 96
      %v2740 = vpop.permute.xlu0 %2739
      %2741 = vrot.lane.b32.xlu0 %v2703, 96
      %v2742 = vpop.permute.xlu0 %2741
      %2743 = vrot.lane.b32.xlu0 %v2704, 96
      %v2744 = vpop.permute.xlu0 %2743
      %2745 = vrot.lane.b32.xlu0 %v2705, 96
      %v2746 = vpop.permute.xlu0 %2745
      %2747 = vrot.lane.b32.xlu0 %v2706, 96
      %v2748 = vpop.permute.xlu0 %2747
      %2749 = vrot.lane.b32.xlu0 %v2707, 96
      %v2750 = vpop.permute.xlu0 %2749
      %2751 = vrot.lane.b32.xlu0 %v2708, 96
      %v2752 = vpop.permute.xlu0 %2751
      %2753 = vrot.lane.b32.xlu0 %v2709, 96
      %v2754 = vpop.permute.xlu0 %2753
      %2755 = vrot.lane.b32.xlu0 %v2710, 96
      %v2756 = vpop.permute.xlu0 %2755
      %2757 = vrot.lane.b32.xlu0 %v2711, 96
      %v2758 = vpop.permute.xlu0 %2757
      %2759 = vrot.lane.b32.xlu0 %v2712, 96
      %v2760 = vpop.permute.xlu0 %2759
      %v2777 = vsel %vm528, %v2730, 0.0
      %2778 = vadd.xlane.f32.xlu0 %v2777
      %v2779 = vpop.xlane.xlu0 %2778
      %v2780 = vsel %vm528, %v2732, 0.0
      %2781 = vadd.xlane.f32.xlu0 %v2780
      %v2782 = vpop.xlane.xlu0 %2781
      %v2783 = vsel %vm528, %v2734, 0.0
      %2784 = vadd.xlane.f32.xlu0 %v2783
      %v2785 = vpop.xlane.xlu0 %2784
      %v2786 = vsel %vm528, %v2736, 0.0
      %2787 = vadd.xlane.f32.xlu0 %v2786
      %v2788 = vpop.xlane.xlu0 %2787
      %v2789 = vsel %vm528, %v2738, 0.0
      %2790 = vadd.xlane.f32.xlu0 %v2789
      %v2791 = vpop.xlane.xlu0 %2790
      %v2792 = vsel %vm528, %v2740, 0.0
      %2793 = vadd.xlane.f32.xlu0 %v2792
      %v2794 = vpop.xlane.xlu0 %2793
      %v2795 = vsel %vm528, %v2742, 0.0
      %2796 = vadd.xlane.f32.xlu0 %v2795
      %v2797 = vpop.xlane.xlu0 %2796
      %v2798 = vsel %vm528, %v2744, 0.0
      %2799 = vadd.xlane.f32.xlu0 %v2798
      %v2800 = vpop.xlane.xlu0 %2799
      %v2801 = vsel %vm528, %v2746, 0.0
      %2802 = vadd.xlane.f32.xlu0 %v2801
      %v2803 = vpop.xlane.xlu0 %2802
      %v2804 = vsel %vm528, %v2748, 0.0
      %2805 = vadd.xlane.f32.xlu0 %v2804
      %v2806 = vpop.xlane.xlu0 %2805
      %v2807 = vsel %vm528, %v2750, 0.0
      %2808 = vadd.xlane.f32.xlu0 %v2807
      %v2809 = vpop.xlane.xlu0 %2808
      %v2810 = vsel %vm528, %v2752, 0.0
      %2811 = vadd.xlane.f32.xlu0 %v2810
      %v2812 = vpop.xlane.xlu0 %2811
      %v2813 = vsel %vm528, %v2754, 0.0
      %2814 = vadd.xlane.f32.xlu0 %v2813
      %v2815 = vpop.xlane.xlu0 %2814
      %v2816 = vsel %vm528, %v2756, 0.0
      %2817 = vadd.xlane.f32.xlu0 %v2816
      %v2818 = vpop.xlane.xlu0 %2817
      %v2819 = vsel %vm528, %v2758, 0.0
      %2820 = vadd.xlane.f32.xlu0 %v2819
      %v2821 = vpop.xlane.xlu0 %2820
      %v2822 = vsel %vm528, %v2760, 0.0
      %2823 = vadd.xlane.f32.xlu0 %v2822
      %v2824 = vpop.xlane.xlu0 %2823
      %v2825 = vadd.f32 %v2779, %v1737
      %v2826 = vadd.f32 %v2782, %v1738
      %v2827 = vadd.f32 %v2785, %v1739
      %v2828 = vadd.f32 %v2788, %v1740
      %v2829 = vadd.f32 %v2791, %v1741
      %v2830 = vadd.f32 %v2794, %v1742
      %v2831 = vadd.f32 %v2797, %v1743
      %v2832 = vadd.f32 %v2800, %v1744
      %v2833 = vadd.f32 %v2803, %v1745
      %v2834 = vadd.f32 %v2806, %v1746
      %v2835 = vadd.f32 %v2809, %v1747
      %v2836 = vadd.f32 %v2812, %v1748
      %v2837 = vadd.f32 %v2815, %v1749
      %v2838 = vadd.f32 %v2818, %v1750
      %v2839 = vadd.f32 %v2821, %v1751
      %v2840 = vadd.f32 %v2824, %v1752
      %v2841 = vmul.f32 %v2825, 1.442695
      %v2842 = vpow.pop %v2841
      %v2843 = vmul.f32 %v2826, 1.442695
      %v2844 = vpow.pop %v2843
      %v2845 = vmul.f32 %v2827, 1.442695
      %v2846 = vpow.pop %v2845
      %v2847 = vmul.f32 %v2828, 1.442695
      %v2848 = vpow.pop %v2847
      %v2849 = vmul.f32 %v2829, 1.442695
      %v2850 = vpow.pop %v2849
      %v2851 = vmul.f32 %v2830, 1.442695
      %v2852 = vpow.pop %v2851
      %v2853 = vmul.f32 %v2831, 1.442695
      %v2854 = vpow.pop %v2853
      %v2855 = vmul.f32 %v2832, 1.442695
      %v2856 = vpow.pop %v2855
      %v2857 = vmul.f32 %v2833, 1.442695
      %v2858 = vpow.pop %v2857
      %v2859 = vmul.f32 %v2834, 1.442695
      %v2860 = vpow.pop %v2859
      %v2861 = vmul.f32 %v2835, 1.442695
      %v2862 = vpow.pop %v2861
      %v2863 = vmul.f32 %v2836, 1.442695
      %v2864 = vpow.pop %v2863
      %v2865 = vmul.f32 %v2837, 1.442695
      %v2866 = vpow.pop %v2865
      %v2867 = vmul.f32 %v2838, 1.442695
      %v2868 = vpow.pop %v2867
      %v2869 = vmul.f32 %v2839, 1.442695
      %v2870 = vpow.pop %v2869
      %v2871 = vmul.f32 %v2840, 1.442695
      %v2872 = vpow.pop %v2871
      %2873 = vrot.lane.b32.xlu0 %v1593, 32
      %v2874 = vpop.permute.xlu0 %2873
      %2875 = vrot.lane.b32.xlu0 %v1594, 32
      %v2876 = vpop.permute.xlu0 %2875
      %2877 = vrot.lane.b32.xlu0 %v1595, 32
      %v2878 = vpop.permute.xlu0 %2877
      %2879 = vrot.lane.b32.xlu0 %v1596, 32
      %v2880 = vpop.permute.xlu0 %2879
      %2881 = vrot.lane.b32.xlu0 %v1597, 32
      %v2882 = vpop.permute.xlu0 %2881
      %2883 = vrot.lane.b32.xlu0 %v1598, 32
      %v2884 = vpop.permute.xlu0 %2883
      %2885 = vrot.lane.b32.xlu0 %v1599, 32
      %v2886 = vpop.permute.xlu0 %2885
      %2887 = vrot.lane.b32.xlu0 %v1600, 32
      %v2888 = vpop.permute.xlu0 %2887
      %2889 = vrot.lane.b32.xlu0 %v1601, 32
      %v2890 = vpop.permute.xlu0 %2889
      %2891 = vrot.lane.b32.xlu0 %v1602, 32
      %v2892 = vpop.permute.xlu0 %2891
      %2893 = vrot.lane.b32.xlu0 %v1603, 32
      %v2894 = vpop.permute.xlu0 %2893
      %2895 = vrot.lane.b32.xlu0 %v1604, 32
      %v2896 = vpop.permute.xlu0 %2895
      %2897 = vrot.lane.b32.xlu0 %v1605, 32
      %v2898 = vpop.permute.xlu0 %2897
      %2899 = vrot.lane.b32.xlu0 %v1606, 32
      %v2900 = vpop.permute.xlu0 %2899
      %2901 = vrot.lane.b32.xlu0 %v1607, 32
      %v2902 = vpop.permute.xlu0 %2901
      %2903 = vrot.lane.b32.xlu0 %v1608, 32
      %v2904 = vpop.permute.xlu0 %2903
      %v2921 = vmul.f32 %v2842, %v2874
      %v2922 = vmul.f32 %v2844, %v2876
      %v2923 = vmul.f32 %v2846, %v2878
      %v2924 = vmul.f32 %v2848, %v2880
      %v2925 = vmul.f32 %v2850, %v2882
      %v2926 = vmul.f32 %v2852, %v2884
      %v2927 = vmul.f32 %v2854, %v2886
      %v2928 = vmul.f32 %v2856, %v2888
      %v2929 = vmul.f32 %v2858, %v2890
      %v2930 = vmul.f32 %v2860, %v2892
      %v2931 = vmul.f32 %v2862, %v2894
      %v2932 = vmul.f32 %v2864, %v2896
      %v2933 = vmul.f32 %v2866, %v2898
      %v2934 = vmul.f32 %v2868, %v2900
      %v2935 = vmul.f32 %v2870, %v2902
      %v2936 = vmul.f32 %v2872, %v2904
      %2953 = vrot.lane.b32.xlu0 %v2921, 127
      %v2954 = vpop.permute.xlu0 %2953
      %2955 = vrot.lane.b32.xlu0 %v2922, 127
      %v2956 = vpop.permute.xlu0 %2955
      %2957 = vrot.lane.b32.xlu0 %v2923, 127
      %v2958 = vpop.permute.xlu0 %2957
      %2959 = vrot.lane.b32.xlu0 %v2924, 127
      %v2960 = vpop.permute.xlu0 %2959
      %2961 = vrot.lane.b32.xlu0 %v2925, 127
      %v2962 = vpop.permute.xlu0 %2961
      %2963 = vrot.lane.b32.xlu0 %v2926, 127
      %v2964 = vpop.permute.xlu0 %2963
      %2965 = vrot.lane.b32.xlu0 %v2927, 127
      %v2966 = vpop.permute.xlu0 %2965
      %2967 = vrot.lane.b32.xlu0 %v2928, 127
      %v2968 = vpop.permute.xlu0 %2967
      %2969 = vrot.lane.b32.xlu0 %v2929, 127
      %v2970 = vpop.permute.xlu0 %2969
      %2971 = vrot.lane.b32.xlu0 %v2930, 127
      %v2972 = vpop.permute.xlu0 %2971
      %2973 = vrot.lane.b32.xlu0 %v2931, 127
      %v2974 = vpop.permute.xlu0 %2973
      %2975 = vrot.lane.b32.xlu0 %v2932, 127
      %v2976 = vpop.permute.xlu0 %2975
      %2977 = vrot.lane.b32.xlu0 %v2933, 127
      %v2978 = vpop.permute.xlu0 %2977
      %2979 = vrot.lane.b32.xlu0 %v2934, 127
      %v2980 = vpop.permute.xlu0 %2979
      %2981 = vrot.lane.b32.xlu0 %v2935, 127
      %v2982 = vpop.permute.xlu0 %2981
      %2983 = vrot.lane.b32.xlu0 %v2936, 127
      %v2984 = vpop.permute.xlu0 %2983
      %v3001 = vmul.f32 %v2681, %v2954
      %v3002 = vmul.f32 %v2682, %v2956
      %v3003 = vmul.f32 %v2683, %v2958
      %v3004 = vmul.f32 %v2684, %v2960
      %v3005 = vmul.f32 %v2685, %v2962
      %v3006 = vmul.f32 %v2686, %v2964
      %v3007 = vmul.f32 %v2687, %v2966
      %v3008 = vmul.f32 %v2688, %v2968
      %v3009 = vmul.f32 %v2689, %v2970
      %v3010 = vmul.f32 %v2690, %v2972
      %v3011 = vmul.f32 %v2691, %v2974
      %v3012 = vmul.f32 %v2692, %v2976
      %v3013 = vmul.f32 %v2693, %v2978
      %v3014 = vmul.f32 %v2694, %v2980
      %v3015 = vmul.f32 %v2695, %v2982
      %v3016 = vmul.f32 %v2696, %v2984
      %v3017 = vadd.f32 %v2409, %v3001
      %v3018 = vadd.f32 %v2410, %v3002
      %v3019 = vadd.f32 %v2411, %v3003
      %v3020 = vadd.f32 %v2412, %v3004
      %v3021 = vadd.f32 %v2413, %v3005
      %v3022 = vadd.f32 %v2414, %v3006
      %v3023 = vadd.f32 %v2415, %v3007
      %v3024 = vadd.f32 %v2416, %v3008
      %v3025 = vadd.f32 %v2417, %v3009
      %v3026 = vadd.f32 %v2418, %v3010
      %v3027 = vadd.f32 %v2419, %v3011
      %v3028 = vadd.f32 %v2420, %v3012
      %v3029 = vadd.f32 %v2421, %v3013
      %v3030 = vadd.f32 %v2422, %v3014
      %v3031 = vadd.f32 %v2423, %v3015
      %v3032 = vadd.f32 %v2424, %v3016
      %3033 = vset.pattern.permute.xlu0 2
      %3034 = vperm.xlu0 %3033, %v1577
      %v3035 = vpop.permute.xlu0 %3034
      %3037 = vset.pattern.permute.xlu0 2
      %3038 = vperm.xlu0 %3037, %v1578
      %v3039 = vpop.permute.xlu0 %3038
      %3041 = vset.pattern.permute.xlu0 2
      %3042 = vperm.xlu0 %3041, %v1579
      %v3043 = vpop.permute.xlu0 %3042
      %3045 = vset.pattern.permute.xlu0 2
      %3046 = vperm.xlu0 %3045, %v1580
      %v3047 = vpop.permute.xlu0 %3046
      %3049 = vset.pattern.permute.xlu0 2
      %3050 = vperm.xlu0 %3049, %v1581
      %v3051 = vpop.permute.xlu0 %3050
      %3053 = vset.pattern.permute.xlu0 2
      %3054 = vperm.xlu0 %3053, %v1582
      %v3055 = vpop.permute.xlu0 %3054
      %3057 = vset.pattern.permute.xlu0 2
      %3058 = vperm.xlu0 %3057, %v1583
      %v3059 = vpop.permute.xlu0 %3058
      %3061 = vset.pattern.permute.xlu0 2
      %3062 = vperm.xlu0 %3061, %v1584
      %v3063 = vpop.permute.xlu0 %3062
      %3065 = vset.pattern.permute.xlu0 2
      %3066 = vperm.xlu0 %3065, %v1585
      %v3067 = vpop.permute.xlu0 %3066
      %3069 = vset.pattern.permute.xlu0 2
      %3070 = vperm.xlu0 %3069, %v1586
      %v3071 = vpop.permute.xlu0 %3070
      %3073 = vset.pattern.permute.xlu0 2
      %3074 = vperm.xlu0 %3073, %v1587
      %v3075 = vpop.permute.xlu0 %3074
      %3077 = vset.pattern.permute.xlu0 2
      %3078 = vperm.xlu0 %3077, %v1588
      %v3079 = vpop.permute.xlu0 %3078
      %3081 = vset.pattern.permute.xlu0 2
      %3082 = vperm.xlu0 %3081, %v1589
      %v3083 = vpop.permute.xlu0 %3082
      %3085 = vset.pattern.permute.xlu0 2
      %3086 = vperm.xlu0 %3085, %v1590
      %v3087 = vpop.permute.xlu0 %3086
      %3089 = vset.pattern.permute.xlu0 2
      %3090 = vperm.xlu0 %3089, %v1591
      %v3091 = vpop.permute.xlu0 %3090
      %3093 = vset.pattern.permute.xlu0 2
      %3094 = vperm.xlu0 %3093, %v1592
      %v3095 = vpop.permute.xlu0 %3094
      %v3097 = vmul.f32 %v3035, %v1152
      %v3098 = vmul.f32 %v3039, %v1153
      %v3099 = vmul.f32 %v3043, %v1154
      %v3100 = vmul.f32 %v3047, %v1155
      %v3101 = vmul.f32 %v3051, %v1156
      %v3102 = vmul.f32 %v3055, %v1157
      %v3103 = vmul.f32 %v3059, %v1158
      %v3104 = vmul.f32 %v3063, %v1159
      %v3105 = vmul.f32 %v3067, %v1160
      %v3106 = vmul.f32 %v3071, %v1161
      %v3107 = vmul.f32 %v3075, %v1162
      %v3108 = vmul.f32 %v3079, %v1163
      %v3109 = vmul.f32 %v3083, %v1164
      %v3110 = vmul.f32 %v3087, %v1165
      %v3111 = vmul.f32 %v3091, %v1166
      %v3112 = vmul.f32 %v3095, %v1167
      %v3113 = vadd.f32 %v3097, %v805
      %v3114 = vadd.f32 %v3098, %v810
      %v3115 = vadd.f32 %v3099, %v815
      %v3116 = vadd.f32 %v3100, %v820
      %v3117 = vadd.f32 %v3101, %v825
      %v3118 = vadd.f32 %v3102, %v830
      %v3119 = vadd.f32 %v3103, %v835
      %v3120 = vadd.f32 %v3104, %v840
      %v3121 = vadd.f32 %v3105, %v845
      %v3122 = vadd.f32 %v3106, %v850
      %v3123 = vadd.f32 %v3107, %v855
      %v3124 = vadd.f32 %v3108, %v860
      %v3125 = vadd.f32 %v3109, %v865
      %v3126 = vadd.f32 %v3110, %v870
      %v3127 = vadd.f32 %v3111, %v875
      %v3128 = vadd.f32 %v3112, %v880
      %vm3129 = vcmp.gt.f32.partialorder %v3113, 0.0
      %vm3130 = vcmp.gt.f32.partialorder %v3114, 0.0
      %vm3131 = vcmp.gt.f32.partialorder %v3115, 0.0
      %vm3132 = vcmp.gt.f32.partialorder %v3116, 0.0
      %vm3133 = vcmp.gt.f32.partialorder %v3117, 0.0
      %vm3134 = vcmp.gt.f32.partialorder %v3118, 0.0
      %vm3135 = vcmp.gt.f32.partialorder %v3119, 0.0
      %vm3136 = vcmp.gt.f32.partialorder %v3120, 0.0
      %vm3137 = vcmp.gt.f32.partialorder %v3121, 0.0
      %vm3138 = vcmp.gt.f32.partialorder %v3122, 0.0
      %vm3139 = vcmp.gt.f32.partialorder %v3123, 0.0
      %vm3140 = vcmp.gt.f32.partialorder %v3124, 0.0
      %vm3141 = vcmp.gt.f32.partialorder %v3125, 0.0
      %vm3142 = vcmp.gt.f32.partialorder %v3126, 0.0
      %vm3143 = vcmp.gt.f32.partialorder %v3127, 0.0
      %vm3144 = vcmp.gt.f32.partialorder %v3128, 0.0
      %v3145 = vmin.f32 %v3113, 0.0
      %v3146 = vmin.f32 %v3114, 0.0
      %v3147 = vmin.f32 %v3115, 0.0
      %v3148 = vmin.f32 %v3116, 0.0
      %v3149 = vmin.f32 %v3117, 0.0
      %v3150 = vmin.f32 %v3118, 0.0
      %v3151 = vmin.f32 %v3119, 0.0
      %v3152 = vmin.f32 %v3120, 0.0
      %v3153 = vmin.f32 %v3121, 0.0
      %v3154 = vmin.f32 %v3122, 0.0
      %v3155 = vmin.f32 %v3123, 0.0
      %v3156 = vmin.f32 %v3124, 0.0
      %v3157 = vmin.f32 %v3125, 0.0
      %v3158 = vmin.f32 %v3126, 0.0
      %v3159 = vmin.f32 %v3127, 0.0
      %v3160 = vmin.f32 %v3128, 0.0
      %v3161 = vmul.f32 %v3145, 1.442695
      %v3162 = vpow.pop %v3161
      %v3163 = vmul.f32 %v3146, 1.442695
      %v3164 = vpow.pop %v3163
      %v3165 = vmul.f32 %v3147, 1.442695
      %v3166 = vpow.pop %v3165
      %v3167 = vmul.f32 %v3148, 1.442695
      %v3168 = vpow.pop %v3167
      %v3169 = vmul.f32 %v3149, 1.442695
      %v3170 = vpow.pop %v3169
      %v3171 = vmul.f32 %v3150, 1.442695
      %v3172 = vpow.pop %v3171
      %v3173 = vmul.f32 %v3151, 1.442695
      %v3174 = vpow.pop %v3173
      %v3175 = vmul.f32 %v3152, 1.442695
      %v3176 = vpow.pop %v3175
      %v3177 = vmul.f32 %v3153, 1.442695
      %v3178 = vpow.pop %v3177
      %v3179 = vmul.f32 %v3154, 1.442695
      %v3180 = vpow.pop %v3179
      %v3181 = vmul.f32 %v3155, 1.442695
      %v3182 = vpow.pop %v3181
      %v3183 = vmul.f32 %v3156, 1.442695
      %v3184 = vpow.pop %v3183
      %v3185 = vmul.f32 %v3157, 1.442695
      %v3186 = vpow.pop %v3185
      %v3187 = vmul.f32 %v3158, 1.442695
      %v3188 = vpow.pop %v3187
      %v3189 = vmul.f32 %v3159, 1.442695
      %v3190 = vpow.pop %v3189
      %v3191 = vmul.f32 %v3160, 1.442695
      %v3192 = vpow.pop %v3191
      %v3193 = vsub.f32 %v3162, 1.0
      %v3194 = vsub.f32 %v3164, 1.0
      %v3195 = vsub.f32 %v3166, 1.0
      %v3196 = vsub.f32 %v3168, 1.0
      %v3197 = vsub.f32 %v3170, 1.0
      %v3198 = vsub.f32 %v3172, 1.0
      %v3199 = vsub.f32 %v3174, 1.0
      %v3200 = vsub.f32 %v3176, 1.0
      %v3201 = vsub.f32 %v3178, 1.0
      %v3202 = vsub.f32 %v3180, 1.0
      %v3203 = vsub.f32 %v3182, 1.0
      %v3204 = vsub.f32 %v3184, 1.0
      %v3205 = vsub.f32 %v3186, 1.0
      %v3206 = vsub.f32 %v3188, 1.0
      %v3207 = vsub.f32 %v3190, 1.0
      %v3208 = vsub.f32 %v3192, 1.0
      %v3209 = vsel %vm3129, %v3113, %v3193
      %v3210 = vsel %vm3130, %v3114, %v3194
      %v3211 = vsel %vm3131, %v3115, %v3195
      %v3212 = vsel %vm3132, %v3116, %v3196
      %v3213 = vsel %vm3133, %v3117, %v3197
      %v3214 = vsel %vm3134, %v3118, %v3198
      %v3215 = vsel %vm3135, %v3119, %v3199
      %v3216 = vsel %vm3136, %v3120, %v3200
      %v3217 = vsel %vm3137, %v3121, %v3201
      %v3218 = vsel %vm3138, %v3122, %v3202
      %v3219 = vsel %vm3139, %v3123, %v3203
      %v3220 = vsel %vm3140, %v3124, %v3204
      %v3221 = vsel %vm3141, %v3125, %v3205
      %v3222 = vsel %vm3142, %v3126, %v3206
      %v3223 = vsel %vm3143, %v3127, %v3207
      %v3224 = vsel %vm3144, %v3128, %v3208
      %v3225 = vmul.f32 %v3209, %v1962
      %v3226 = vmul.f32 %v3210, %v1964
      %v3227 = vmul.f32 %v3211, %v1966
      %v3228 = vmul.f32 %v3212, %v1968
      %v3229 = vmul.f32 %v3213, %v1970
      %v3230 = vmul.f32 %v3214, %v1972
      %v3231 = vmul.f32 %v3215, %v1974
      %v3232 = vmul.f32 %v3216, %v1976
      %v3233 = vmul.f32 %v3217, %v1978
      %v3234 = vmul.f32 %v3218, %v1980
      %v3235 = vmul.f32 %v3219, %v1982
      %v3236 = vmul.f32 %v3220, %v1984
      %v3237 = vmul.f32 %v3221, %v1986
      %v3238 = vmul.f32 %v3222, %v1988
      %v3239 = vmul.f32 %v3223, %v1990
      %v3240 = vmul.f32 %v3224, %v1992
      %v3241 = vsel %vm528, %v3225, 0.0
      %3242 = vadd.xlane.f32.xlu0 %v3241
      %v3243 = vpop.xlane.xlu0 %3242
      %v3244 = vsel %vm528, %v3226, 0.0
      %3245 = vadd.xlane.f32.xlu0 %v3244
      %v3246 = vpop.xlane.xlu0 %3245
      %v3247 = vsel %vm528, %v3227, 0.0
      %3248 = vadd.xlane.f32.xlu0 %v3247
      %v3249 = vpop.xlane.xlu0 %3248
      %v3250 = vsel %vm528, %v3228, 0.0
      %3251 = vadd.xlane.f32.xlu0 %v3250
      %v3252 = vpop.xlane.xlu0 %3251
      %v3253 = vsel %vm528, %v3229, 0.0
      %3254 = vadd.xlane.f32.xlu0 %v3253
      %v3255 = vpop.xlane.xlu0 %3254
      %v3256 = vsel %vm528, %v3230, 0.0
      %3257 = vadd.xlane.f32.xlu0 %v3256
      %v3258 = vpop.xlane.xlu0 %3257
      %v3259 = vsel %vm528, %v3231, 0.0
      %3260 = vadd.xlane.f32.xlu0 %v3259
      %v3261 = vpop.xlane.xlu0 %3260
      %v3262 = vsel %vm528, %v3232, 0.0
      %3263 = vadd.xlane.f32.xlu0 %v3262
      %v3264 = vpop.xlane.xlu0 %3263
      %v3265 = vsel %vm528, %v3233, 0.0
      %3266 = vadd.xlane.f32.xlu0 %v3265
      %v3267 = vpop.xlane.xlu0 %3266
      %v3268 = vsel %vm528, %v3234, 0.0
      %3269 = vadd.xlane.f32.xlu0 %v3268
      %v3270 = vpop.xlane.xlu0 %3269
      %v3271 = vsel %vm528, %v3235, 0.0
      %3272 = vadd.xlane.f32.xlu0 %v3271
      %v3273 = vpop.xlane.xlu0 %3272
      %v3274 = vsel %vm528, %v3236, 0.0
      %3275 = vadd.xlane.f32.xlu0 %v3274
      %v3276 = vpop.xlane.xlu0 %3275
      %v3277 = vsel %vm528, %v3237, 0.0
      %3278 = vadd.xlane.f32.xlu0 %v3277
      %v3279 = vpop.xlane.xlu0 %3278
      %v3280 = vsel %vm528, %v3238, 0.0
      %3281 = vadd.xlane.f32.xlu0 %v3280
      %v3282 = vpop.xlane.xlu0 %3281
      %v3283 = vsel %vm528, %v3239, 0.0
      %3284 = vadd.xlane.f32.xlu0 %v3283
      %v3285 = vpop.xlane.xlu0 %3284
      %v3286 = vsel %vm528, %v3240, 0.0
      %3287 = vadd.xlane.f32.xlu0 %v3286
      %v3288 = vpop.xlane.xlu0 %3287
      %v3289 = vadd.f32 %v3243, %v1060
      %v3290 = vadd.f32 %v3246, %v1066
      %v3291 = vadd.f32 %v3249, %v1072
      %v3292 = vadd.f32 %v3252, %v1078
      %v3293 = vadd.f32 %v3255, %v1084
      %v3294 = vadd.f32 %v3258, %v1090
      %v3295 = vadd.f32 %v3261, %v1096
      %v3296 = vadd.f32 %v3264, %v1102
      %v3297 = vadd.f32 %v3267, %v1108
      %v3298 = vadd.f32 %v3270, %v1114
      %v3299 = vadd.f32 %v3273, %v1120
      %v3300 = vadd.f32 %v3276, %v1126
      %v3301 = vadd.f32 %v3279, %v1132
      %v3302 = vadd.f32 %v3282, %v1138
      %v3303 = vadd.f32 %v3285, %v1144
      %v3304 = vadd.f32 %v3288, %v1150
      %v3305 = vmul.f32 %v1499, %v1152
      %v3306 = vmul.f32 %v1504, %v1153
      %v3307 = vmul.f32 %v1509, %v1154
      %v3308 = vmul.f32 %v1514, %v1155
      %v3309 = vmul.f32 %v1519, %v1156
      %v3310 = vmul.f32 %v1524, %v1157
      %v3311 = vmul.f32 %v1529, %v1158
      %v3312 = vmul.f32 %v1534, %v1159
      %v3313 = vmul.f32 %v1539, %v1160
      %v3314 = vmul.f32 %v1544, %v1161
      %v3315 = vmul.f32 %v1549, %v1162
      %v3316 = vmul.f32 %v1554, %v1163
      %v3317 = vmul.f32 %v1559, %v1164
      %v3318 = vmul.f32 %v1564, %v1165
      %v3319 = vmul.f32 %v1569, %v1166
      %v3320 = vmul.f32 %v1574, %v1167
      %3337 = vrot.lane.b32.xlu0 %v3305, 64
      %v3338 = vpop.permute.xlu0 %3337
      %3339 = vrot.lane.b32.xlu0 %v3306, 64
      %v3340 = vpop.permute.xlu0 %3339
      %3341 = vrot.lane.b32.xlu0 %v3307, 64
      %v3342 = vpop.permute.xlu0 %3341
      %3343 = vrot.lane.b32.xlu0 %v3308, 64
      %v3344 = vpop.permute.xlu0 %3343
      %3345 = vrot.lane.b32.xlu0 %v3309, 64
      %v3346 = vpop.permute.xlu0 %3345
      %3347 = vrot.lane.b32.xlu0 %v3310, 64
      %v3348 = vpop.permute.xlu0 %3347
      %3349 = vrot.lane.b32.xlu0 %v3311, 64
      %v3350 = vpop.permute.xlu0 %3349
      %3351 = vrot.lane.b32.xlu0 %v3312, 64
      %v3352 = vpop.permute.xlu0 %3351
      %3353 = vrot.lane.b32.xlu0 %v3313, 64
      %v3354 = vpop.permute.xlu0 %3353
      %3355 = vrot.lane.b32.xlu0 %v3314, 64
      %v3356 = vpop.permute.xlu0 %3355
      %3357 = vrot.lane.b32.xlu0 %v3315, 64
      %v3358 = vpop.permute.xlu0 %3357
      %3359 = vrot.lane.b32.xlu0 %v3316, 64
      %v3360 = vpop.permute.xlu0 %3359
      %3361 = vrot.lane.b32.xlu0 %v3317, 64
      %v3362 = vpop.permute.xlu0 %3361
      %3363 = vrot.lane.b32.xlu0 %v3318, 64
      %v3364 = vpop.permute.xlu0 %3363
      %3365 = vrot.lane.b32.xlu0 %v3319, 64
      %v3366 = vpop.permute.xlu0 %3365
      %3367 = vrot.lane.b32.xlu0 %v3320, 64
      %v3368 = vpop.permute.xlu0 %3367
      %v3385 = vsel %vm528, %v3338, 0.0
      %3386 = vadd.xlane.f32.xlu0 %v3385
      %v3387 = vpop.xlane.xlu0 %3386
      %v3388 = vsel %vm528, %v3340, 0.0
      %3389 = vadd.xlane.f32.xlu0 %v3388
      %v3390 = vpop.xlane.xlu0 %3389
      %v3391 = vsel %vm528, %v3342, 0.0
      %3392 = vadd.xlane.f32.xlu0 %v3391
      %v3393 = vpop.xlane.xlu0 %3392
      %v3394 = vsel %vm528, %v3344, 0.0
      %3395 = vadd.xlane.f32.xlu0 %v3394
      %v3396 = vpop.xlane.xlu0 %3395
      %v3397 = vsel %vm528, %v3346, 0.0
      %3398 = vadd.xlane.f32.xlu0 %v3397
      %v3399 = vpop.xlane.xlu0 %3398
      %v3400 = vsel %vm528, %v3348, 0.0
      %3401 = vadd.xlane.f32.xlu0 %v3400
      %v3402 = vpop.xlane.xlu0 %3401
      %v3403 = vsel %vm528, %v3350, 0.0
      %3404 = vadd.xlane.f32.xlu0 %v3403
      %v3405 = vpop.xlane.xlu0 %3404
      %v3406 = vsel %vm528, %v3352, 0.0
      %3407 = vadd.xlane.f32.xlu0 %v3406
      %v3408 = vpop.xlane.xlu0 %3407
      %v3409 = vsel %vm528, %v3354, 0.0
      %3410 = vadd.xlane.f32.xlu0 %v3409
      %v3411 = vpop.xlane.xlu0 %3410
      %v3412 = vsel %vm528, %v3356, 0.0
      %3413 = vadd.xlane.f32.xlu0 %v3412
      %v3414 = vpop.xlane.xlu0 %3413
      %v3415 = vsel %vm528, %v3358, 0.0
      %3416 = vadd.xlane.f32.xlu0 %v3415
      %v3417 = vpop.xlane.xlu0 %3416
      %v3418 = vsel %vm528, %v3360, 0.0
      %3419 = vadd.xlane.f32.xlu0 %v3418
      %v3420 = vpop.xlane.xlu0 %3419
      %v3421 = vsel %vm528, %v3362, 0.0
      %3422 = vadd.xlane.f32.xlu0 %v3421
      %v3423 = vpop.xlane.xlu0 %3422
      %v3424 = vsel %vm528, %v3364, 0.0
      %3425 = vadd.xlane.f32.xlu0 %v3424
      %v3426 = vpop.xlane.xlu0 %3425
      %v3427 = vsel %vm528, %v3366, 0.0
      %3428 = vadd.xlane.f32.xlu0 %v3427
      %v3429 = vpop.xlane.xlu0 %3428
      %v3430 = vsel %vm528, %v3368, 0.0
      %3431 = vadd.xlane.f32.xlu0 %v3430
      %v3432 = vpop.xlane.xlu0 %3431
      %v3433 = vadd.f32 %v3387, %v1737
      %v3434 = vadd.f32 %v3390, %v1738
      %v3435 = vadd.f32 %v3393, %v1739
      %v3436 = vadd.f32 %v3396, %v1740
      %v3437 = vadd.f32 %v3399, %v1741
      %v3438 = vadd.f32 %v3402, %v1742
      %v3439 = vadd.f32 %v3405, %v1743
      %v3440 = vadd.f32 %v3408, %v1744
      %v3441 = vadd.f32 %v3411, %v1745
      %v3442 = vadd.f32 %v3414, %v1746
      %v3443 = vadd.f32 %v3417, %v1747
      %v3444 = vadd.f32 %v3420, %v1748
      %v3445 = vadd.f32 %v3423, %v1749
      %v3446 = vadd.f32 %v3426, %v1750
      %v3447 = vadd.f32 %v3429, %v1751
      %v3448 = vadd.f32 %v3432, %v1752
      %v3449 = vmul.f32 %v3433, 1.442695
      %v3450 = vpow.pop %v3449
      %v3451 = vmul.f32 %v3434, 1.442695
      %v3452 = vpow.pop %v3451
      %v3453 = vmul.f32 %v3435, 1.442695
      %v3454 = vpow.pop %v3453
      %v3455 = vmul.f32 %v3436, 1.442695
      %v3456 = vpow.pop %v3455
      %v3457 = vmul.f32 %v3437, 1.442695
      %v3458 = vpow.pop %v3457
      %v3459 = vmul.f32 %v3438, 1.442695
      %v3460 = vpow.pop %v3459
      %v3461 = vmul.f32 %v3439, 1.442695
      %v3462 = vpow.pop %v3461
      %v3463 = vmul.f32 %v3440, 1.442695
      %v3464 = vpow.pop %v3463
      %v3465 = vmul.f32 %v3441, 1.442695
      %v3466 = vpow.pop %v3465
      %v3467 = vmul.f32 %v3442, 1.442695
      %v3468 = vpow.pop %v3467
      %v3469 = vmul.f32 %v3443, 1.442695
      %v3470 = vpow.pop %v3469
      %v3471 = vmul.f32 %v3444, 1.442695
      %v3472 = vpow.pop %v3471
      %v3473 = vmul.f32 %v3445, 1.442695
      %v3474 = vpow.pop %v3473
      %v3475 = vmul.f32 %v3446, 1.442695
      %v3476 = vpow.pop %v3475
      %v3477 = vmul.f32 %v3447, 1.442695
      %v3478 = vpow.pop %v3477
      %v3479 = vmul.f32 %v3448, 1.442695
      %v3480 = vpow.pop %v3479
      %3481 = vrot.lane.b32.xlu0 %v1593, 31
      %v3482 = vpop.permute.xlu0 %3481
      %3483 = vrot.lane.b32.xlu0 %v1594, 31
      %v3484 = vpop.permute.xlu0 %3483
      %3485 = vrot.lane.b32.xlu0 %v1595, 31
      %v3486 = vpop.permute.xlu0 %3485
      %3487 = vrot.lane.b32.xlu0 %v1596, 31
      %v3488 = vpop.permute.xlu0 %3487
      %3489 = vrot.lane.b32.xlu0 %v1597, 31
      %v3490 = vpop.permute.xlu0 %3489
      %3491 = vrot.lane.b32.xlu0 %v1598, 31
      %v3492 = vpop.permute.xlu0 %3491
      %3493 = vrot.lane.b32.xlu0 %v1599, 31
      %v3494 = vpop.permute.xlu0 %3493
      %3495 = vrot.lane.b32.xlu0 %v1600, 31
      %v3496 = vpop.permute.xlu0 %3495
      %3497 = vrot.lane.b32.xlu0 %v1601, 31
      %v3498 = vpop.permute.xlu0 %3497
      %3499 = vrot.lane.b32.xlu0 %v1602, 31
      %v3500 = vpop.permute.xlu0 %3499
      %3501 = vrot.lane.b32.xlu0 %v1603, 31
      %v3502 = vpop.permute.xlu0 %3501
      %3503 = vrot.lane.b32.xlu0 %v1604, 31
      %v3504 = vpop.permute.xlu0 %3503
      %3505 = vrot.lane.b32.xlu0 %v1605, 31
      %v3506 = vpop.permute.xlu0 %3505
      %3507 = vrot.lane.b32.xlu0 %v1606, 31
      %v3508 = vpop.permute.xlu0 %3507
      %3509 = vrot.lane.b32.xlu0 %v1607, 31
      %v3510 = vpop.permute.xlu0 %3509
      %3511 = vrot.lane.b32.xlu0 %v1608, 31
      %v3512 = vpop.permute.xlu0 %3511
      %v3529 = vmul.f32 %v3450, %v3482
      %v3530 = vmul.f32 %v3452, %v3484
      %v3531 = vmul.f32 %v3454, %v3486
      %v3532 = vmul.f32 %v3456, %v3488
      %v3533 = vmul.f32 %v3458, %v3490
      %v3534 = vmul.f32 %v3460, %v3492
      %v3535 = vmul.f32 %v3462, %v3494
      %v3536 = vmul.f32 %v3464, %v3496
      %v3537 = vmul.f32 %v3466, %v3498
      %v3538 = vmul.f32 %v3468, %v3500
      %v3539 = vmul.f32 %v3470, %v3502
      %v3540 = vmul.f32 %v3472, %v3504
      %v3541 = vmul.f32 %v3474, %v3506
      %v3542 = vmul.f32 %v3476, %v3508
      %v3543 = vmul.f32 %v3478, %v3510
      %v3544 = vmul.f32 %v3480, %v3512
      %3561 = vrot.lane.b32.xlu0 %v3529, 127
      %v3562 = vpop.permute.xlu0 %3561
      %3563 = vrot.lane.b32.xlu0 %v3530, 127
      %v3564 = vpop.permute.xlu0 %3563
      %3565 = vrot.lane.b32.xlu0 %v3531, 127
      %v3566 = vpop.permute.xlu0 %3565
      %3567 = vrot.lane.b32.xlu0 %v3532, 127
      %v3568 = vpop.permute.xlu0 %3567
      %3569 = vrot.lane.b32.xlu0 %v3533, 127
      %v3570 = vpop.permute.xlu0 %3569
      %3571 = vrot.lane.b32.xlu0 %v3534, 127
      %v3572 = vpop.permute.xlu0 %3571
      %3573 = vrot.lane.b32.xlu0 %v3535, 127
      %v3574 = vpop.permute.xlu0 %3573
      %3575 = vrot.lane.b32.xlu0 %v3536, 127
      %v3576 = vpop.permute.xlu0 %3575
      %3577 = vrot.lane.b32.xlu0 %v3537, 127
      %v3578 = vpop.permute.xlu0 %3577
      %3579 = vrot.lane.b32.xlu0 %v3538, 127
      %v3580 = vpop.permute.xlu0 %3579
      %3581 = vrot.lane.b32.xlu0 %v3539, 127
      %v3582 = vpop.permute.xlu0 %3581
      %3583 = vrot.lane.b32.xlu0 %v3540, 127
      %v3584 = vpop.permute.xlu0 %3583
      %3585 = vrot.lane.b32.xlu0 %v3541, 127
      %v3586 = vpop.permute.xlu0 %3585
      %3587 = vrot.lane.b32.xlu0 %v3542, 127
      %v3588 = vpop.permute.xlu0 %3587
      %3589 = vrot.lane.b32.xlu0 %v3543, 127
      %v3590 = vpop.permute.xlu0 %3589
      %3591 = vrot.lane.b32.xlu0 %v3544, 127
      %v3592 = vpop.permute.xlu0 %3591
      %v3609 = vmul.f32 %v3289, %v3562
      %v3610 = vmul.f32 %v3290, %v3564
      %v3611 = vmul.f32 %v3291, %v3566
      %v3612 = vmul.f32 %v3292, %v3568
      %v3613 = vmul.f32 %v3293, %v3570
      %v3614 = vmul.f32 %v3294, %v3572
      %v3615 = vmul.f32 %v3295, %v3574
      %v3616 = vmul.f32 %v3296, %v3576
      %v3617 = vmul.f32 %v3297, %v3578
      %v3618 = vmul.f32 %v3298, %v3580
      %v3619 = vmul.f32 %v3299, %v3582
      %v3620 = vmul.f32 %v3300, %v3584
      %v3621 = vmul.f32 %v3301, %v3586
      %v3622 = vmul.f32 %v3302, %v3588
      %v3623 = vmul.f32 %v3303, %v3590
      %v3624 = vmul.f32 %v3304, %v3592
      %v3625 = vadd.f32 %v3017, %v3609
      %v3626 = vadd.f32 %v3018, %v3610
      %v3627 = vadd.f32 %v3019, %v3611
      %v3628 = vadd.f32 %v3020, %v3612
      %v3629 = vadd.f32 %v3021, %v3613
      %v3630 = vadd.f32 %v3022, %v3614
      %v3631 = vadd.f32 %v3023, %v3615
      %v3632 = vadd.f32 %v3024, %v3616
      %v3633 = vadd.f32 %v3025, %v3617
      %v3634 = vadd.f32 %v3026, %v3618
      %v3635 = vadd.f32 %v3027, %v3619
      %v3636 = vadd.f32 %v3028, %v3620
      %v3637 = vadd.f32 %v3029, %v3621
      %v3638 = vadd.f32 %v3030, %v3622
      %v3639 = vadd.f32 %v3031, %v3623
      %v3640 = vadd.f32 %v3032, %v3624
      %3641 = vset.pattern.permute.xlu0 3
      %3642 = vperm.xlu0 %3641, %v1577
      %v3643 = vpop.permute.xlu0 %3642
      %3645 = vset.pattern.permute.xlu0 3
      %3646 = vperm.xlu0 %3645, %v1578
      %v3647 = vpop.permute.xlu0 %3646
      %3649 = vset.pattern.permute.xlu0 3
      %3650 = vperm.xlu0 %3649, %v1579
      %v3651 = vpop.permute.xlu0 %3650
      %3653 = vset.pattern.permute.xlu0 3
      %3654 = vperm.xlu0 %3653, %v1580
      %v3655 = vpop.permute.xlu0 %3654
      %3657 = vset.pattern.permute.xlu0 3
      %3658 = vperm.xlu0 %3657, %v1581
      %v3659 = vpop.permute.xlu0 %3658
      %3661 = vset.pattern.permute.xlu0 3
      %3662 = vperm.xlu0 %3661, %v1582
      %v3663 = vpop.permute.xlu0 %3662
      %3665 = vset.pattern.permute.xlu0 3
      %3666 = vperm.xlu0 %3665, %v1583
      %v3667 = vpop.permute.xlu0 %3666
      %3669 = vset.pattern.permute.xlu0 3
      %3670 = vperm.xlu0 %3669, %v1584
      %v3671 = vpop.permute.xlu0 %3670
      %3673 = vset.pattern.permute.xlu0 3
      %3674 = vperm.xlu0 %3673, %v1585
      %v3675 = vpop.permute.xlu0 %3674
      %3677 = vset.pattern.permute.xlu0 3
      %3678 = vperm.xlu0 %3677, %v1586
      %v3679 = vpop.permute.xlu0 %3678
      %3681 = vset.pattern.permute.xlu0 3
      %3682 = vperm.xlu0 %3681, %v1587
      %v3683 = vpop.permute.xlu0 %3682
      %3685 = vset.pattern.permute.xlu0 3
      %3686 = vperm.xlu0 %3685, %v1588
      %v3687 = vpop.permute.xlu0 %3686
      %3689 = vset.pattern.permute.xlu0 3
      %3690 = vperm.xlu0 %3689, %v1589
      %v3691 = vpop.permute.xlu0 %3690
      %3693 = vset.pattern.permute.xlu0 3
      %3694 = vperm.xlu0 %3693, %v1590
      %v3695 = vpop.permute.xlu0 %3694
      %3697 = vset.pattern.permute.xlu0 3
      %3698 = vperm.xlu0 %3697, %v1591
      %v3699 = vpop.permute.xlu0 %3698
      %3701 = vset.pattern.permute.xlu0 3
      %3702 = vperm.xlu0 %3701, %v1592
      %v3703 = vpop.permute.xlu0 %3702
      %v3705 = vmul.f32 %v3643, %v1152
      %v3706 = vmul.f32 %v3647, %v1153
      %v3707 = vmul.f32 %v3651, %v1154
      %v3708 = vmul.f32 %v3655, %v1155
      %v3709 = vmul.f32 %v3659, %v1156
      %v3710 = vmul.f32 %v3663, %v1157
      %v3711 = vmul.f32 %v3667, %v1158
      %v3712 = vmul.f32 %v3671, %v1159
      %v3713 = vmul.f32 %v3675, %v1160
      %v3714 = vmul.f32 %v3679, %v1161
      %v3715 = vmul.f32 %v3683, %v1162
      %v3716 = vmul.f32 %v3687, %v1163
      %v3717 = vmul.f32 %v3691, %v1164
      %v3718 = vmul.f32 %v3695, %v1165
      %v3719 = vmul.f32 %v3699, %v1166
      %v3720 = vmul.f32 %v3703, %v1167
      %v3721 = vadd.f32 %v3705, %v805
      %v3722 = vadd.f32 %v3706, %v810
      %v3723 = vadd.f32 %v3707, %v815
      %v3724 = vadd.f32 %v3708, %v820
      %v3725 = vadd.f32 %v3709, %v825
      %v3726 = vadd.f32 %v3710, %v830
      %v3727 = vadd.f32 %v3711, %v835
      %v3728 = vadd.f32 %v3712, %v840
      %v3729 = vadd.f32 %v3713, %v845
      %v3730 = vadd.f32 %v3714, %v850
      %v3731 = vadd.f32 %v3715, %v855
      %v3732 = vadd.f32 %v3716, %v860
      %v3733 = vadd.f32 %v3717, %v865
      %v3734 = vadd.f32 %v3718, %v870
      %v3735 = vadd.f32 %v3719, %v875
      %v3736 = vadd.f32 %v3720, %v880
      %vm3737 = vcmp.gt.f32.partialorder %v3721, 0.0
      %vm3738 = vcmp.gt.f32.partialorder %v3722, 0.0
      %vm3739 = vcmp.gt.f32.partialorder %v3723, 0.0
      %vm3740 = vcmp.gt.f32.partialorder %v3724, 0.0
      %vm3741 = vcmp.gt.f32.partialorder %v3725, 0.0
      %vm3742 = vcmp.gt.f32.partialorder %v3726, 0.0
      %vm3743 = vcmp.gt.f32.partialorder %v3727, 0.0
      %vm3744 = vcmp.gt.f32.partialorder %v3728, 0.0
      %vm3745 = vcmp.gt.f32.partialorder %v3729, 0.0
      %vm3746 = vcmp.gt.f32.partialorder %v3730, 0.0
      %vm3747 = vcmp.gt.f32.partialorder %v3731, 0.0
      %vm3748 = vcmp.gt.f32.partialorder %v3732, 0.0
      %vm3749 = vcmp.gt.f32.partialorder %v3733, 0.0
      %vm3750 = vcmp.gt.f32.partialorder %v3734, 0.0
      %vm3751 = vcmp.gt.f32.partialorder %v3735, 0.0
      %vm3752 = vcmp.gt.f32.partialorder %v3736, 0.0
      %v3753 = vmin.f32 %v3721, 0.0
      %v3754 = vmin.f32 %v3722, 0.0
      %v3755 = vmin.f32 %v3723, 0.0
      %v3756 = vmin.f32 %v3724, 0.0
      %v3757 = vmin.f32 %v3725, 0.0
      %v3758 = vmin.f32 %v3726, 0.0
      %v3759 = vmin.f32 %v3727, 0.0
      %v3760 = vmin.f32 %v3728, 0.0
      %v3761 = vmin.f32 %v3729, 0.0
      %v3762 = vmin.f32 %v3730, 0.0
      %v3763 = vmin.f32 %v3731, 0.0
      %v3764 = vmin.f32 %v3732, 0.0
      %v3765 = vmin.f32 %v3733, 0.0
      %v3766 = vmin.f32 %v3734, 0.0
      %v3767 = vmin.f32 %v3735, 0.0
      %v3768 = vmin.f32 %v3736, 0.0
      %v3769 = vmul.f32 %v3753, 1.442695
      %v3770 = vpow.pop %v3769
      %v3771 = vmul.f32 %v3754, 1.442695
      %v3772 = vpow.pop %v3771
      %v3773 = vmul.f32 %v3755, 1.442695
      %v3774 = vpow.pop %v3773
      %v3775 = vmul.f32 %v3756, 1.442695
      %v3776 = vpow.pop %v3775
      %v3777 = vmul.f32 %v3757, 1.442695
      %v3778 = vpow.pop %v3777
      %v3779 = vmul.f32 %v3758, 1.442695
      %v3780 = vpow.pop %v3779
      %v3781 = vmul.f32 %v3759, 1.442695
      %v3782 = vpow.pop %v3781
      %v3783 = vmul.f32 %v3760, 1.442695
      %v3784 = vpow.pop %v3783
      %v3785 = vmul.f32 %v3761, 1.442695
      %v3786 = vpow.pop %v3785
      %v3787 = vmul.f32 %v3762, 1.442695
      %v3788 = vpow.pop %v3787
      %v3789 = vmul.f32 %v3763, 1.442695
      %v3790 = vpow.pop %v3789
      %v3791 = vmul.f32 %v3764, 1.442695
      %v3792 = vpow.pop %v3791
      %v3793 = vmul.f32 %v3765, 1.442695
      %v3794 = vpow.pop %v3793
      %v3795 = vmul.f32 %v3766, 1.442695
      %v3796 = vpow.pop %v3795
      %v3797 = vmul.f32 %v3767, 1.442695
      %v3798 = vpow.pop %v3797
      %v3799 = vmul.f32 %v3768, 1.442695
      %v3800 = vpow.pop %v3799
      %v3801 = vsub.f32 %v3770, 1.0
      %v3802 = vsub.f32 %v3772, 1.0
      %v3803 = vsub.f32 %v3774, 1.0
      %v3804 = vsub.f32 %v3776, 1.0
      %v3805 = vsub.f32 %v3778, 1.0
      %v3806 = vsub.f32 %v3780, 1.0
      %v3807 = vsub.f32 %v3782, 1.0
      %v3808 = vsub.f32 %v3784, 1.0
      %v3809 = vsub.f32 %v3786, 1.0
      %v3810 = vsub.f32 %v3788, 1.0
      %v3811 = vsub.f32 %v3790, 1.0
      %v3812 = vsub.f32 %v3792, 1.0
      %v3813 = vsub.f32 %v3794, 1.0
      %v3814 = vsub.f32 %v3796, 1.0
      %v3815 = vsub.f32 %v3798, 1.0
      %v3816 = vsub.f32 %v3800, 1.0
      %v3817 = vsel %vm3737, %v3721, %v3801
      %v3818 = vsel %vm3738, %v3722, %v3802
      %v3819 = vsel %vm3739, %v3723, %v3803
      %v3820 = vsel %vm3740, %v3724, %v3804
      %v3821 = vsel %vm3741, %v3725, %v3805
      %v3822 = vsel %vm3742, %v3726, %v3806
      %v3823 = vsel %vm3743, %v3727, %v3807
      %v3824 = vsel %vm3744, %v3728, %v3808
      %v3825 = vsel %vm3745, %v3729, %v3809
      %v3826 = vsel %vm3746, %v3730, %v3810
      %v3827 = vsel %vm3747, %v3731, %v3811
      %v3828 = vsel %vm3748, %v3732, %v3812
      %v3829 = vsel %vm3749, %v3733, %v3813
      %v3830 = vsel %vm3750, %v3734, %v3814
      %v3831 = vsel %vm3751, %v3735, %v3815
      %v3832 = vsel %vm3752, %v3736, %v3816
      %v3833 = vmul.f32 %v3817, %v1962
      %v3834 = vmul.f32 %v3818, %v1964
      %v3835 = vmul.f32 %v3819, %v1966
      %v3836 = vmul.f32 %v3820, %v1968
      %v3837 = vmul.f32 %v3821, %v1970
      %v3838 = vmul.f32 %v3822, %v1972
      %v3839 = vmul.f32 %v3823, %v1974
      %v3840 = vmul.f32 %v3824, %v1976
      %v3841 = vmul.f32 %v3825, %v1978
      %v3842 = vmul.f32 %v3826, %v1980
      %v3843 = vmul.f32 %v3827, %v1982
      %v3844 = vmul.f32 %v3828, %v1984
      %v3845 = vmul.f32 %v3829, %v1986
      %v3846 = vmul.f32 %v3830, %v1988
      %v3847 = vmul.f32 %v3831, %v1990
      %v3848 = vmul.f32 %v3832, %v1992
      %v3849 = vsel %vm528, %v3833, 0.0
      %3850 = vadd.xlane.f32.xlu0 %v3849
      %v3851 = vpop.xlane.xlu0 %3850
      %v3852 = vsel %vm528, %v3834, 0.0
      %3853 = vadd.xlane.f32.xlu0 %v3852
      %v3854 = vpop.xlane.xlu0 %3853
      %v3855 = vsel %vm528, %v3835, 0.0
      %3856 = vadd.xlane.f32.xlu0 %v3855
      %v3857 = vpop.xlane.xlu0 %3856
      %v3858 = vsel %vm528, %v3836, 0.0
      %3859 = vadd.xlane.f32.xlu0 %v3858
      %v3860 = vpop.xlane.xlu0 %3859
      %v3861 = vsel %vm528, %v3837, 0.0
      %3862 = vadd.xlane.f32.xlu0 %v3861
      %v3863 = vpop.xlane.xlu0 %3862
      %v3864 = vsel %vm528, %v3838, 0.0
      %3865 = vadd.xlane.f32.xlu0 %v3864
      %v3866 = vpop.xlane.xlu0 %3865
      %v3867 = vsel %vm528, %v3839, 0.0
      %3868 = vadd.xlane.f32.xlu0 %v3867
      %v3869 = vpop.xlane.xlu0 %3868
      %v3870 = vsel %vm528, %v3840, 0.0
      %3871 = vadd.xlane.f32.xlu0 %v3870
      %v3872 = vpop.xlane.xlu0 %3871
      %v3873 = vsel %vm528, %v3841, 0.0
      %3874 = vadd.xlane.f32.xlu0 %v3873
      %v3875 = vpop.xlane.xlu0 %3874
      %v3876 = vsel %vm528, %v3842, 0.0
      %3877 = vadd.xlane.f32.xlu0 %v3876
      %v3878 = vpop.xlane.xlu0 %3877
      %v3879 = vsel %vm528, %v3843, 0.0
      %3880 = vadd.xlane.f32.xlu0 %v3879
      %v3881 = vpop.xlane.xlu0 %3880
      %v3882 = vsel %vm528, %v3844, 0.0
      %3883 = vadd.xlane.f32.xlu0 %v3882
      %v3884 = vpop.xlane.xlu0 %3883
      %v3885 = vsel %vm528, %v3845, 0.0
      %3886 = vadd.xlane.f32.xlu0 %v3885
      %v3887 = vpop.xlane.xlu0 %3886
      %v3888 = vsel %vm528, %v3846, 0.0
      %3889 = vadd.xlane.f32.xlu0 %v3888
      %v3890 = vpop.xlane.xlu0 %3889
      %v3891 = vsel %vm528, %v3847, 0.0
      %3892 = vadd.xlane.f32.xlu0 %v3891
      %v3893 = vpop.xlane.xlu0 %3892
      %v3894 = vsel %vm528, %v3848, 0.0
      %3895 = vadd.xlane.f32.xlu0 %v3894
      %v3896 = vpop.xlane.xlu0 %3895
      %v3897 = vadd.f32 %v3851, %v1060
      %v3898 = vadd.f32 %v3854, %v1066
      %v3899 = vadd.f32 %v3857, %v1072
      %v3900 = vadd.f32 %v3860, %v1078
      %v3901 = vadd.f32 %v3863, %v1084
      %v3902 = vadd.f32 %v3866, %v1090
      %v3903 = vadd.f32 %v3869, %v1096
      %v3904 = vadd.f32 %v3872, %v1102
      %v3905 = vadd.f32 %v3875, %v1108
      %v3906 = vadd.f32 %v3878, %v1114
      %v3907 = vadd.f32 %v3881, %v1120
      %v3908 = vadd.f32 %v3884, %v1126
      %v3909 = vadd.f32 %v3887, %v1132
      %v3910 = vadd.f32 %v3890, %v1138
      %v3911 = vadd.f32 %v3893, %v1144
      %v3912 = vadd.f32 %v3896, %v1150
      %v3913 = vmul.f32 %v1499, %v1626
      %v3914 = vmul.f32 %v1504, %v1628
      %v3915 = vmul.f32 %v1509, %v1630
      %v3916 = vmul.f32 %v1514, %v1632
      %v3917 = vmul.f32 %v1519, %v1634
      %v3918 = vmul.f32 %v1524, %v1636
      %v3919 = vmul.f32 %v1529, %v1638
      %v3920 = vmul.f32 %v1534, %v1640
      %v3921 = vmul.f32 %v1539, %v1642
      %v3922 = vmul.f32 %v1544, %v1644
      %v3923 = vmul.f32 %v1549, %v1646
      %v3924 = vmul.f32 %v1554, %v1648
      %v3925 = vmul.f32 %v1559, %v1650
      %v3926 = vmul.f32 %v1564, %v1652
      %v3927 = vmul.f32 %v1569, %v1654
      %v3928 = vmul.f32 %v1574, %v1656
      %3945 = vrot.lane.b32.xlu0 %v3913, 32
      %v3946 = vpop.permute.xlu0 %3945
      %3947 = vrot.lane.b32.xlu0 %v3914, 32
      %v3948 = vpop.permute.xlu0 %3947
      %3949 = vrot.lane.b32.xlu0 %v3915, 32
      %v3950 = vpop.permute.xlu0 %3949
      %3951 = vrot.lane.b32.xlu0 %v3916, 32
      %v3952 = vpop.permute.xlu0 %3951
      %3953 = vrot.lane.b32.xlu0 %v3917, 32
      %v3954 = vpop.permute.xlu0 %3953
      %3955 = vrot.lane.b32.xlu0 %v3918, 32
      %v3956 = vpop.permute.xlu0 %3955
      %3957 = vrot.lane.b32.xlu0 %v3919, 32
      %v3958 = vpop.permute.xlu0 %3957
      %3959 = vrot.lane.b32.xlu0 %v3920, 32
      %v3960 = vpop.permute.xlu0 %3959
      %3961 = vrot.lane.b32.xlu0 %v3921, 32
      %v3962 = vpop.permute.xlu0 %3961
      %3963 = vrot.lane.b32.xlu0 %v3922, 32
      %v3964 = vpop.permute.xlu0 %3963
      %3965 = vrot.lane.b32.xlu0 %v3923, 32
      %v3966 = vpop.permute.xlu0 %3965
      %3967 = vrot.lane.b32.xlu0 %v3924, 32
      %v3968 = vpop.permute.xlu0 %3967
      %3969 = vrot.lane.b32.xlu0 %v3925, 32
      %v3970 = vpop.permute.xlu0 %3969
      %3971 = vrot.lane.b32.xlu0 %v3926, 32
      %v3972 = vpop.permute.xlu0 %3971
      %3973 = vrot.lane.b32.xlu0 %v3927, 32
      %v3974 = vpop.permute.xlu0 %3973
      %3975 = vrot.lane.b32.xlu0 %v3928, 32
      %v3976 = vpop.permute.xlu0 %3975
      %v3993 = vsel %vm528, %v3946, 0.0
      %3994 = vadd.xlane.f32.xlu0 %v3993
      %v3995 = vpop.xlane.xlu0 %3994
      %v3996 = vsel %vm528, %v3948, 0.0
      %3997 = vadd.xlane.f32.xlu0 %v3996
      %v3998 = vpop.xlane.xlu0 %3997
      %v3999 = vsel %vm528, %v3950, 0.0
      %4000 = vadd.xlane.f32.xlu0 %v3999
      %v4001 = vpop.xlane.xlu0 %4000
      %v4002 = vsel %vm528, %v3952, 0.0
      %4003 = vadd.xlane.f32.xlu0 %v4002
      %v4004 = vpop.xlane.xlu0 %4003
      %v4005 = vsel %vm528, %v3954, 0.0
      %4006 = vadd.xlane.f32.xlu0 %v4005
      %v4007 = vpop.xlane.xlu0 %4006
      %v4008 = vsel %vm528, %v3956, 0.0
      %4009 = vadd.xlane.f32.xlu0 %v4008
      %v4010 = vpop.xlane.xlu0 %4009
      %v4011 = vsel %vm528, %v3958, 0.0
      %4012 = vadd.xlane.f32.xlu0 %v4011
      %v4013 = vpop.xlane.xlu0 %4012
      %v4014 = vsel %vm528, %v3960, 0.0
      %4015 = vadd.xlane.f32.xlu0 %v4014
      %v4016 = vpop.xlane.xlu0 %4015
      %v4017 = vsel %vm528, %v3962, 0.0
      %4018 = vadd.xlane.f32.xlu0 %v4017
      %v4019 = vpop.xlane.xlu0 %4018
      %v4020 = vsel %vm528, %v3964, 0.0
      %4021 = vadd.xlane.f32.xlu0 %v4020
      %v4022 = vpop.xlane.xlu0 %4021
      %v4023 = vsel %vm528, %v3966, 0.0
      %4024 = vadd.xlane.f32.xlu0 %v4023
      %v4025 = vpop.xlane.xlu0 %4024
      %v4026 = vsel %vm528, %v3968, 0.0
      %4027 = vadd.xlane.f32.xlu0 %v4026
      %v4028 = vpop.xlane.xlu0 %4027
      %v4029 = vsel %vm528, %v3970, 0.0
      %4030 = vadd.xlane.f32.xlu0 %v4029
      %v4031 = vpop.xlane.xlu0 %4030
      %v4032 = vsel %vm528, %v3972, 0.0
      %4033 = vadd.xlane.f32.xlu0 %v4032
      %v4034 = vpop.xlane.xlu0 %4033
      %v4035 = vsel %vm528, %v3974, 0.0
      %4036 = vadd.xlane.f32.xlu0 %v4035
      %v4037 = vpop.xlane.xlu0 %4036
      %v4038 = vsel %vm528, %v3976, 0.0
      %4039 = vadd.xlane.f32.xlu0 %v4038
      %v4040 = vpop.xlane.xlu0 %4039
      %v4041 = vadd.f32 %v3995, %v1737
      %v4042 = vadd.f32 %v3998, %v1738
      %v4043 = vadd.f32 %v4001, %v1739
      %v4044 = vadd.f32 %v4004, %v1740
      %v4045 = vadd.f32 %v4007, %v1741
      %v4046 = vadd.f32 %v4010, %v1742
      %v4047 = vadd.f32 %v4013, %v1743
      %v4048 = vadd.f32 %v4016, %v1744
      %v4049 = vadd.f32 %v4019, %v1745
      %v4050 = vadd.f32 %v4022, %v1746
      %v4051 = vadd.f32 %v4025, %v1747
      %v4052 = vadd.f32 %v4028, %v1748
      %v4053 = vadd.f32 %v4031, %v1749
      %v4054 = vadd.f32 %v4034, %v1750
      %v4055 = vadd.f32 %v4037, %v1751
      %v4056 = vadd.f32 %v4040, %v1752
      %v4057 = vmul.f32 %v4041, 1.442695
      %v4058 = vpow.pop %v4057
      %v4059 = vmul.f32 %v4042, 1.442695
      %v4060 = vpow.pop %v4059
      %v4061 = vmul.f32 %v4043, 1.442695
      %v4062 = vpow.pop %v4061
      %v4063 = vmul.f32 %v4044, 1.442695
      %v4064 = vpow.pop %v4063
      %v4065 = vmul.f32 %v4045, 1.442695
      %v4066 = vpow.pop %v4065
      %v4067 = vmul.f32 %v4046, 1.442695
      %v4068 = vpow.pop %v4067
      %v4069 = vmul.f32 %v4047, 1.442695
      %v4070 = vpow.pop %v4069
      %v4071 = vmul.f32 %v4048, 1.442695
      %v4072 = vpow.pop %v4071
      %v4073 = vmul.f32 %v4049, 1.442695
      %v4074 = vpow.pop %v4073
      %v4075 = vmul.f32 %v4050, 1.442695
      %v4076 = vpow.pop %v4075
      %v4077 = vmul.f32 %v4051, 1.442695
      %v4078 = vpow.pop %v4077
      %v4079 = vmul.f32 %v4052, 1.442695
      %v4080 = vpow.pop %v4079
      %v4081 = vmul.f32 %v4053, 1.442695
      %v4082 = vpow.pop %v4081
      %v4083 = vmul.f32 %v4054, 1.442695
      %v4084 = vpow.pop %v4083
      %v4085 = vmul.f32 %v4055, 1.442695
      %v4086 = vpow.pop %v4085
      %v4087 = vmul.f32 %v4056, 1.442695
      %v4088 = vpow.pop %v4087
      %4089 = vrot.lane.b32.xlu0 %v1593, 30
      %v4090 = vpop.permute.xlu0 %4089
      %4091 = vrot.lane.b32.xlu0 %v1594, 30
      %v4092 = vpop.permute.xlu0 %4091
      %4093 = vrot.lane.b32.xlu0 %v1595, 30
      %v4094 = vpop.permute.xlu0 %4093
      %4095 = vrot.lane.b32.xlu0 %v1596, 30
      %v4096 = vpop.permute.xlu0 %4095
      %4097 = vrot.lane.b32.xlu0 %v1597, 30
      %v4098 = vpop.permute.xlu0 %4097
      %4099 = vrot.lane.b32.xlu0 %v1598, 30
      %v4100 = vpop.permute.xlu0 %4099
      %4101 = vrot.lane.b32.xlu0 %v1599, 30
      %v4102 = vpop.permute.xlu0 %4101
      %4103 = vrot.lane.b32.xlu0 %v1600, 30
      %v4104 = vpop.permute.xlu0 %4103
      %4105 = vrot.lane.b32.xlu0 %v1601, 30
      %v4106 = vpop.permute.xlu0 %4105
      %4107 = vrot.lane.b32.xlu0 %v1602, 30
      %v4108 = vpop.permute.xlu0 %4107
      %4109 = vrot.lane.b32.xlu0 %v1603, 30
      %v4110 = vpop.permute.xlu0 %4109
      %4111 = vrot.lane.b32.xlu0 %v1604, 30
      %v4112 = vpop.permute.xlu0 %4111
      %4113 = vrot.lane.b32.xlu0 %v1605, 30
      %v4114 = vpop.permute.xlu0 %4113
      %4115 = vrot.lane.b32.xlu0 %v1606, 30
      %v4116 = vpop.permute.xlu0 %4115
      %4117 = vrot.lane.b32.xlu0 %v1607, 30
      %v4118 = vpop.permute.xlu0 %4117
      %4119 = vrot.lane.b32.xlu0 %v1608, 30
      %v4120 = vpop.permute.xlu0 %4119
      %v4137 = vmul.f32 %v4058, %v4090
      %v4138 = vmul.f32 %v4060, %v4092
      %v4139 = vmul.f32 %v4062, %v4094
      %v4140 = vmul.f32 %v4064, %v4096
      %v4141 = vmul.f32 %v4066, %v4098
      %v4142 = vmul.f32 %v4068, %v4100
      %v4143 = vmul.f32 %v4070, %v4102
      %v4144 = vmul.f32 %v4072, %v4104
      %v4145 = vmul.f32 %v4074, %v4106
      %v4146 = vmul.f32 %v4076, %v4108
      %v4147 = vmul.f32 %v4078, %v4110
      %v4148 = vmul.f32 %v4080, %v4112
      %v4149 = vmul.f32 %v4082, %v4114
      %v4150 = vmul.f32 %v4084, %v4116
      %v4151 = vmul.f32 %v4086, %v4118
      %v4152 = vmul.f32 %v4088, %v4120
      %4169 = vrot.lane.b32.xlu0 %v4137, 127
      %v4170 = vpop.permute.xlu0 %4169
      %4171 = vrot.lane.b32.xlu0 %v4138, 127
      %v4172 = vpop.permute.xlu0 %4171
      %4173 = vrot.lane.b32.xlu0 %v4139, 127
      %v4174 = vpop.permute.xlu0 %4173
      %4175 = vrot.lane.b32.xlu0 %v4140, 127
      %v4176 = vpop.permute.xlu0 %4175
      %4177 = vrot.lane.b32.xlu0 %v4141, 127
      %v4178 = vpop.permute.xlu0 %4177
      %4179 = vrot.lane.b32.xlu0 %v4142, 127
      %v4180 = vpop.permute.xlu0 %4179
      %4181 = vrot.lane.b32.xlu0 %v4143, 127
      %v4182 = vpop.permute.xlu0 %4181
      %4183 = vrot.lane.b32.xlu0 %v4144, 127
      %v4184 = vpop.permute.xlu0 %4183
      %4185 = vrot.lane.b32.xlu0 %v4145, 127
      %v4186 = vpop.permute.xlu0 %4185
      %4187 = vrot.lane.b32.xlu0 %v4146, 127
      %v4188 = vpop.permute.xlu0 %4187
      %4189 = vrot.lane.b32.xlu0 %v4147, 127
      %v4190 = vpop.permute.xlu0 %4189
      %4191 = vrot.lane.b32.xlu0 %v4148, 127
      %v4192 = vpop.permute.xlu0 %4191
      %4193 = vrot.lane.b32.xlu0 %v4149, 127
      %v4194 = vpop.permute.xlu0 %4193
      %4195 = vrot.lane.b32.xlu0 %v4150, 127
      %v4196 = vpop.permute.xlu0 %4195
      %4197 = vrot.lane.b32.xlu0 %v4151, 127
      %v4198 = vpop.permute.xlu0 %4197
      %4199 = vrot.lane.b32.xlu0 %v4152, 127
      %v4200 = vpop.permute.xlu0 %4199
      %v4217 = vmul.f32 %v3897, %v4170
      %v4218 = vmul.f32 %v3898, %v4172
      %v4219 = vmul.f32 %v3899, %v4174
      %v4220 = vmul.f32 %v3900, %v4176
      %v4221 = vmul.f32 %v3901, %v4178
      %v4222 = vmul.f32 %v3902, %v4180
      %v4223 = vmul.f32 %v3903, %v4182
      %v4224 = vmul.f32 %v3904, %v4184
      %v4225 = vmul.f32 %v3905, %v4186
      %v4226 = vmul.f32 %v3906, %v4188
      %v4227 = vmul.f32 %v3907, %v4190
      %v4228 = vmul.f32 %v3908, %v4192
      %v4229 = vmul.f32 %v3909, %v4194
      %v4230 = vmul.f32 %v3910, %v4196
      %v4231 = vmul.f32 %v3911, %v4198
      %v4232 = vmul.f32 %v3912, %v4200
      %v4233 = vadd.f32 %v3625, %v4217
      %v4234 = vadd.f32 %v3626, %v4218
      %v4235 = vadd.f32 %v3627, %v4219
      %v4236 = vadd.f32 %v3628, %v4220
      %v4237 = vadd.f32 %v3629, %v4221
      %v4238 = vadd.f32 %v3630, %v4222
      %v4239 = vadd.f32 %v3631, %v4223
      %v4240 = vadd.f32 %v3632, %v4224
      %v4241 = vadd.f32 %v3633, %v4225
      %v4242 = vadd.f32 %v3634, %v4226
      %v4243 = vadd.f32 %v3635, %v4227
      %v4244 = vadd.f32 %v3636, %v4228
      %v4245 = vadd.f32 %v3637, %v4229
      %v4246 = vadd.f32 %v3638, %v4230
      %v4247 = vadd.f32 %v3639, %v4231
      %v4248 = vadd.f32 %v3640, %v4232
      %vm4249 = vcmask 31744
      %v4250 = vsel %vm4249, %v1593, 0.0
      %4251 = vadd.xlane.f32.xlu0 %v4250
      %v4252 = vpop.xlane.xlu0 %4251
      %v4253 = vsel %vm4249, %v1594, 0.0
      %4254 = vadd.xlane.f32.xlu0 %v4253
      %v4255 = vpop.xlane.xlu0 %4254
      %v4256 = vsel %vm4249, %v1595, 0.0
      %4257 = vadd.xlane.f32.xlu0 %v4256
      %v4258 = vpop.xlane.xlu0 %4257
      %v4259 = vsel %vm4249, %v1596, 0.0
      %4260 = vadd.xlane.f32.xlu0 %v4259
      %v4261 = vpop.xlane.xlu0 %4260
      %v4262 = vsel %vm4249, %v1597, 0.0
      %4263 = vadd.xlane.f32.xlu0 %v4262
      %v4264 = vpop.xlane.xlu0 %4263
      %v4265 = vsel %vm4249, %v1598, 0.0
      %4266 = vadd.xlane.f32.xlu0 %v4265
      %v4267 = vpop.xlane.xlu0 %4266
      %v4268 = vsel %vm4249, %v1599, 0.0
      %4269 = vadd.xlane.f32.xlu0 %v4268
      %v4270 = vpop.xlane.xlu0 %4269
      %v4271 = vsel %vm4249, %v1600, 0.0
      %4272 = vadd.xlane.f32.xlu0 %v4271
      %v4273 = vpop.xlane.xlu0 %4272
      %v4274 = vsel %vm4249, %v1601, 0.0
      %4275 = vadd.xlane.f32.xlu0 %v4274
      %v4276 = vpop.xlane.xlu0 %4275
      %v4277 = vsel %vm4249, %v1602, 0.0
      %4278 = vadd.xlane.f32.xlu0 %v4277
      %v4279 = vpop.xlane.xlu0 %4278
      %v4280 = vsel %vm4249, %v1603, 0.0
      %4281 = vadd.xlane.f32.xlu0 %v4280
      %v4282 = vpop.xlane.xlu0 %4281
      %v4283 = vsel %vm4249, %v1604, 0.0
      %4284 = vadd.xlane.f32.xlu0 %v4283
      %v4285 = vpop.xlane.xlu0 %4284
      %v4286 = vsel %vm4249, %v1605, 0.0
      %4287 = vadd.xlane.f32.xlu0 %v4286
      %v4288 = vpop.xlane.xlu0 %4287
      %v4289 = vsel %vm4249, %v1606, 0.0
      %4290 = vadd.xlane.f32.xlu0 %v4289
      %v4291 = vpop.xlane.xlu0 %4290
      %v4292 = vsel %vm4249, %v1607, 0.0
      %4293 = vadd.xlane.f32.xlu0 %v4292
      %v4294 = vpop.xlane.xlu0 %4293
      %v4295 = vsel %vm4249, %v1608, 0.0
      %4296 = vadd.xlane.f32.xlu0 %v4295
      %v4297 = vpop.xlane.xlu0 %4296
      %v4298 = vmax.f32 %v4252, 1.0
      %v4299 = vmax.f32 %v4255, 1.0
      %v4300 = vmax.f32 %v4258, 1.0
      %v4301 = vmax.f32 %v4261, 1.0
      %v4302 = vmax.f32 %v4264, 1.0
      %v4303 = vmax.f32 %v4267, 1.0
      %v4304 = vmax.f32 %v4270, 1.0
      %v4305 = vmax.f32 %v4273, 1.0
      %v4306 = vmax.f32 %v4276, 1.0
      %v4307 = vmax.f32 %v4279, 1.0
      %v4308 = vmax.f32 %v4282, 1.0
      %v4309 = vmax.f32 %v4285, 1.0
      %v4310 = vmax.f32 %v4288, 1.0
      %v4311 = vmax.f32 %v4291, 1.0
      %v4312 = vmax.f32 %v4294, 1.0
      %v4313 = vmax.f32 %v4297, 1.0
      %v4314 = vmin.f32 %v4298, 8.0
      %v4315 = vmin.f32 %v4299, 8.0
      %v4316 = vmin.f32 %v4300, 8.0
      %v4317 = vmin.f32 %v4301, 8.0
      %v4318 = vmin.f32 %v4302, 8.0
      %v4319 = vmin.f32 %v4303, 8.0
      %v4320 = vmin.f32 %v4304, 8.0
      %v4321 = vmin.f32 %v4305, 8.0
      %v4322 = vmin.f32 %v4306, 8.0
      %v4323 = vmin.f32 %v4307, 8.0
      %v4324 = vmin.f32 %v4308, 8.0
      %v4325 = vmin.f32 %v4309, 8.0
      %v4326 = vmin.f32 %v4310, 8.0
      %v4327 = vmin.f32 %v4311, 8.0
      %v4328 = vmin.f32 %v4312, 8.0
      %v4329 = vmin.f32 %v4313, 8.0
      %v4330 = vrcp.pop %v4314
      %v4331 = vmul.f32 %v4233, %v4330
      %v4332 = vrcp.pop %v4315
      %v4333 = vmul.f32 %v4234, %v4332
      %v4334 = vrcp.pop %v4316
      %v4335 = vmul.f32 %v4235, %v4334
      %v4336 = vrcp.pop %v4317
      %v4337 = vmul.f32 %v4236, %v4336
      %v4338 = vrcp.pop %v4318
      %v4339 = vmul.f32 %v4237, %v4338
      %v4340 = vrcp.pop %v4319
      %v4341 = vmul.f32 %v4238, %v4340
      %v4342 = vrcp.pop %v4320
      %v4343 = vmul.f32 %v4239, %v4342
      %v4344 = vrcp.pop %v4321
      %v4345 = vmul.f32 %v4240, %v4344
      %v4346 = vrcp.pop %v4322
      %v4347 = vmul.f32 %v4241, %v4346
      %v4348 = vrcp.pop %v4323
      %v4349 = vmul.f32 %v4242, %v4348
      %v4350 = vrcp.pop %v4324
      %v4351 = vmul.f32 %v4243, %v4350
      %v4352 = vrcp.pop %v4325
      %v4353 = vmul.f32 %v4244, %v4352
      %v4354 = vrcp.pop %v4326
      %v4355 = vmul.f32 %v4245, %v4354
      %v4356 = vrcp.pop %v4327
      %v4357 = vmul.f32 %v4246, %v4356
      %v4358 = vrcp.pop %v4328
      %v4359 = vmul.f32 %v4247, %v4358
      %v4360 = vrcp.pop %v4329
      %v4361 = vmul.f32 %v4248, %v4360
      %4378 = vrot.lane.b32.xlu0 %v1060, 126
      %v4379 = vpop.permute.xlu0 %4378
      %4380 = vrot.lane.b32.xlu0 %v1066, 126
      %v4381 = vpop.permute.xlu0 %4380
      %4382 = vrot.lane.b32.xlu0 %v1072, 126
      %v4383 = vpop.permute.xlu0 %4382
      %4384 = vrot.lane.b32.xlu0 %v1078, 126
      %v4385 = vpop.permute.xlu0 %4384
      %4386 = vrot.lane.b32.xlu0 %v1084, 126
      %v4387 = vpop.permute.xlu0 %4386
      %4388 = vrot.lane.b32.xlu0 %v1090, 126
      %v4389 = vpop.permute.xlu0 %4388
      %4390 = vrot.lane.b32.xlu0 %v1096, 126
      %v4391 = vpop.permute.xlu0 %4390
      %4392 = vrot.lane.b32.xlu0 %v1102, 126
      %v4393 = vpop.permute.xlu0 %4392
      %4394 = vrot.lane.b32.xlu0 %v1108, 126
      %v4395 = vpop.permute.xlu0 %4394
      %4396 = vrot.lane.b32.xlu0 %v1114, 126
      %v4397 = vpop.permute.xlu0 %4396
      %4398 = vrot.lane.b32.xlu0 %v1120, 126
      %v4399 = vpop.permute.xlu0 %4398
      %4400 = vrot.lane.b32.xlu0 %v1126, 126
      %v4401 = vpop.permute.xlu0 %4400
      %4402 = vrot.lane.b32.xlu0 %v1132, 126
      %v4403 = vpop.permute.xlu0 %4402
      %4404 = vrot.lane.b32.xlu0 %v1138, 126
      %v4405 = vpop.permute.xlu0 %4404
      %4406 = vrot.lane.b32.xlu0 %v1144, 126
      %v4407 = vpop.permute.xlu0 %4406
      %4408 = vrot.lane.b32.xlu0 %v1150, 126
      %v4409 = vpop.permute.xlu0 %4408
      %v4426 = vadd.f32 %v4331, %v4379
      %v4427 = vadd.f32 %v4333, %v4381
      %v4428 = vadd.f32 %v4335, %v4383
      %v4429 = vadd.f32 %v4337, %v4385
      %v4430 = vadd.f32 %v4339, %v4387
      %v4431 = vadd.f32 %v4341, %v4389
      %v4432 = vadd.f32 %v4343, %v4391
      %v4433 = vadd.f32 %v4345, %v4393
      %v4434 = vadd.f32 %v4347, %v4395
      %v4435 = vadd.f32 %v4349, %v4397
      %v4436 = vadd.f32 %v4351, %v4399
      %v4437 = vadd.f32 %v4353, %v4401
      %v4438 = vadd.f32 %v4355, %v4403
      %v4439 = vadd.f32 %v4357, %v4405
      %v4440 = vadd.f32 %v4359, %v4407
      %v4441 = vadd.f32 %v4361, %v4409
      %4458 = vrot.lane.b32.xlu0 %v4426, 96
      %v4459 = vpop.permute.xlu0 %4458
      %4460 = vrot.lane.b32.xlu0 %v4427, 96
      %v4461 = vpop.permute.xlu0 %4460
      %4462 = vrot.lane.b32.xlu0 %v4428, 96
      %v4463 = vpop.permute.xlu0 %4462
      %4464 = vrot.lane.b32.xlu0 %v4429, 96
      %v4465 = vpop.permute.xlu0 %4464
      %4466 = vrot.lane.b32.xlu0 %v4430, 96
      %v4467 = vpop.permute.xlu0 %4466
      %4468 = vrot.lane.b32.xlu0 %v4431, 96
      %v4469 = vpop.permute.xlu0 %4468
      %4470 = vrot.lane.b32.xlu0 %v4432, 96
      %v4471 = vpop.permute.xlu0 %4470
      %4472 = vrot.lane.b32.xlu0 %v4433, 96
      %v4473 = vpop.permute.xlu0 %4472
      %4474 = vrot.lane.b32.xlu0 %v4434, 96
      %v4475 = vpop.permute.xlu0 %4474
      %4476 = vrot.lane.b32.xlu0 %v4435, 96
      %v4477 = vpop.permute.xlu0 %4476
      %4478 = vrot.lane.b32.xlu0 %v4436, 96
      %v4479 = vpop.permute.xlu0 %4478
      %4480 = vrot.lane.b32.xlu0 %v4437, 96
      %v4481 = vpop.permute.xlu0 %4480
      %4482 = vrot.lane.b32.xlu0 %v4438, 96
      %v4483 = vpop.permute.xlu0 %4482
      %4484 = vrot.lane.b32.xlu0 %v4439, 96
      %v4485 = vpop.permute.xlu0 %4484
      %4486 = vrot.lane.b32.xlu0 %v4440, 96
      %v4487 = vpop.permute.xlu0 %4486
      %4488 = vrot.lane.b32.xlu0 %v4441, 96
      %v4489 = vpop.permute.xlu0 %4488
      %vm4506 = vcmask 7168
      %4507 = vst.msk [vmem:[%s481] sm:$0xff] %vm4506, %v4459
      %4508 = vst.msk [vmem:[%s481 + $0x8] sm:$0xff] %vm4506, %v4461
      %4509 = vst.msk [vmem:[%s481 + $0x10] sm:$0xff] %vm4506, %v4463
      %4510 = vst.msk [vmem:[%s481 + $0x18] sm:$0xff] %vm4506, %v4465
      %4511 = vst.msk [vmem:[%s481 + $0x20] sm:$0xff] %vm4506, %v4467
      %4512 = vst.msk [vmem:[%s481 + $0x28] sm:$0xff] %vm4506, %v4469
      %4513 = vst.msk [vmem:[%s481 + $0x30] sm:$0xff] %vm4506, %v4471
      %4514 = vst.msk [vmem:[%s481 + $0x38] sm:$0xff] %vm4506, %v4473
      %4515 = vst.msk [vmem:[%s481 + $0x40] sm:$0xff] %vm4506, %v4475
      %4516 = vst.msk [vmem:[%s481 + $0x48] sm:$0xff] %vm4506, %v4477
      %4517 = vst.msk [vmem:[%s481 + $0x50] sm:$0xff] %vm4506, %v4479
      %4518 = vst.msk [vmem:[%s481 + $0x58] sm:$0xff] %vm4506, %v4481
      %4519 = vst.msk [vmem:[%s481 + $0x60] sm:$0xff] %vm4506, %v4483
      %4520 = vst.msk [vmem:[%s481 + $0x68] sm:$0xff] %vm4506, %v4485
      %4521 = vst.msk [vmem:[%s481 + $0x70] sm:$0xff] %vm4506, %v4487
      %4522 = vst.msk [vmem:[%s481 + $0x78] sm:$0xff] %vm4506, %v4489
      %s4523 = smul.u32 16, %s23
      %p4524 = scmp.lt.s32.totalorder %s4523, 31
      %s4525 = scalar_select %p4524, %s4523, 31
      %s4526 = smul.addr %s4525, 8
      %s4527 = scalar_lea.vmem %s12, %s4526
      // Predicated region
      $region69: #{smix_forward.1} parent=67 // pred_check
        %p4528 = pneg %p313
      $region70: #{smix_forward.1} parent=67 // pred_check_branch
        %4530 = sbr.rel (%p4528) target = $region72
      $region71: #{smix_forward.1} parent=67 // pred_region
        %s4531 = smul.u32 16, %s23
      $region72: #{smix_forward.1} parent=67 // pred_fallthru
        _
    $region68: #{smix_forward.1} parent=5 // pred_fallthru
      _
    %p4532 = scmp.le.s32.totalorder 2, %s18
    // Predicated region
    $region73: #{smix_forward.1} parent=5 // pred_check
      %p4533 = pneg %p4532
    $region74: #{smix_forward.1} parent=5 // pred_check_branch
      %4535 = sbr.rel (%p4533) target = $region76
    $region75: #{smix_forward.1} parent=5 // pred_region
      %s4536 = ssub.s32 %s18, 2
      // Predicated region
      $region77: #{smix_forward.1} parent=75 // pred_check
        %p4537 = pneg %p319
      $region78: #{smix_forward.1} parent=75 // pred_check_branch
        %4539 = sbr.rel (%p4537) target = $region80
      $region79: #{smix_forward.1} parent=75 // pred_region
        %s4540 = smul.u32 16, %s24
        %p4541 = scmp.lt.s32.totalorder %s4540, 31
        %s4542 = scalar_select %p4541, %s4540, 31
        %s4543 = smul.addr %s4542, 8
        %s4544 = scalar_lea.vmem %s12, %s4543
      $region80: #{smix_forward.1} parent=75 // pred_fallthru
        _
    $region76: #{smix_forward.1} parent=5 // pred_fallthru
      _
  $region6: #{smix_forward.1} parent=0 // loop_footer
    %s22 = sadd.s32 1, %s18
  $region7: #{smix_forward.1} parent=0 // loop_footer_branch
    %17 = sbr.rel target = $region3
  $region8: #{smix_forward.1} parent=0 // loop_exit
    _

</llo_original>
